<compile_context>
chip_gen: v6e
topology: v6e:2x2x1
jax: 0.10.0
libtpu: 0.0.40
codegen_flags: <defaults>
</compile_context>

<pallas_src>
import jax
import jax.numpy as jnp
from jax.experimental import pallas as pl
from jax.experimental.pallas import tpu as pltpu


# ---------------------------------------------------------------------------
# Pallas kernel: [conv3x3 -> BN -> ReLU -> maxpool2] x2, flatten, fc1+ReLU,
# fc2+sigmoid.  Everything fits in VMEM, so a single grid-less invocation.
# ---------------------------------------------------------------------------
def relation_net_kernel(
    x_ref,                                  # (N, H, W, 128) f32 NHWC input
    w1_ref, b1_ref, g1_ref, bt1_ref,        # (9*128, 64) bf16, (1,64) f32 x3
    w2_ref, b2_ref, g2_ref, bt2_ref,        # (9*64, 64)  bf16, (1,64) f32 x3
    wf1_ref, bf1_ref,                       # (FCN, HID) f32, (1, HID) f32
    wf2_ref, bf2_ref,                       # (HID, 1)  f32, (1, 1)  f32
    out_ref,                                # (N, 1) f32
    pad1_ref,                               # scratch (N, H+2,  W+2,  128) f32
    pad2_ref,                               # scratch (N, H/2+2, W/2+2, 64) f32
):
    N, Hp2, Wp2, _ = pad1_ref.shape
    H, W = Hp2 - 2, Wp2 - 2
    H2, W2 = H // 2, W // 2
    H4, W4 = H2 // 2, W2 // 2
    C2 = pad2_ref.shape[-1]

    def zero_border(pref):
        # zero only the 1-pixel halo; the interior is overwritten right after.
        n, hp, wp, c = pref.shape
        zr = jnp.zeros((n, 1, wp, c), jnp.float32)
        zc = jnp.zeros((n, hp - 2, 1, c), jnp.float32)
        pref[:, 0:1, :, :] = zr
        pref[:, hp - 1:hp, :, :] = zr
        pref[:, 1:hp - 1, 0:1, :] = zc
        pref[:, 1:hp - 1, wp - 1:wp, :] = zc

    def conv_bn_relu(pref, w_ref, b_ref, g_ref, bt_ref, h, w):
        """3x3 'same' conv + training-mode BN + ReLU.  Returns (n*h*w, cout) f32."""
        n = pref.shape[0]
        cin = pref.shape[-1]
        # im2col: concatenate the 9 shifted taps along the lane (channel) axis
        # and do ONE deep-K MXU matmul against the (9*cin, cout) bf16 weight.
        taps = [pref[:, ky:ky + h, kx:kx + w, :].astype(jnp.bfloat16)
                for ky in range(3) for kx in range(3)]
        patch = jnp.concatenate(taps, axis=-1).reshape(n * h * w, 9 * cin)
        acc = jnp.dot(patch, w_ref[...], preferred_element_type=jnp.float32)
        acc = acc + b_ref[...]                           # conv bias (f32)
        # BatchNorm2d, training mode: batch mean / biased variance over (N,H,W),
        # single-pass statistics E[x^2] - E[x]^2, fused scale/shift.
        mean = jnp.mean(acc, axis=0, keepdims=True)
        var = jnp.mean(acc * acc, axis=0, keepdims=True) - mean * mean
        scale = g_ref[...] * jax.lax.rsqrt(var + 1e-5)
        shift = bt_ref[...] - mean * scale
        return jnp.maximum(acc * scale + shift, 0.0)

    def maxpool2x2(y2d, n, h, w):
        """2x2 stride-2 max-pool on conv output stored as (n*h*w, c) rows in
        (n, i, j) row-major order.  Returns (n*h/2, w/2, c)."""
        c = y2d.shape[-1]
        h2, w2 = h // 2, w // 2
        y = jnp.max(y2d.reshape(n * h * w2, 2, c), axis=1)    # pool along W
        y = jnp.max(y.reshape(n * h2, 2, w2, c), axis=1)      # pool along H
        return y

    # ---- layer 1 ----------------------------------------------------------
    zero_border(pad1_ref)
    pad1_ref[:, 1:1 + H, 1:1 + W, :] = x_ref[...]
    y1 = conv_bn_relu(pad1_ref, w1_ref, b1_ref, g1_ref, bt1_ref, H, W)
    p1 = maxpool2x2(y1, N, H, W).reshape(N, H2, W2, C2)

    # ---- layer 2 (pool-1 output stored once into the padded buffer) -------
    zero_border(pad2_ref)
    pad2_ref[:, 1:1 + H2, 1:1 + W2, :] = p1
    y2 = conv_bn_relu(pad2_ref, w2_ref, b2_ref, g2_ref, bt2_ref, H2, W2)
    p2 = maxpool2x2(y2, N, H2, W2).reshape(N, H4 * W4, C2)

    # ---- flatten (NHWC order; fc1 weight pre-permuted to match) + FC head --
    flat = jnp.concatenate([p2[:, s, :] for s in range(H4 * W4)], axis=-1)
    h_fc = jnp.dot(flat, wf1_ref[...],
                   preferred_element_type=jnp.float32) + bf1_ref[...]
    h_fc = jnp.maximum(h_fc, 0.0)
    logits = jnp.dot(h_fc, wf2_ref[...],
                     preferred_element_type=jnp.float32) + bf2_ref[...]
    out_ref[...] = jax.nn.sigmoid(logits)


# ---------------------------------------------------------------------------
# Wrapper: PyTorch-convention parameters / NCHW input -> kernel layout.
# ---------------------------------------------------------------------------
def relation_network_pallas(x_nchw, params):
    N, C_in, H, W = x_nchw.shape
    C_mid = params["w1"].shape[0]
    Hp, Wp = H // 4, W // 4
    fcn = C_mid * Hp * Wp
    hidden = params["wf1"].shape[0]

    # NCHW -> NHWC; OIHW -> (ky, kx, cin) x cout flattened for the im2col dot.
    x = jnp.transpose(x_nchw, (0, 2, 3, 1)).astype(jnp.float32)
    w1 = jnp.transpose(params["w1"], (2, 3, 1, 0)).reshape(9 * C_in, C_mid)
    w2 = jnp.transpose(params["w2"], (2, 3, 1, 0)).reshape(9 * C_mid, C_mid)
    # fc1 weight: PyTorch flattens NCHW (c,h,w); kernel flattens NHWC (h,w,c).
    wf1 = jnp.transpose(params["wf1"].reshape(hidden, C_mid, Hp, Wp),
                        (2, 3, 1, 0)).reshape(fcn, hidden)
    wf2 = params["wf2"].T                                     # (hidden, 1)

    row = lambda v: v.reshape(1, -1).astype(jnp.float32)
    args = (
        x,
        w1.astype(jnp.bfloat16), row(params["b1"]), row(params["g1"]), row(params["bt1"]),
        w2.astype(jnp.bfloat16), row(params["b2"]), row(params["g2"]), row(params["bt2"]),
        wf1.astype(jnp.float32), row(params["bf1"]),
        wf2.astype(jnp.float32), row(params["bf2"]),
    )

    # TODO(synk): for real relation-pair batches on v7x, grid over the batch
    # dimension with dimension_semantics=("parallel",) — requires a two-pass /
    # cross-block BatchNorm since stats here are full-batch (training mode).
    return pl.pallas_call(
        relation_net_kernel,
        out_shape=jax.ShapeDtypeStruct((N, 1), jnp.float32),
        in_specs=[pl.BlockSpec(memory_space=pltpu.MemorySpace.VMEM)] * len(args),
        out_specs=pl.BlockSpec(memory_space=pltpu.MemorySpace.VMEM),
        scratch_shapes=[
            pltpu.VMEM((N, H + 2, W + 2, C_in), jnp.float32),
            pltpu.VMEM((N, H // 2 + 2, W // 2 + 2, C_mid), jnp.float32),
        ],
    )(*args)


# ---------------------------------------------------------------------------
# Pure-JAX reference (PyTorch semantics, NCHW) for a correctness check.
# ---------------------------------------------------------------------------
def reference_forward(x, p):
    def conv(x, w, b):
        y = jax.lax.conv_general_dilated(
            x, w, (1, 1), "SAME", dimension_numbers=("NCHW", "OIHW", "NCHW"))
        return y + b[None, :, None, None]

    def bn(x, g, b):
        mean = jnp.mean(x, axis=(0, 2, 3), keepdims=True)
        var = jnp.mean((x - mean) ** 2, axis=(0, 2, 3), keepdims=True)
        return (x - mean) * jax.lax.rsqrt(var + 1e-5) * g[None, :, None, None] \
            + b[None, :, None, None]

    def pool(x):
        return jax.lax.reduce_window(x, -jnp.inf, jax.lax.max,
                                     (1, 1, 2, 2), (1, 1, 2, 2), "VALID")

    o = pool(jax.nn.relu(bn(conv(x, p["w1"], p["b1"]), p["g1"], p["bt1"])))
    o = pool(jax.nn.relu(bn(conv(o, p["w2"], p["b2"]), p["g2"], p["bt2"])))
    o = o.reshape(o.shape[0], -1)
    o = jax.nn.relu(o @ p["wf1"].T + p["bf1"])
    return jax.nn.sigmoid(o @ p["wf2"].T + p["bf2"])


if __name__ == "__main__":
    # Shapes consistent with the module: conv1 input channels are fixed at 128
    # by the module definition; spatial 8x8 -> fcn_size = 64*2*2 = 256,
    # hidden_unit = 8 (as in the original omniglot training script).
    N, C_IN, H, W = 2, 128, 8, 8
    C_MID = 64
    FCN = C_MID * (H // 4) * (W // 4)     # 256
    HIDDEN = 8

    key = jax.random.PRNGKey(0)
    ks = jax.random.split(key, 16)
    norm = lambda k, s, sc=0.05: sc * jax.random.normal(k, s, dtype=jnp.float32)

    params = {
        "w1": norm(ks[0], (C_MID, C_IN, 3, 3)),
        "b1": norm(ks[1], (C_MID,)),
        "g1": 1.0 + norm(ks[2], (C_MID,), 0.1),
        "bt1": norm(ks[3], (C_MID,), 0.1),
        "w2": norm(ks[4], (C_MID, C_MID, 3, 3)),
        "b2": norm(ks[5], (C_MID,)),
        "g2": 1.0 + norm(ks[6], (C_MID,), 0.1),
        "bt2": norm(ks[7], (C_MID,), 0.1),
        "wf1": norm(ks[8], (HIDDEN, FCN)),
        "bf1": norm(ks[9], (HIDDEN,)),
        "wf2": norm(ks[10], (1, HIDDEN)),
        "bf2": norm(ks[11], (1,)),
    }
    x = jax.random.normal(ks[12], (N, C_IN, H, W), dtype=jnp.float32)

    out = jax.block_until_ready(relation_network_pallas(x, params))
    ref = jax.block_until_ready(reference_forward(x, params))

    assert out.shape == (N, 1) and out.dtype == jnp.float32
    assert bool(jnp.all(jnp.isfinite(out)))
    assert bool(jnp.allclose(out, ref, atol=2e-2)), (out, ref)

    print("KERNEL_OK")
</pallas_src>

<mosaic_0001>
module attributes {stable_mosaic.version = 11 : i64} {
  func.func @relation_net_kernel(%arg0: memref<2x8x8x128xf32, #tpu.memory_space<vmem>>, %arg1: memref<1152x64xbf16, #tpu.memory_space<vmem>>, %arg2: memref<1x64xf32, #tpu.memory_space<vmem>>, %arg3: memref<1x64xf32, #tpu.memory_space<vmem>>, %arg4: memref<1x64xf32, #tpu.memory_space<vmem>>, %arg5: memref<576x64xbf16, #tpu.memory_space<vmem>>, %arg6: memref<1x64xf32, #tpu.memory_space<vmem>>, %arg7: memref<1x64xf32, #tpu.memory_space<vmem>>, %arg8: memref<1x64xf32, #tpu.memory_space<vmem>>, %arg9: memref<256x8xf32, #tpu.memory_space<vmem>>, %arg10: memref<1x8xf32, #tpu.memory_space<vmem>>, %arg11: memref<8x1xf32, #tpu.memory_space<vmem>>, %arg12: memref<1x1xf32, #tpu.memory_space<vmem>>, %arg13: memref<2x1xf32, #tpu.memory_space<vmem>>, %arg14: memref<2x10x10x128xf32, #tpu.memory_space<vmem>>, %arg15: memref<2x6x6x64xf32, #tpu.memory_space<vmem>>) attributes {dimension_semantics = [], scalar_prefetch = 0 : i64, scratch_operands = 2 : i64, tpu.core_type = #tpu.core_type<tc>} {
    %cst = arith.constant 0.000000e+00 : f32
    %0 = vector.broadcast %cst : f32 to vector<2x1x10x128xf32>
    %cst_0 = arith.constant 0.000000e+00 : f32
    %1 = vector.broadcast %cst_0 : f32 to vector<2x8x1x128xf32>
    %c0 = arith.constant 0 : index
    %c0_1 = arith.constant 0 : index
    %c0_2 = arith.constant 0 : index
    %c0_3 = arith.constant 0 : index
    %2 = vector.load %arg14[%c0, %c0_1, %c0_2, %c0_3] : memref<2x10x10x128xf32, #tpu.memory_space<vmem>>, vector<2x1x10x128xf32>
    tpu.vector_store %arg14[%c0, %c0_1, %c0_2, %c0_3], %0 {strides = array<i32>} : memref<2x10x10x128xf32, #tpu.memory_space<vmem>>, vector<2x1x10x128xf32>,
    %c0_4 = arith.constant 0 : index
    %c9 = arith.constant 9 : index
    %c0_5 = arith.constant 0 : index
    %c0_6 = arith.constant 0 : index
    %3 = vector.load %arg14[%c0_4, %c9, %c0_5, %c0_6] : memref<2x10x10x128xf32, #tpu.memory_space<vmem>>, vector<2x1x10x128xf32>
    tpu.vector_store %arg14[%c0_4, %c9, %c0_5, %c0_6], %0 {strides = array<i32>} : memref<2x10x10x128xf32, #tpu.memory_space<vmem>>, vector<2x1x10x128xf32>,
    %c0_7 = arith.constant 0 : index
    %c1 = arith.constant 1 : index
    %c0_8 = arith.constant 0 : index
    %c0_9 = arith.constant 0 : index
    %4 = vector.load %arg14[%c0_7, %c1, %c0_8, %c0_9] : memref<2x10x10x128xf32, #tpu.memory_space<vmem>>, vector<2x8x1x128xf32>
    tpu.vector_store %arg14[%c0_7, %c1, %c0_8, %c0_9], %1 {strides = array<i32>} : memref<2x10x10x128xf32, #tpu.memory_space<vmem>>, vector<2x8x1x128xf32>,
    %c0_10 = arith.constant 0 : index
    %c1_11 = arith.constant 1 : index
    %c9_12 = arith.constant 9 : index
    %c0_13 = arith.constant 0 : index
    %5 = vector.load %arg14[%c0_10, %c1_11, %c9_12, %c0_13] : memref<2x10x10x128xf32, #tpu.memory_space<vmem>>, vector<2x8x1x128xf32>
    tpu.vector_store %arg14[%c0_10, %c1_11, %c9_12, %c0_13], %1 {strides = array<i32>} : memref<2x10x10x128xf32, #tpu.memory_space<vmem>>, vector<2x8x1x128xf32>,
    %c0_14 = arith.constant 0 : index
    %c0_15 = arith.constant 0 : index
    %c0_16 = arith.constant 0 : index
    %c0_17 = arith.constant 0 : index
    %6 = vector.load %arg0[%c0_14, %c0_15, %c0_16, %c0_17] : memref<2x8x8x128xf32, #tpu.memory_space<vmem>>, vector<2x8x8x128xf32>
    %c0_18 = arith.constant 0 : index
    %c1_19 = arith.constant 1 : index
    %c1_20 = arith.constant 1 : index
    %c0_21 = arith.constant 0 : index
    %7 = vector.load %arg14[%c0_18, %c1_19, %c1_20, %c0_21] : memref<2x10x10x128xf32, #tpu.memory_space<vmem>>, vector<2x8x8x128xf32>
    tpu.vector_store %arg14[%c0_18, %c1_19, %c1_20, %c0_21], %6 {strides = array<i32>} : memref<2x10x10x128xf32, #tpu.memory_space<vmem>>, vector<2x8x8x128xf32>,
    %c0_22 = arith.constant 0 : index
    %c0_23 = arith.constant 0 : index
    %c0_24 = arith.constant 0 : index
    %c0_25 = arith.constant 0 : index
    %8 = vector.load %arg14[%c0_22, %c0_23, %c0_24, %c0_25] : memref<2x10x10x128xf32, #tpu.memory_space<vmem>>, vector<2x8x8x128xf32>
    %9 = arith.truncf %8 : vector<2x8x8x128xf32> to vector<2x8x8x128xbf16>
    %c0_26 = arith.constant 0 : index
    %c0_27 = arith.constant 0 : index
    %c1_28 = arith.constant 1 : index
    %c0_29 = arith.constant 0 : index
    %10 = vector.load %arg14[%c0_26, %c0_27, %c1_28, %c0_29] : memref<2x10x10x128xf32, #tpu.memory_space<vmem>>, vector<2x8x8x128xf32>
    %11 = arith.truncf %10 : vector<2x8x8x128xf32> to vector<2x8x8x128xbf16>
    %c0_30 = arith.constant 0 : index
    %c0_31 = arith.constant 0 : index
    %c2 = arith.constant 2 : index
    %c0_32 = arith.constant 0 : index
    %12 = vector.load %arg14[%c0_30, %c0_31, %c2, %c0_32] : memref<2x10x10x128xf32, #tpu.memory_space<vmem>>, vector<2x8x8x128xf32>
    %13 = arith.truncf %12 : vector<2x8x8x128xf32> to vector<2x8x8x128xbf16>
    %c0_33 = arith.constant 0 : index
    %c1_34 = arith.constant 1 : index
    %c0_35 = arith.constant 0 : index
    %c0_36 = arith.constant 0 : index
    %14 = vector.load %arg14[%c0_33, %c1_34, %c0_35, %c0_36] : memref<2x10x10x128xf32, #tpu.memory_space<vmem>>, vector<2x8x8x128xf32>
    %15 = arith.truncf %14 : vector<2x8x8x128xf32> to vector<2x8x8x128xbf16>
    %c0_37 = arith.constant 0 : index
    %c1_38 = arith.constant 1 : index
    %c1_39 = arith.constant 1 : index
    %c0_40 = arith.constant 0 : index
    %16 = vector.load %arg14[%c0_37, %c1_38, %c1_39, %c0_40] : memref<2x10x10x128xf32, #tpu.memory_space<vmem>>, vector<2x8x8x128xf32>
    %17 = arith.truncf %16 : vector<2x8x8x128xf32> to vector<2x8x8x128xbf16>
    %c0_41 = arith.constant 0 : index
    %c1_42 = arith.constant 1 : index
    %c2_43 = arith.constant 2 : index
    %c0_44 = arith.constant 0 : index
    %18 = vector.load %arg14[%c0_41, %c1_42, %c2_43, %c0_44] : memref<2x10x10x128xf32, #tpu.memory_space<vmem>>, vector<2x8x8x128xf32>
    %19 = arith.truncf %18 : vector<2x8x8x128xf32> to vector<2x8x8x128xbf16>
    %c0_45 = arith.constant 0 : index
    %c2_46 = arith.constant 2 : index
    %c0_47 = arith.constant 0 : index
    %c0_48 = arith.constant 0 : index
    %20 = vector.load %arg14[%c0_45, %c2_46, %c0_47, %c0_48] : memref<2x10x10x128xf32, #tpu.memory_space<vmem>>, vector<2x8x8x128xf32>
    %21 = arith.truncf %20 : vector<2x8x8x128xf32> to vector<2x8x8x128xbf16>
    %c0_49 = arith.constant 0 : index
    %c2_50 = arith.constant 2 : index
    %c1_51 = arith.constant 1 : index
    %c0_52 = arith.constant 0 : index
    %22 = vector.load %arg14[%c0_49, %c2_50, %c1_51, %c0_52] : memref<2x10x10x128xf32, #tpu.memory_space<vmem>>, vector<2x8x8x128xf32>
    %23 = arith.truncf %22 : vector<2x8x8x128xf32> to vector<2x8x8x128xbf16>
    %c0_53 = arith.constant 0 : index
    %c2_54 = arith.constant 2 : index
    %c2_55 = arith.constant 2 : index
    %c0_56 = arith.constant 0 : index
    %24 = vector.load %arg14[%c0_53, %c2_54, %c2_55, %c0_56] : memref<2x10x10x128xf32, #tpu.memory_space<vmem>>, vector<2x8x8x128xf32>
    %25 = arith.truncf %24 : vector<2x8x8x128xf32> to vector<2x8x8x128xbf16>
    %26 = tpu.concatenate %9, %11, %13, %15, %17, %19, %21, %23, %25 in 3 : vector<2x8x8x128xbf16>, vector<2x8x8x128xbf16>, vector<2x8x8x128xbf16>, vector<2x8x8x128xbf16>, vector<2x8x8x128xbf16>, vector<2x8x8x128xbf16>, vector<2x8x8x128xbf16>, vector<2x8x8x128xbf16>, vector<2x8x8x128xbf16> -> vector<2x8x8x1152xbf16>
    %27 = vector.shape_cast %26 : vector<2x8x8x1152xbf16> to vector<128x1152xbf16>
    %c0_57 = arith.constant 0 : index
    %c0_58 = arith.constant 0 : index
    %28 = vector.load %arg1[%c0_57, %c0_58] : memref<1152x64xbf16, #tpu.memory_space<vmem>>, vector<1152x64xbf16>
    %cst_59 = arith.constant dense<0.000000e+00> : vector<128x64xf32>
    %29 = tpu.matmul %27, %28, %cst_59 {dimension_numbers = #tpu.dot_dimension_numbers<[1], [0], [0], [1], [0, 0, 1, 1], [], []>} : vector<128x1152xbf16>, vector<1152x64xbf16>, vector<128x64xf32> -> vector<128x64xf32>
    %c0_60 = arith.constant 0 : index
    %c0_61 = arith.constant 0 : index
    %30 = vector.load %arg2[%c0_60, %c0_61] : memref<1x64xf32, #tpu.memory_space<vmem>>, vector<1x64xf32>
    %31 = vector.broadcast %30 : vector<1x64xf32> to vector<128x64xf32>
    %32 = arith.addf %29, %31 : vector<128x64xf32>
    %cst_62 = arith.constant dense<0.000000e+00> : vector<64xf32>
    %33 = vector.multi_reduction <add>, %32, %cst_62 [0] : vector<128x64xf32> to vector<64xf32>
    %34 = vector.shape_cast %33 : vector<64xf32> to vector<1x64xf32>
    %cst_63 = arith.constant 1.280000e+02 : f32
    %35 = vector.broadcast %cst_63 : f32 to vector<1x64xf32>
    %36 = arith.divf %34, %35 : vector<1x64xf32>
    %37 = arith.mulf %32, %32 : vector<128x64xf32>
    %cst_64 = arith.constant dense<0.000000e+00> : vector<64xf32>
    %38 = vector.multi_reduction <add>, %37, %cst_64 [0] : vector<128x64xf32> to vector<64xf32>
    %39 = vector.shape_cast %38 : vector<64xf32> to vector<1x64xf32>
    %cst_65 = arith.constant 1.280000e+02 : f32
    %40 = vector.broadcast %cst_65 : f32 to vector<1x64xf32>
    %41 = arith.divf %39, %40 : vector<1x64xf32>
    %42 = arith.mulf %36, %36 : vector<1x64xf32>
    %43 = arith.subf %41, %42 : vector<1x64xf32>
    %c0_66 = arith.constant 0 : index
    %c0_67 = arith.constant 0 : index
    %44 = vector.load %arg3[%c0_66, %c0_67] : memref<1x64xf32, #tpu.memory_space<vmem>>, vector<1x64xf32>
    %cst_68 = arith.constant 9.99999974E-6 : f32
    %45 = vector.broadcast %cst_68 : f32 to vector<1x64xf32>
    %46 = arith.addf %43, %45 : vector<1x64xf32>
    %47 = math.rsqrt %46 : vector<1x64xf32>
    %48 = arith.mulf %44, %47 : vector<1x64xf32>
    %c0_69 = arith.constant 0 : index
    %c0_70 = arith.constant 0 : index
    %49 = vector.load %arg4[%c0_69, %c0_70] : memref<1x64xf32, #tpu.memory_space<vmem>>, vector<1x64xf32>
    %50 = arith.mulf %36, %48 : vector<1x64xf32>
    %51 = arith.subf %49, %50 : vector<1x64xf32>
    %52 = vector.broadcast %48 : vector<1x64xf32> to vector<128x64xf32>
    %53 = arith.mulf %32, %52 : vector<128x64xf32>
    %54 = vector.broadcast %51 : vector<1x64xf32> to vector<128x64xf32>
    %55 = arith.addf %53, %54 : vector<128x64xf32>
    %cst_71 = arith.constant 0.000000e+00 : f32
    %56 = vector.broadcast %cst_71 : f32 to vector<128x64xf32>
    %57 = arith.maximumf %55, %56 : vector<128x64xf32>
    %58 = vector.shape_cast %57 : vector<128x64xf32> to vector<64x2x64xf32>
    %cst_72 = arith.constant dense<0xFF800000> : vector<64x64xf32>
    %59 = vector.multi_reduction <maximumf>, %58, %cst_72 [1] : vector<64x2x64xf32> to vector<64x64xf32>
    %60 = vector.shape_cast %59 : vector<64x64xf32> to vector<8x2x4x64xf32>
    %cst_73 = arith.constant dense<0xFF800000> : vector<8x4x64xf32>
    %61 = vector.multi_reduction <maximumf>, %60, %cst_73 [1] : vector<8x2x4x64xf32> to vector<8x4x64xf32>
    %62 = vector.shape_cast %61 : vector<8x4x64xf32> to vector<2x4x4x64xf32>
    %cst_74 = arith.constant 0.000000e+00 : f32
    %63 = vector.broadcast %cst_74 : f32 to vector<2x1x6x64xf32>
    %cst_75 = arith.constant 0.000000e+00 : f32
    %64 = vector.broadcast %cst_75 : f32 to vector<2x4x1x64xf32>
    %c0_76 = arith.constant 0 : index
    %c0_77 = arith.constant 0 : index
    %c0_78 = arith.constant 0 : index
    %c0_79 = arith.constant 0 : index
    %65 = vector.load %arg15[%c0_76, %c0_77, %c0_78, %c0_79] : memref<2x6x6x64xf32, #tpu.memory_space<vmem>>, vector<2x1x6x64xf32>
    tpu.vector_store %arg15[%c0_76, %c0_77, %c0_78, %c0_79], %63 {strides = array<i32>} : memref<2x6x6x64xf32, #tpu.memory_space<vmem>>, vector<2x1x6x64xf32>,
    %c0_80 = arith.constant 0 : index
    %c5 = arith.constant 5 : index
    %c0_81 = arith.constant 0 : index
    %c0_82 = arith.constant 0 : index
    %66 = vector.load %arg15[%c0_80, %c5, %c0_81, %c0_82] : memref<2x6x6x64xf32, #tpu.memory_space<vmem>>, vector<2x1x6x64xf32>
    tpu.vector_store %arg15[%c0_80, %c5, %c0_81, %c0_82], %63 {strides = array<i32>} : memref<2x6x6x64xf32, #tpu.memory_space<vmem>>, vector<2x1x6x64xf32>,
    %c0_83 = arith.constant 0 : index
    %c1_84 = arith.constant 1 : index
    %c0_85 = arith.constant 0 : index
    %c0_86 = arith.constant 0 : index
    %67 = vector.load %arg15[%c0_83, %c1_84, %c0_85, %c0_86] : memref<2x6x6x64xf32, #tpu.memory_space<vmem>>, vector<2x4x1x64xf32>
    tpu.vector_store %arg15[%c0_83, %c1_84, %c0_85, %c0_86], %64 {strides = array<i32>} : memref<2x6x6x64xf32, #tpu.memory_space<vmem>>, vector<2x4x1x64xf32>,
    %c0_87 = arith.constant 0 : index
    %c1_88 = arith.constant 1 : index
    %c5_89 = arith.constant 5 : index
    %c0_90 = arith.constant 0 : index
    %68 = vector.load %arg15[%c0_87, %c1_88, %c5_89, %c0_90] : memref<2x6x6x64xf32, #tpu.memory_space<vmem>>, vector<2x4x1x64xf32>
    tpu.vector_store %arg15[%c0_87, %c1_88, %c5_89, %c0_90], %64 {strides = array<i32>} : memref<2x6x6x64xf32, #tpu.memory_space<vmem>>, vector<2x4x1x64xf32>,
    %c0_91 = arith.constant 0 : index
    %c1_92 = arith.constant 1 : index
    %c1_93 = arith.constant 1 : index
    %c0_94 = arith.constant 0 : index
    %69 = vector.load %arg15[%c0_91, %c1_92, %c1_93, %c0_94] : memref<2x6x6x64xf32, #tpu.memory_space<vmem>>, vector<2x4x4x64xf32>
    tpu.vector_store %arg15[%c0_91, %c1_92, %c1_93, %c0_94], %62 {strides = array<i32>} : memref<2x6x6x64xf32, #tpu.memory_space<vmem>>, vector<2x4x4x64xf32>,
    %c0_95 = arith.constant 0 : index
    %c0_96 = arith.constant 0 : index
    %c0_97 = arith.constant 0 : index
    %c0_98 = arith.constant 0 : index
    %70 = vector.load %arg15[%c0_95, %c0_96, %c0_97, %c0_98] : memref<2x6x6x64xf32, #tpu.memory_space<vmem>>, vector<2x4x4x64xf32>
    %71 = arith.truncf %70 : vector<2x4x4x64xf32> to vector<2x4x4x64xbf16>
    %c0_99 = arith.constant 0 : index
    %c0_100 = arith.constant 0 : index
    %c1_101 = arith.constant 1 : index
    %c0_102 = arith.constant 0 : index
    %72 = vector.load %arg15[%c0_99, %c0_100, %c1_101, %c0_102] : memref<2x6x6x64xf32, #tpu.memory_space<vmem>>, vector<2x4x4x64xf32>
    %73 = arith.truncf %72 : vector<2x4x4x64xf32> to vector<2x4x4x64xbf16>
    %c0_103 = arith.constant 0 : index
    %c0_104 = arith.constant 0 : index
    %c2_105 = arith.constant 2 : index
    %c0_106 = arith.constant 0 : index
    %74 = vector.load %arg15[%c0_103, %c0_104, %c2_105, %c0_106] : memref<2x6x6x64xf32, #tpu.memory_space<vmem>>, vector<2x4x4x64xf32>
    %75 = arith.truncf %74 : vector<2x4x4x64xf32> to vector<2x4x4x64xbf16>
    %c0_107 = arith.constant 0 : index
    %c1_108 = arith.constant 1 : index
    %c0_109 = arith.constant 0 : index
    %c0_110 = arith.constant 0 : index
    %76 = vector.load %arg15[%c0_107, %c1_108, %c0_109, %c0_110] : memref<2x6x6x64xf32, #tpu.memory_space<vmem>>, vector<2x4x4x64xf32>
    %77 = arith.truncf %76 : vector<2x4x4x64xf32> to vector<2x4x4x64xbf16>
    %c0_111 = arith.constant 0 : index
    %c1_112 = arith.constant 1 : index
    %c1_113 = arith.constant 1 : index
    %c0_114 = arith.constant 0 : index
    %78 = vector.load %arg15[%c0_111, %c1_112, %c1_113, %c0_114] : memref<2x6x6x64xf32, #tpu.memory_space<vmem>>, vector<2x4x4x64xf32>
    %79 = arith.truncf %78 : vector<2x4x4x64xf32> to vector<2x4x4x64xbf16>
    %c0_115 = arith.constant 0 : index
    %c1_116 = arith.constant 1 : index
    %c2_117 = arith.constant 2 : index
    %c0_118 = arith.constant 0 : index
    %80 = vector.load %arg15[%c0_115, %c1_116, %c2_117, %c0_118] : memref<2x6x6x64xf32, #tpu.memory_space<vmem>>, vector<2x4x4x64xf32>
    %81 = arith.truncf %80 : vector<2x4x4x64xf32> to vector<2x4x4x64xbf16>
    %c0_119 = arith.constant 0 : index
    %c2_120 = arith.constant 2 : index
    %c0_121 = arith.constant 0 : index
    %c0_122 = arith.constant 0 : index
    %82 = vector.load %arg15[%c0_119, %c2_120, %c0_121, %c0_122] : memref<2x6x6x64xf32, #tpu.memory_space<vmem>>, vector<2x4x4x64xf32>
    %83 = arith.truncf %82 : vector<2x4x4x64xf32> to vector<2x4x4x64xbf16>
    %c0_123 = arith.constant 0 : index
    %c2_124 = arith.constant 2 : index
    %c1_125 = arith.constant 1 : index
    %c0_126 = arith.constant 0 : index
    %84 = vector.load %arg15[%c0_123, %c2_124, %c1_125, %c0_126] : memref<2x6x6x64xf32, #tpu.memory_space<vmem>>, vector<2x4x4x64xf32>
    %85 = arith.truncf %84 : vector<2x4x4x64xf32> to vector<2x4x4x64xbf16>
    %c0_127 = arith.constant 0 : index
    %c2_128 = arith.constant 2 : index
    %c2_129 = arith.constant 2 : index
    %c0_130 = arith.constant 0 : index
    %86 = vector.load %arg15[%c0_127, %c2_128, %c2_129, %c0_130] : memref<2x6x6x64xf32, #tpu.memory_space<vmem>>, vector<2x4x4x64xf32>
    %87 = arith.truncf %86 : vector<2x4x4x64xf32> to vector<2x4x4x64xbf16>
    %88 = tpu.concatenate %71, %73, %75, %77, %79, %81, %83, %85, %87 in 3 : vector<2x4x4x64xbf16>, vector<2x4x4x64xbf16>, vector<2x4x4x64xbf16>, vector<2x4x4x64xbf16>, vector<2x4x4x64xbf16>, vector<2x4x4x64xbf16>, vector<2x4x4x64xbf16>, vector<2x4x4x64xbf16>, vector<2x4x4x64xbf16> -> vector<2x4x4x576xbf16>
    %89 = vector.shape_cast %88 : vector<2x4x4x576xbf16> to vector<32x576xbf16>
    %c0_131 = arith.constant 0 : index
    %c0_132 = arith.constant 0 : index
    %90 = vector.load %arg5[%c0_131, %c0_132] : memref<576x64xbf16, #tpu.memory_space<vmem>>, vector<576x64xbf16>
    %cst_133 = arith.constant dense<0.000000e+00> : vector<32x64xf32>
    %91 = tpu.matmul %89, %90, %cst_133 {dimension_numbers = #tpu.dot_dimension_numbers<[1], [0], [0], [1], [0, 0, 1, 1], [], []>} : vector<32x576xbf16>, vector<576x64xbf16>, vector<32x64xf32> -> vector<32x64xf32>
    %c0_134 = arith.constant 0 : index
    %c0_135 = arith.constant 0 : index
    %92 = vector.load %arg6[%c0_134, %c0_135] : memref<1x64xf32, #tpu.memory_space<vmem>>, vector<1x64xf32>
    %93 = vector.broadcast %92 : vector<1x64xf32> to vector<32x64xf32>
    %94 = arith.addf %91, %93 : vector<32x64xf32>
    %cst_136 = arith.constant dense<0.000000e+00> : vector<64xf32>
    %95 = vector.multi_reduction <add>, %94, %cst_136 [0] : vector<32x64xf32> to vector<64xf32>
    %96 = vector.shape_cast %95 : vector<64xf32> to vector<1x64xf32>
    %cst_137 = arith.constant 3.200000e+01 : f32
    %97 = vector.broadcast %cst_137 : f32 to vector<1x64xf32>
    %98 = arith.divf %96, %97 : vector<1x64xf32>
    %99 = arith.mulf %94, %94 : vector<32x64xf32>
    %cst_138 = arith.constant dense<0.000000e+00> : vector<64xf32>
    %100 = vector.multi_reduction <add>, %99, %cst_138 [0] : vector<32x64xf32> to vector<64xf32>
    %101 = vector.shape_cast %100 : vector<64xf32> to vector<1x64xf32>
    %cst_139 = arith.constant 3.200000e+01 : f32
    %102 = vector.broadcast %cst_139 : f32 to vector<1x64xf32>
    %103 = arith.divf %101, %102 : vector<1x64xf32>
    %104 = arith.mulf %98, %98 : vector<1x64xf32>
    %105 = arith.subf %103, %104 : vector<1x64xf32>
    %c0_140 = arith.constant 0 : index
    %c0_141 = arith.constant 0 : index
    %106 = vector.load %arg7[%c0_140, %c0_141] : memref<1x64xf32, #tpu.memory_space<vmem>>, vector<1x64xf32>
    %cst_142 = arith.constant 9.99999974E-6 : f32
    %107 = vector.broadcast %cst_142 : f32 to vector<1x64xf32>
    %108 = arith.addf %105, %107 : vector<1x64xf32>
    %109 = math.rsqrt %108 : vector<1x64xf32>
    %110 = arith.mulf %106, %109 : vector<1x64xf32>
    %c0_143 = arith.constant 0 : index
    %c0_144 = arith.constant 0 : index
    %111 = vector.load %arg8[%c0_143, %c0_144] : memref<1x64xf32, #tpu.memory_space<vmem>>, vector<1x64xf32>
    %112 = arith.mulf %98, %110 : vector<1x64xf32>
    %113 = arith.subf %111, %112 : vector<1x64xf32>
    %114 = vector.broadcast %110 : vector<1x64xf32> to vector<32x64xf32>
    %115 = arith.mulf %94, %114 : vector<32x64xf32>
    %116 = vector.broadcast %113 : vector<1x64xf32> to vector<32x64xf32>
    %117 = arith.addf %115, %116 : vector<32x64xf32>
    %cst_145 = arith.constant 0.000000e+00 : f32
    %118 = vector.broadcast %cst_145 : f32 to vector<32x64xf32>
    %119 = arith.maximumf %117, %118 : vector<32x64xf32>
    %120 = vector.shape_cast %119 : vector<32x64xf32> to vector<16x2x64xf32>
    %cst_146 = arith.constant dense<0xFF800000> : vector<16x64xf32>
    %121 = vector.multi_reduction <maximumf>, %120, %cst_146 [1] : vector<16x2x64xf32> to vector<16x64xf32>
    %122 = vector.shape_cast %121 : vector<16x64xf32> to vector<4x2x2x64xf32>
    %cst_147 = arith.constant dense<0xFF800000> : vector<4x2x64xf32>
    %123 = vector.multi_reduction <maximumf>, %122, %cst_147 [1] : vector<4x2x2x64xf32> to vector<4x2x64xf32>
    %124 = vector.shape_cast %123 : vector<4x2x64xf32> to vector<2x4x64xf32>
    %125 = vector.extract_strided_slice %124 {offsets = [0, 0, 0], sizes = [2, 1, 64], strides = [1, 1, 1]} : vector<2x4x64xf32> to vector<2x1x64xf32>
    %126 = vector.shape_cast %125 : vector<2x1x64xf32> to vector<2x64xf32>
    %127 = vector.extract_strided_slice %124 {offsets = [0, 1, 0], sizes = [2, 1, 64], strides = [1, 1, 1]} : vector<2x4x64xf32> to vector<2x1x64xf32>
    %128 = vector.shape_cast %127 : vector<2x1x64xf32> to vector<2x64xf32>
    %129 = vector.extract_strided_slice %124 {offsets = [0, 2, 0], sizes = [2, 1, 64], strides = [1, 1, 1]} : vector<2x4x64xf32> to vector<2x1x64xf32>
    %130 = vector.shape_cast %129 : vector<2x1x64xf32> to vector<2x64xf32>
    %131 = vector.extract_strided_slice %124 {offsets = [0, 3, 0], sizes = [2, 1, 64], strides = [1, 1, 1]} : vector<2x4x64xf32> to vector<2x1x64xf32>
    %132 = vector.shape_cast %131 : vector<2x1x64xf32> to vector<2x64xf32>
    %133 = tpu.concatenate %126, %128, %130, %132 in 1 : vector<2x64xf32>, vector<2x64xf32>, vector<2x64xf32>, vector<2x64xf32> -> vector<2x256xf32>
    %c0_148 = arith.constant 0 : index
    %c0_149 = arith.constant 0 : index
    %134 = vector.load %arg9[%c0_148, %c0_149] : memref<256x8xf32, #tpu.memory_space<vmem>>, vector<256x8xf32>
    %cst_150 = arith.constant dense<0.000000e+00> : vector<2x8xf32>
    %135 = tpu.matmul %133, %134, %cst_150 {dimension_numbers = #tpu.dot_dimension_numbers<[1], [0], [0], [1], [0, 0, 1, 1], [], []>} : vector<2x256xf32>, vector<256x8xf32>, vector<2x8xf32> -> vector<2x8xf32>
    %c0_151 = arith.constant 0 : index
    %c0_152 = arith.constant 0 : index
    %136 = vector.load %arg10[%c0_151, %c0_152] : memref<1x8xf32, #tpu.memory_space<vmem>>, vector<1x8xf32>
    %137 = vector.broadcast %136 : vector<1x8xf32> to vector<2x8xf32>
    %138 = arith.addf %135, %137 : vector<2x8xf32>
    %cst_153 = arith.constant 0.000000e+00 : f32
    %139 = vector.broadcast %cst_153 : f32 to vector<2x8xf32>
    %140 = arith.maximumf %138, %139 : vector<2x8xf32>
    %c0_154 = arith.constant 0 : index
    %c0_155 = arith.constant 0 : index
    %141 = vector.load %arg11[%c0_154, %c0_155] : memref<8x1xf32, #tpu.memory_space<vmem>>, vector<8x1xf32>
    %cst_156 = arith.constant dense<0.000000e+00> : vector<2x1xf32>
    %142 = tpu.matmul %140, %141, %cst_156 {dimension_numbers = #tpu.dot_dimension_numbers<[1], [0], [0], [1], [0, 0, 1, 1], [], []>} : vector<2x8xf32>, vector<8x1xf32>, vector<2x1xf32> -> vector<2x1xf32>
    %c0_157 = arith.constant 0 : index
    %c0_158 = arith.constant 0 : index
    %143 = vector.load %arg12[%c0_157, %c0_158] : memref<1x1xf32, #tpu.memory_space<vmem>>, vector<1x1xf32>
    %144 = vector.broadcast %143 : vector<1x1xf32> to vector<2x1xf32>
    %145 = arith.addf %142, %144 : vector<2x1xf32>
    %146 = arith.negf %145 : vector<2x1xf32>
    %147 = math.exp %146 : vector<2x1xf32>
    %cst_159 = arith.constant 1.000000e+00 : f32
    %148 = vector.broadcast %cst_159 : f32 to vector<2x1xf32>
    %149 = arith.addf %148, %147 : vector<2x1xf32>
    %150 = arith.divf %148, %149 : vector<2x1xf32>
    %c0_160 = arith.constant 0 : index
    %c0_161 = arith.constant 0 : index
    %151 = vector.load %arg13[%c0_160, %c0_161] : memref<2x1xf32, #tpu.memory_space<vmem>>, vector<2x1xf32>
    tpu.vector_store %arg13[%c0_160, %c0_161], %150 {strides = array<i32>} : memref<2x1xf32, #tpu.memory_space<vmem>>, vector<2x1xf32>,
    return
  }
}

</mosaic_0001>

<llo_original>
// kernel: tpu_custom_call.1
$region0: #{tpu_custom_call.1}
  #allocation0 [shape = 'u32[]', space=smem, size = 0x4, offset = 0x4, fixed_abs, tag = 'smem constant byte address 0x4 - core index']
  #allocation1 [shape = 'u32[144,128]{1,0:T(1,128)}', space=vmem, size = 0x12000, scoped, tag = 'internal scratch']
  #allocation2 [shape = 'f32[2,10,10,128]{3,2,1,0:T(8,128)}', space=vmem, size = 0x28000, scoped, tag = 'scratch operand']
  #allocation3 [shape = 'f32[2,6,6,64]{3,2,1,0:T(8,128)}', space=vmem, size = 0xc000, scoped, tag = 'scratch operand']
  #allocation4 [shape = 'f32[1,1]{1,0:T(1,128)S(1)}', space=vmem, size = 0x200, scoped, tag = 'scoped memory for tpu_custom_call.1']
  %s0 = inlined_call_operand.vmem [shape: f32[2,8,8,128], index: 0, kind: input, shape index: {}]
  %s1 = inlined_call_operand.vmem [shape: bf16[1152,64], index: 1, kind: input, shape index: {}]
  %s2 = inlined_call_operand.vmem [shape: f32[1,64], index: 2, kind: input, shape index: {}]
  %s3 = inlined_call_operand.vmem [shape: f32[1,64], index: 3, kind: input, shape index: {}]
  %s4 = inlined_call_operand.vmem [shape: f32[1,64], index: 4, kind: input, shape index: {}]
  %s5 = inlined_call_operand.vmem [shape: bf16[576,64], index: 5, kind: input, shape index: {}]
  %s6 = inlined_call_operand.vmem [shape: f32[1,64], index: 6, kind: input, shape index: {}]
  %s7 = inlined_call_operand.vmem [shape: f32[1,64], index: 7, kind: input, shape index: {}]
  %s8 = inlined_call_operand.vmem [shape: f32[1,64], index: 8, kind: input, shape index: {}]
  %s9 = inlined_call_operand.vmem [shape: f32[256,8], index: 9, kind: input, shape index: {}]
  %s10 = inlined_call_operand.vmem [shape: f32[1,8], index: 10, kind: input, shape index: {}]
  %s11 = inlined_call_operand.vmem [shape: f32[8,1], index: 11, kind: input, shape index: {}]
  %s12 = inlined_call_operand.<no memory space> [shape: f32[1,1], index: 12, kind: input, shape index: {}]
  %s13 = inlined_call_operand.vmem [shape: f32[2,1], index: 13, kind: output, shape index: {}]
  %s14 = sld [smem:[#allocation0]]
  $region62: #{tpu_custom_call.1} parent=0
    _
  %s16 = ssub.s32 1, %s14
  %s17 = scalar_select 0, %s16, %s14
  %v18 = vstv %s12
  %19 = vst [vmem:[#allocation4] sm:$0x1] %v18
  // Predicated region
  $region2: #{tpu_custom_call.1} parent=0 // pred_check
    _
  $region3: #{tpu_custom_call.1} parent=0 // pred_check_branch
    %21 = sbr.rel (0) target = $region5
  $region4: #{tpu_custom_call.1} parent=0 // pred_region
    _
  $region5: #{tpu_custom_call.1} parent=0 // pred_fallthru
    _
  // Predicated region
  $region6: #{tpu_custom_call.1} parent=0 // pred_check
    _
  $region7: #{tpu_custom_call.1} parent=0 // pred_check_branch
    %23 = sbr.rel (0) target = $region9
  $region8: #{tpu_custom_call.1} parent=0 // pred_region
    _
  $region9: #{tpu_custom_call.1} parent=0 // pred_fallthru
    _
  // Predicated region
  $region10: #{tpu_custom_call.1} parent=0 // pred_check
    _
  $region11: #{tpu_custom_call.1} parent=0 // pred_check_branch
    %25 = sbr.rel (0) target = $region13
  $region12: #{tpu_custom_call.1} parent=0 // pred_region
    _
  $region13: #{tpu_custom_call.1} parent=0 // pred_fallthru
    _
  // Predicated region
  $region14: #{tpu_custom_call.1} parent=0 // pred_check
    _
  $region15: #{tpu_custom_call.1} parent=0 // pred_check_branch
    %27 = sbr.rel (0) target = $region17
  $region16: #{tpu_custom_call.1} parent=0 // pred_region
    _
  $region17: #{tpu_custom_call.1} parent=0 // pred_fallthru
    _
  // Predicated region
  $region18: #{tpu_custom_call.1} parent=0 // pred_check
    _
  $region19: #{tpu_custom_call.1} parent=0 // pred_check_branch
    %29 = sbr.rel (0) target = $region21
  $region20: #{tpu_custom_call.1} parent=0 // pred_region
    _
  $region21: #{tpu_custom_call.1} parent=0 // pred_fallthru
    _
  // Predicated region
  $region22: #{tpu_custom_call.1} parent=0 // pred_check
    _
  $region23: #{tpu_custom_call.1} parent=0 // pred_check_branch
    %31 = sbr.rel (0) target = $region25
  $region24: #{tpu_custom_call.1} parent=0 // pred_region
    _
  $region25: #{tpu_custom_call.1} parent=0 // pred_fallthru
    _
  // Predicated region
  $region26: #{tpu_custom_call.1} parent=0 // pred_check
    _
  $region27: #{tpu_custom_call.1} parent=0 // pred_check_branch
    %33 = sbr.rel (0) target = $region29
  $region28: #{tpu_custom_call.1} parent=0 // pred_region
    _
  $region29: #{tpu_custom_call.1} parent=0 // pred_fallthru
    _
  // Predicated region
  $region30: #{tpu_custom_call.1} parent=0 // pred_check
    _
  $region31: #{tpu_custom_call.1} parent=0 // pred_check_branch
    %35 = sbr.rel (0) target = $region33
  $region32: #{tpu_custom_call.1} parent=0 // pred_region
    _
  $region33: #{tpu_custom_call.1} parent=0 // pred_fallthru
    _
  // Predicated region
  $region34: #{tpu_custom_call.1} parent=0 // pred_check
    _
  $region35: #{tpu_custom_call.1} parent=0 // pred_check_branch
    %37 = sbr.rel (0) target = $region37
  $region36: #{tpu_custom_call.1} parent=0 // pred_region
    _
  $region37: #{tpu_custom_call.1} parent=0 // pred_fallthru
    _
  // Predicated region
  $region38: #{tpu_custom_call.1} parent=0 // pred_check
    _
  $region39: #{tpu_custom_call.1} parent=0 // pred_check_branch
    %39 = sbr.rel (0) target = $region41
  $region40: #{tpu_custom_call.1} parent=0 // pred_region
    _
  $region41: #{tpu_custom_call.1} parent=0 // pred_fallthru
    _
  // Predicated region
  $region42: #{tpu_custom_call.1} parent=0 // pred_check
    _
  $region43: #{tpu_custom_call.1} parent=0 // pred_check_branch
    %41 = sbr.rel (0) target = $region45
  $region44: #{tpu_custom_call.1} parent=0 // pred_region
    _
  $region45: #{tpu_custom_call.1} parent=0 // pred_fallthru
    _
  // Predicated region
  $region46: #{tpu_custom_call.1} parent=0 // pred_check
    _
  $region47: #{tpu_custom_call.1} parent=0 // pred_check_branch
    %43 = sbr.rel (0) target = $region49
  $region48: #{tpu_custom_call.1} parent=0 // pred_region
    _
  $region49: #{tpu_custom_call.1} parent=0 // pred_fallthru
    _
  // Predicated region
  $region50: #{tpu_custom_call.1} parent=0 // pred_check
    _
  $region51: #{tpu_custom_call.1} parent=0 // pred_check_branch
    %45 = sbr.rel (0) target = $region53
  $region52: #{tpu_custom_call.1} parent=0 // pred_region
    _
  $region53: #{tpu_custom_call.1} parent=0 // pred_fallthru
    _
  %47 = vst [vmem:[#allocation2] sm:$0xff] 0.0
  %48 = vst [vmem:[#allocation2 + $0x8] sm:$0x3] 0.0
  %49 = vst [vmem:[#allocation2 + $0xa0] sm:$0xff] 0.0
  %50 = vst [vmem:[#allocation2 + $0xa8] sm:$0x3] 0.0
  %s51 = scalar_lea.vmem [#allocation2], 144
  %52 = vst [vmem:[%s51] sm:$0xff] 0.0
  %53 = vst [vmem:[%s51 + $0x8] sm:$0x3] 0.0
  %54 = vst [vmem:[%s51 + $0xa0] sm:$0xff] 0.0
  %55 = vst [vmem:[%s51 + $0xa8] sm:$0x3] 0.0
  %s56 = scalar_lea.vmem [#allocation2], 16
  %57 = vst [vmem:[%s56] sm:$0x1] 0.0
  %58 = vst [vmem:[%s56 + $0x10] sm:$0x1] 0.0
  %59 = vst [vmem:[%s56 + $0x20] sm:$0x1] 0.0
  %60 = vst [vmem:[%s56 + $0x30] sm:$0x1] 0.0
  %61 = vst [vmem:[%s56 + $0x40] sm:$0x1] 0.0
  %62 = vst [vmem:[%s56 + $0x50] sm:$0x1] 0.0
  %63 = vst [vmem:[%s56 + $0x60] sm:$0x1] 0.0
  %64 = vst [vmem:[%s56 + $0x70] sm:$0x1] 0.0
  %65 = vst [vmem:[%s56 + $0xa0] sm:$0x1] 0.0
  %66 = vst [vmem:[%s56 + $0xb0] sm:$0x1] 0.0
  %67 = vst [vmem:[%s56 + $0xc0] sm:$0x1] 0.0
  %68 = vst [vmem:[%s56 + $0xd0] sm:$0x1] 0.0
  %69 = vst [vmem:[%s56 + $0xe0] sm:$0x1] 0.0
  %70 = vst [vmem:[%s56 + $0xf0] sm:$0x1] 0.0
  %71 = vst [vmem:[%s56 + $0x100] sm:$0x1] 0.0
  %72 = vst [vmem:[%s56 + $0x110] sm:$0x1] 0.0
  %73 = vst [vmem:[%s56 + $0x9] sm:$0x1] 0.0
  %74 = vst [vmem:[%s56 + $0x19] sm:$0x1] 0.0
  %75 = vst [vmem:[%s56 + $0x29] sm:$0x1] 0.0
  %76 = vst [vmem:[%s56 + $0x39] sm:$0x1] 0.0
  %77 = vst [vmem:[%s56 + $0x49] sm:$0x1] 0.0
  %78 = vst [vmem:[%s56 + $0x59] sm:$0x1] 0.0
  %79 = vst [vmem:[%s56 + $0x69] sm:$0x1] 0.0
  %80 = vst [vmem:[%s56 + $0x79] sm:$0x1] 0.0
  %81 = vst [vmem:[%s56 + $0xa9] sm:$0x1] 0.0
  %82 = vst [vmem:[%s56 + $0xb9] sm:$0x1] 0.0
  %83 = vst [vmem:[%s56 + $0xc9] sm:$0x1] 0.0
  %84 = vst [vmem:[%s56 + $0xd9] sm:$0x1] 0.0
  %85 = vst [vmem:[%s56 + $0xe9] sm:$0x1] 0.0
  %86 = vst [vmem:[%s56 + $0xf9] sm:$0x1] 0.0
  %87 = vst [vmem:[%s56 + $0x109] sm:$0x1] 0.0
  %88 = vst [vmem:[%s56 + $0x119] sm:$0x1] 0.0
  %v89 = vld [vmem:[%s0] sm:$0xff]
  %v90 = vld [vmem:[%s0 + $0x8] sm:$0xff]
  %v91 = vld [vmem:[%s0 + $0x10] sm:$0xff]
  %v92 = vld [vmem:[%s0 + $0x18] sm:$0xff]
  %v93 = vld [vmem:[%s0 + $0x20] sm:$0xff]
  %v94 = vld [vmem:[%s0 + $0x28] sm:$0xff]
  %v95 = vld [vmem:[%s0 + $0x30] sm:$0xff]
  %v96 = vld [vmem:[%s0 + $0x38] sm:$0xff]
  %v97 = vld [vmem:[%s0 + $0x40] sm:$0xff]
  %v98 = vld [vmem:[%s0 + $0x48] sm:$0xff]
  %v99 = vld [vmem:[%s0 + $0x50] sm:$0xff]
  %v100 = vld [vmem:[%s0 + $0x58] sm:$0xff]
  %v101 = vld [vmem:[%s0 + $0x60] sm:$0xff]
  %v102 = vld [vmem:[%s0 + $0x68] sm:$0xff]
  %v103 = vld [vmem:[%s0 + $0x70] sm:$0xff]
  %v104 = vld [vmem:[%s0 + $0x78] sm:$0xff]
  %105 = vst [vmem:[%s56 + $0x1] sm:$0xff] %v89
  %106 = vst [vmem:[%s56 + $0x11] sm:$0xff] %v90
  %107 = vst [vmem:[%s56 + $0x21] sm:$0xff] %v91
  %108 = vst [vmem:[%s56 + $0x31] sm:$0xff] %v92
  %109 = vst [vmem:[%s56 + $0x41] sm:$0xff] %v93
  %110 = vst [vmem:[%s56 + $0x51] sm:$0xff] %v94
  %111 = vst [vmem:[%s56 + $0x61] sm:$0xff] %v95
  %112 = vst [vmem:[%s56 + $0x71] sm:$0xff] %v96
  %113 = vst [vmem:[%s56 + $0xa1] sm:$0xff] %v97
  %114 = vst [vmem:[%s56 + $0xb1] sm:$0xff] %v98
  %115 = vst [vmem:[%s56 + $0xc1] sm:$0xff] %v99
  %116 = vst [vmem:[%s56 + $0xd1] sm:$0xff] %v100
  %117 = vst [vmem:[%s56 + $0xe1] sm:$0xff] %v101
  %118 = vst [vmem:[%s56 + $0xf1] sm:$0xff] %v102
  %119 = vst [vmem:[%s56 + $0x101] sm:$0xff] %v103
  %120 = vst [vmem:[%s56 + $0x111] sm:$0xff] %v104
  %v121 = vld [vmem:[#allocation2] sm:$0xff]
  %v122 = vld [vmem:[#allocation2 + $0x10] sm:$0xff]
  %v123 = vld [vmem:[#allocation2 + $0x20] sm:$0xff]
  %v124 = vld [vmem:[#allocation2 + $0x30] sm:$0xff]
  %v125 = vld [vmem:[#allocation2 + $0x40] sm:$0xff]
  %v126 = vld [vmem:[#allocation2 + $0x50] sm:$0xff]
  %v127 = vld [vmem:[#allocation2 + $0x60] sm:$0xff]
  %v128 = vld [vmem:[#allocation2 + $0x70] sm:$0xff]
  %v129 = vld [vmem:[#allocation2 + $0xa0] sm:$0xff]
  %v130 = vld [vmem:[#allocation2 + $0xb0] sm:$0xff]
  %v131 = vld [vmem:[#allocation2 + $0xc0] sm:$0xff]
  %v132 = vld [vmem:[#allocation2 + $0xd0] sm:$0xff]
  %v133 = vld [vmem:[#allocation2 + $0xe0] sm:$0xff]
  %v134 = vld [vmem:[#allocation2 + $0xf0] sm:$0xff]
  %v135 = vld [vmem:[#allocation2 + $0x100] sm:$0xff]
  %v136 = vld [vmem:[#allocation2 + $0x110] sm:$0xff]
  %v137 = vpack.c.bf16 %v121, %v121
  %v138 = vpack.c.bf16 %v122, %v122
  %v139 = vpack.c.bf16 %v123, %v123
  %v140 = vpack.c.bf16 %v124, %v124
  %v141 = vpack.c.bf16 %v125, %v125
  %v142 = vpack.c.bf16 %v126, %v126
  %v143 = vpack.c.bf16 %v127, %v127
  %v144 = vpack.c.bf16 %v128, %v128
  %v145 = vpack.c.bf16 %v129, %v129
  %v146 = vpack.c.bf16 %v130, %v130
  %v147 = vpack.c.bf16 %v131, %v131
  %v148 = vpack.c.bf16 %v132, %v132
  %v149 = vpack.c.bf16 %v133, %v133
  %v150 = vpack.c.bf16 %v134, %v134
  %v151 = vpack.c.bf16 %v135, %v135
  %v152 = vpack.c.bf16 %v136, %v136
  %v153 = vld [vmem:[#allocation2 + $0x1] sm:$0xff]
  %v154 = vld [vmem:[#allocation2 + $0x11] sm:$0xff]
  %v155 = vld [vmem:[#allocation2 + $0x21] sm:$0xff]
  %v156 = vld [vmem:[#allocation2 + $0x31] sm:$0xff]
  %v157 = vld [vmem:[#allocation2 + $0x41] sm:$0xff]
  %v158 = vld [vmem:[#allocation2 + $0x51] sm:$0xff]
  %v159 = vld [vmem:[#allocation2 + $0x61] sm:$0xff]
  %v160 = vld [vmem:[#allocation2 + $0x71] sm:$0xff]
  %v161 = vld [vmem:[#allocation2 + $0xa1] sm:$0xff]
  %v162 = vld [vmem:[#allocation2 + $0xb1] sm:$0xff]
  %v163 = vld [vmem:[#allocation2 + $0xc1] sm:$0xff]
  %v164 = vld [vmem:[#allocation2 + $0xd1] sm:$0xff]
  %v165 = vld [vmem:[#allocation2 + $0xe1] sm:$0xff]
  %v166 = vld [vmem:[#allocation2 + $0xf1] sm:$0xff]
  %v167 = vld [vmem:[#allocation2 + $0x101] sm:$0xff]
  %v168 = vld [vmem:[#allocation2 + $0x111] sm:$0xff]
  %v169 = vpack.c.bf16 %v153, %v153
  %v170 = vpack.c.bf16 %v154, %v154
  %v171 = vpack.c.bf16 %v155, %v155
  %v172 = vpack.c.bf16 %v156, %v156
  %v173 = vpack.c.bf16 %v157, %v157
  %v174 = vpack.c.bf16 %v158, %v158
  %v175 = vpack.c.bf16 %v159, %v159
  %v176 = vpack.c.bf16 %v160, %v160
  %v177 = vpack.c.bf16 %v161, %v161
  %v178 = vpack.c.bf16 %v162, %v162
  %v179 = vpack.c.bf16 %v163, %v163
  %v180 = vpack.c.bf16 %v164, %v164
  %v181 = vpack.c.bf16 %v165, %v165
  %v182 = vpack.c.bf16 %v166, %v166
  %v183 = vpack.c.bf16 %v167, %v167
  %v184 = vpack.c.bf16 %v168, %v168
  %v185 = vld [vmem:[#allocation2 + $0x2] sm:$0xff]
  %v186 = vld [vmem:[#allocation2 + $0x12] sm:$0xff]
  %v187 = vld [vmem:[#allocation2 + $0x22] sm:$0xff]
  %v188 = vld [vmem:[#allocation2 + $0x32] sm:$0xff]
  %v189 = vld [vmem:[#allocation2 + $0x42] sm:$0xff]
  %v190 = vld [vmem:[#allocation2 + $0x52] sm:$0xff]
  %v191 = vld [vmem:[#allocation2 + $0x62] sm:$0xff]
  %v192 = vld [vmem:[#allocation2 + $0x72] sm:$0xff]
  %v193 = vld [vmem:[#allocation2 + $0xa2] sm:$0xff]
  %v194 = vld [vmem:[#allocation2 + $0xb2] sm:$0xff]
  %v195 = vld [vmem:[#allocation2 + $0xc2] sm:$0xff]
  %v196 = vld [vmem:[#allocation2 + $0xd2] sm:$0xff]
  %v197 = vld [vmem:[#allocation2 + $0xe2] sm:$0xff]
  %v198 = vld [vmem:[#allocation2 + $0xf2] sm:$0xff]
  %v199 = vld [vmem:[#allocation2 + $0x102] sm:$0xff]
  %v200 = vld [vmem:[#allocation2 + $0x112] sm:$0xff]
  %v201 = vpack.c.bf16 %v185, %v185
  %v202 = vpack.c.bf16 %v186, %v186
  %v203 = vpack.c.bf16 %v187, %v187
  %v204 = vpack.c.bf16 %v188, %v188
  %v205 = vpack.c.bf16 %v189, %v189
  %v206 = vpack.c.bf16 %v190, %v190
  %v207 = vpack.c.bf16 %v191, %v191
  %v208 = vpack.c.bf16 %v192, %v192
  %v209 = vpack.c.bf16 %v193, %v193
  %v210 = vpack.c.bf16 %v194, %v194
  %v211 = vpack.c.bf16 %v195, %v195
  %v212 = vpack.c.bf16 %v196, %v196
  %v213 = vpack.c.bf16 %v197, %v197
  %v214 = vpack.c.bf16 %v198, %v198
  %v215 = vpack.c.bf16 %v199, %v199
  %v216 = vpack.c.bf16 %v200, %v200
  %v217 = vld [vmem:[%s56] sm:$0xff]
  %v218 = vld [vmem:[%s56 + $0x10] sm:$0xff]
  %v219 = vld [vmem:[%s56 + $0x20] sm:$0xff]
  %v220 = vld [vmem:[%s56 + $0x30] sm:$0xff]
  %v221 = vld [vmem:[%s56 + $0x40] sm:$0xff]
  %v222 = vld [vmem:[%s56 + $0x50] sm:$0xff]
  %v223 = vld [vmem:[%s56 + $0x60] sm:$0xff]
  %v224 = vld [vmem:[%s56 + $0x70] sm:$0xff]
  %v225 = vld [vmem:[%s56 + $0xa0] sm:$0xff]
  %v226 = vld [vmem:[%s56 + $0xb0] sm:$0xff]
  %v227 = vld [vmem:[%s56 + $0xc0] sm:$0xff]
  %v228 = vld [vmem:[%s56 + $0xd0] sm:$0xff]
  %v229 = vld [vmem:[%s56 + $0xe0] sm:$0xff]
  %v230 = vld [vmem:[%s56 + $0xf0] sm:$0xff]
  %v231 = vld [vmem:[%s56 + $0x100] sm:$0xff]
  %v232 = vld [vmem:[%s56 + $0x110] sm:$0xff]
  %v233 = vpack.c.bf16 %v217, %v217
  %v234 = vpack.c.bf16 %v218, %v218
  %v235 = vpack.c.bf16 %v219, %v219
  %v236 = vpack.c.bf16 %v220, %v220
  %v237 = vpack.c.bf16 %v221, %v221
  %v238 = vpack.c.bf16 %v222, %v222
  %v239 = vpack.c.bf16 %v223, %v223
  %v240 = vpack.c.bf16 %v224, %v224
  %v241 = vpack.c.bf16 %v225, %v225
  %v242 = vpack.c.bf16 %v226, %v226
  %v243 = vpack.c.bf16 %v227, %v227
  %v244 = vpack.c.bf16 %v228, %v228
  %v245 = vpack.c.bf16 %v229, %v229
  %v246 = vpack.c.bf16 %v230, %v230
  %v247 = vpack.c.bf16 %v231, %v231
  %v248 = vpack.c.bf16 %v232, %v232
  %v249 = vld [vmem:[%s56 + $0x1] sm:$0xff]
  %v250 = vld [vmem:[%s56 + $0x11] sm:$0xff]
  %v251 = vld [vmem:[%s56 + $0x21] sm:$0xff]
  %v252 = vld [vmem:[%s56 + $0x31] sm:$0xff]
  %v253 = vld [vmem:[%s56 + $0x41] sm:$0xff]
  %v254 = vld [vmem:[%s56 + $0x51] sm:$0xff]
  %v255 = vld [vmem:[%s56 + $0x61] sm:$0xff]
  %v256 = vld [vmem:[%s56 + $0x71] sm:$0xff]
  %v257 = vld [vmem:[%s56 + $0xa1] sm:$0xff]
  %v258 = vld [vmem:[%s56 + $0xb1] sm:$0xff]
  %v259 = vld [vmem:[%s56 + $0xc1] sm:$0xff]
  %v260 = vld [vmem:[%s56 + $0xd1] sm:$0xff]
  %v261 = vld [vmem:[%s56 + $0xe1] sm:$0xff]
  %v262 = vld [vmem:[%s56 + $0xf1] sm:$0xff]
  %v263 = vld [vmem:[%s56 + $0x101] sm:$0xff]
  %v264 = vld [vmem:[%s56 + $0x111] sm:$0xff]
  %v265 = vpack.c.bf16 %v249, %v249
  %v266 = vpack.c.bf16 %v250, %v250
  %v267 = vpack.c.bf16 %v251, %v251
  %v268 = vpack.c.bf16 %v252, %v252
  %v269 = vpack.c.bf16 %v253, %v253
  %v270 = vpack.c.bf16 %v254, %v254
  %v271 = vpack.c.bf16 %v255, %v255
  %v272 = vpack.c.bf16 %v256, %v256
  %v273 = vpack.c.bf16 %v257, %v257
  %v274 = vpack.c.bf16 %v258, %v258
  %v275 = vpack.c.bf16 %v259, %v259
  %v276 = vpack.c.bf16 %v260, %v260
  %v277 = vpack.c.bf16 %v261, %v261
  %v278 = vpack.c.bf16 %v262, %v262
  %v279 = vpack.c.bf16 %v263, %v263
  %v280 = vpack.c.bf16 %v264, %v264
  %v281 = vld [vmem:[%s56 + $0x2] sm:$0xff]
  %v282 = vld [vmem:[%s56 + $0x12] sm:$0xff]
  %v283 = vld [vmem:[%s56 + $0x22] sm:$0xff]
  %v284 = vld [vmem:[%s56 + $0x32] sm:$0xff]
  %v285 = vld [vmem:[%s56 + $0x42] sm:$0xff]
  %v286 = vld [vmem:[%s56 + $0x52] sm:$0xff]
  %v287 = vld [vmem:[%s56 + $0x62] sm:$0xff]
  %v288 = vld [vmem:[%s56 + $0x72] sm:$0xff]
  %v289 = vld [vmem:[%s56 + $0xa2] sm:$0xff]
  %v290 = vld [vmem:[%s56 + $0xb2] sm:$0xff]
  %v291 = vld [vmem:[%s56 + $0xc2] sm:$0xff]
  %v292 = vld [vmem:[%s56 + $0xd2] sm:$0xff]
  %v293 = vld [vmem:[%s56 + $0xe2] sm:$0xff]
  %v294 = vld [vmem:[%s56 + $0xf2] sm:$0xff]
  %v295 = vld [vmem:[%s56 + $0x102] sm:$0xff]
  %v296 = vld [vmem:[%s56 + $0x112] sm:$0xff]
  %v297 = vpack.c.bf16 %v281, %v281
  %v298 = vpack.c.bf16 %v282, %v282
  %v299 = vpack.c.bf16 %v283, %v283
  %v300 = vpack.c.bf16 %v284, %v284
  %v301 = vpack.c.bf16 %v285, %v285
  %v302 = vpack.c.bf16 %v286, %v286
  %v303 = vpack.c.bf16 %v287, %v287
  %v304 = vpack.c.bf16 %v288, %v288
  %v305 = vpack.c.bf16 %v289, %v289
  %v306 = vpack.c.bf16 %v290, %v290
  %v307 = vpack.c.bf16 %v291, %v291
  %v308 = vpack.c.bf16 %v292, %v292
  %v309 = vpack.c.bf16 %v293, %v293
  %v310 = vpack.c.bf16 %v294, %v294
  %v311 = vpack.c.bf16 %v295, %v295
  %v312 = vpack.c.bf16 %v296, %v296
  %s313 = scalar_lea.vmem [#allocation2], 32
  %v314 = vld [vmem:[%s313] sm:$0xff]
  %v315 = vld [vmem:[%s313 + $0x10] sm:$0xff]
  %v316 = vld [vmem:[%s313 + $0x20] sm:$0xff]
  %v317 = vld [vmem:[%s313 + $0x30] sm:$0xff]
  %v318 = vld [vmem:[%s313 + $0x40] sm:$0xff]
  %v319 = vld [vmem:[%s313 + $0x50] sm:$0xff]
  %v320 = vld [vmem:[%s313 + $0x60] sm:$0xff]
  %v321 = vld [vmem:[%s313 + $0x70] sm:$0xff]
  %v322 = vld [vmem:[%s313 + $0xa0] sm:$0xff]
  %v323 = vld [vmem:[%s313 + $0xb0] sm:$0xff]
  %v324 = vld [vmem:[%s313 + $0xc0] sm:$0xff]
  %v325 = vld [vmem:[%s313 + $0xd0] sm:$0xff]
  %v326 = vld [vmem:[%s313 + $0xe0] sm:$0xff]
  %v327 = vld [vmem:[%s313 + $0xf0] sm:$0xff]
  %v328 = vld [vmem:[%s313 + $0x100] sm:$0xff]
  %v329 = vld [vmem:[%s313 + $0x110] sm:$0xff]
  %v330 = vpack.c.bf16 %v314, %v314
  %v331 = vpack.c.bf16 %v315, %v315
  %v332 = vpack.c.bf16 %v316, %v316
  %v333 = vpack.c.bf16 %v317, %v317
  %v334 = vpack.c.bf16 %v318, %v318
  %v335 = vpack.c.bf16 %v319, %v319
  %v336 = vpack.c.bf16 %v320, %v320
  %v337 = vpack.c.bf16 %v321, %v321
  %v338 = vpack.c.bf16 %v322, %v322
  %v339 = vpack.c.bf16 %v323, %v323
  %v340 = vpack.c.bf16 %v324, %v324
  %v341 = vpack.c.bf16 %v325, %v325
  %v342 = vpack.c.bf16 %v326, %v326
  %v343 = vpack.c.bf16 %v327, %v327
  %v344 = vpack.c.bf16 %v328, %v328
  %v345 = vpack.c.bf16 %v329, %v329
  %v346 = vld [vmem:[%s313 + $0x1] sm:$0xff]
  %v347 = vld [vmem:[%s313 + $0x11] sm:$0xff]
  %v348 = vld [vmem:[%s313 + $0x21] sm:$0xff]
  %v349 = vld [vmem:[%s313 + $0x31] sm:$0xff]
  %v350 = vld [vmem:[%s313 + $0x41] sm:$0xff]
  %v351 = vld [vmem:[%s313 + $0x51] sm:$0xff]
  %v352 = vld [vmem:[%s313 + $0x61] sm:$0xff]
  %v353 = vld [vmem:[%s313 + $0x71] sm:$0xff]
  %v354 = vld [vmem:[%s313 + $0xa1] sm:$0xff]
  %v355 = vld [vmem:[%s313 + $0xb1] sm:$0xff]
  %v356 = vld [vmem:[%s313 + $0xc1] sm:$0xff]
  %v357 = vld [vmem:[%s313 + $0xd1] sm:$0xff]
  %v358 = vld [vmem:[%s313 + $0xe1] sm:$0xff]
  %v359 = vld [vmem:[%s313 + $0xf1] sm:$0xff]
  %v360 = vld [vmem:[%s313 + $0x101] sm:$0xff]
  %v361 = vld [vmem:[%s313 + $0x111] sm:$0xff]
  %v362 = vpack.c.bf16 %v346, %v346
  %v363 = vpack.c.bf16 %v347, %v347
  %v364 = vpack.c.bf16 %v348, %v348
  %v365 = vpack.c.bf16 %v349, %v349
  %v366 = vpack.c.bf16 %v350, %v350
  %v367 = vpack.c.bf16 %v351, %v351
  %v368 = vpack.c.bf16 %v352, %v352
  %v369 = vpack.c.bf16 %v353, %v353
  %v370 = vpack.c.bf16 %v354, %v354
  %v371 = vpack.c.bf16 %v355, %v355
  %v372 = vpack.c.bf16 %v356, %v356
  %v373 = vpack.c.bf16 %v357, %v357
  %v374 = vpack.c.bf16 %v358, %v358
  %v375 = vpack.c.bf16 %v359, %v359
  %v376 = vpack.c.bf16 %v360, %v360
  %v377 = vpack.c.bf16 %v361, %v361
  %v378 = vld [vmem:[%s313 + $0x2] sm:$0xff]
  %v379 = vld [vmem:[%s313 + $0x12] sm:$0xff]
  %v380 = vld [vmem:[%s313 + $0x22] sm:$0xff]
  %v381 = vld [vmem:[%s313 + $0x32] sm:$0xff]
  %v382 = vld [vmem:[%s313 + $0x42] sm:$0xff]
  %v383 = vld [vmem:[%s313 + $0x52] sm:$0xff]
  %v384 = vld [vmem:[%s313 + $0x62] sm:$0xff]
  %v385 = vld [vmem:[%s313 + $0x72] sm:$0xff]
  %v386 = vld [vmem:[%s313 + $0xa2] sm:$0xff]
  %v387 = vld [vmem:[%s313 + $0xb2] sm:$0xff]
  %v388 = vld [vmem:[%s313 + $0xc2] sm:$0xff]
  %v389 = vld [vmem:[%s313 + $0xd2] sm:$0xff]
  %v390 = vld [vmem:[%s313 + $0xe2] sm:$0xff]
  %v391 = vld [vmem:[%s313 + $0xf2] sm:$0xff]
  %v392 = vld [vmem:[%s313 + $0x102] sm:$0xff]
  %v393 = vld [vmem:[%s313 + $0x112] sm:$0xff]
  %v394 = vpack.c.bf16 %v378, %v378
  %v395 = vpack.c.bf16 %v379, %v379
  %v396 = vpack.c.bf16 %v380, %v380
  %v397 = vpack.c.bf16 %v381, %v381
  %v398 = vpack.c.bf16 %v382, %v382
  %v399 = vpack.c.bf16 %v383, %v383
  %v400 = vpack.c.bf16 %v384, %v384
  %v401 = vpack.c.bf16 %v385, %v385
  %v402 = vpack.c.bf16 %v386, %v386
  %v403 = vpack.c.bf16 %v387, %v387
  %v404 = vpack.c.bf16 %v388, %v388
  %v405 = vpack.c.bf16 %v389, %v389
  %v406 = vpack.c.bf16 %v390, %v390
  %v407 = vpack.c.bf16 %v391, %v391
  %v408 = vpack.c.bf16 %v392, %v392
  %v409 = vpack.c.bf16 %v393, %v393
  %v554 = vunpack.c.l.b16 %v137
  %v555 = vunpack.c.l.b16 %v169
  %v556 = vunpack.c.l.b16 %v201
  %v557 = vunpack.c.l.b16 %v233
  %v558 = vunpack.c.l.b16 %v265
  %v559 = vunpack.c.l.b16 %v297
  %v560 = vunpack.c.l.b16 %v330
  %v561 = vunpack.c.l.b16 %v362
  %v562 = vunpack.c.l.b16 %v394
  %v563 = vunpack.c.l.b16 %v138
  %v564 = vunpack.c.l.b16 %v170
  %v565 = vunpack.c.l.b16 %v202
  %v566 = vunpack.c.l.b16 %v234
  %v567 = vunpack.c.l.b16 %v266
  %v568 = vunpack.c.l.b16 %v298
  %v569 = vunpack.c.l.b16 %v331
  %v570 = vunpack.c.l.b16 %v363
  %v571 = vunpack.c.l.b16 %v395
  %v572 = vunpack.c.l.b16 %v139
  %v573 = vunpack.c.l.b16 %v171
  %v574 = vunpack.c.l.b16 %v203
  %v575 = vunpack.c.l.b16 %v235
  %v576 = vunpack.c.l.b16 %v267
  %v577 = vunpack.c.l.b16 %v299
  %v578 = vunpack.c.l.b16 %v332
  %v579 = vunpack.c.l.b16 %v364
  %v580 = vunpack.c.l.b16 %v396
  %v581 = vunpack.c.l.b16 %v140
  %v582 = vunpack.c.l.b16 %v172
  %v583 = vunpack.c.l.b16 %v204
  %v584 = vunpack.c.l.b16 %v236
  %v585 = vunpack.c.l.b16 %v268
  %v586 = vunpack.c.l.b16 %v300
  %v587 = vunpack.c.l.b16 %v333
  %v588 = vunpack.c.l.b16 %v365
  %v589 = vunpack.c.l.b16 %v397
  %v590 = vunpack.c.l.b16 %v141
  %v591 = vunpack.c.l.b16 %v173
  %v592 = vunpack.c.l.b16 %v205
  %v593 = vunpack.c.l.b16 %v237
  %v594 = vunpack.c.l.b16 %v269
  %v595 = vunpack.c.l.b16 %v301
  %v596 = vunpack.c.l.b16 %v334
  %v597 = vunpack.c.l.b16 %v366
  %v598 = vunpack.c.l.b16 %v398
  %v599 = vunpack.c.l.b16 %v142
  %v600 = vunpack.c.l.b16 %v174
  %v601 = vunpack.c.l.b16 %v206
  %v602 = vunpack.c.l.b16 %v238
  %v603 = vunpack.c.l.b16 %v270
  %v604 = vunpack.c.l.b16 %v302
  %v605 = vunpack.c.l.b16 %v335
  %v606 = vunpack.c.l.b16 %v367
  %v607 = vunpack.c.l.b16 %v399
  %v608 = vunpack.c.l.b16 %v143
  %v609 = vunpack.c.l.b16 %v175
  %v610 = vunpack.c.l.b16 %v207
  %v611 = vunpack.c.l.b16 %v239
  %v612 = vunpack.c.l.b16 %v271
  %v613 = vunpack.c.l.b16 %v303
  %v614 = vunpack.c.l.b16 %v336
  %v615 = vunpack.c.l.b16 %v368
  %v616 = vunpack.c.l.b16 %v400
  %v617 = vunpack.c.l.b16 %v144
  %v618 = vunpack.c.l.b16 %v176
  %v619 = vunpack.c.l.b16 %v208
  %v620 = vunpack.c.l.b16 %v240
  %v621 = vunpack.c.l.b16 %v272
  %v622 = vunpack.c.l.b16 %v304
  %v623 = vunpack.c.l.b16 %v337
  %v624 = vunpack.c.l.b16 %v369
  %v625 = vunpack.c.l.b16 %v401
  %v626 = vunpack.c.l.b16 %v145
  %v627 = vunpack.c.l.b16 %v177
  %v628 = vunpack.c.l.b16 %v209
  %v629 = vunpack.c.l.b16 %v241
  %v630 = vunpack.c.l.b16 %v273
  %v631 = vunpack.c.l.b16 %v305
  %v632 = vunpack.c.l.b16 %v338
  %v633 = vunpack.c.l.b16 %v370
  %v634 = vunpack.c.l.b16 %v402
  %v635 = vunpack.c.l.b16 %v146
  %v636 = vunpack.c.l.b16 %v178
  %v637 = vunpack.c.l.b16 %v210
  %v638 = vunpack.c.l.b16 %v242
  %v639 = vunpack.c.l.b16 %v274
  %v640 = vunpack.c.l.b16 %v306
  %v641 = vunpack.c.l.b16 %v339
  %v642 = vunpack.c.l.b16 %v371
  %v643 = vunpack.c.l.b16 %v403
  %v644 = vunpack.c.l.b16 %v147
  %v645 = vunpack.c.l.b16 %v179
  %v646 = vunpack.c.l.b16 %v211
  %v647 = vunpack.c.l.b16 %v243
  %v648 = vunpack.c.l.b16 %v275
  %v649 = vunpack.c.l.b16 %v307
  %v650 = vunpack.c.l.b16 %v340
  %v651 = vunpack.c.l.b16 %v372
  %v652 = vunpack.c.l.b16 %v404
  %v653 = vunpack.c.l.b16 %v148
  %v654 = vunpack.c.l.b16 %v180
  %v655 = vunpack.c.l.b16 %v212
  %v656 = vunpack.c.l.b16 %v244
  %v657 = vunpack.c.l.b16 %v276
  %v658 = vunpack.c.l.b16 %v308
  %v659 = vunpack.c.l.b16 %v341
  %v660 = vunpack.c.l.b16 %v373
  %v661 = vunpack.c.l.b16 %v405
  %v662 = vunpack.c.l.b16 %v149
  %v663 = vunpack.c.l.b16 %v181
  %v664 = vunpack.c.l.b16 %v213
  %v665 = vunpack.c.l.b16 %v245
  %v666 = vunpack.c.l.b16 %v277
  %v667 = vunpack.c.l.b16 %v309
  %v668 = vunpack.c.l.b16 %v342
  %v669 = vunpack.c.l.b16 %v374
  %v670 = vunpack.c.l.b16 %v406
  %v671 = vunpack.c.l.b16 %v150
  %v672 = vunpack.c.l.b16 %v182
  %v673 = vunpack.c.l.b16 %v214
  %v674 = vunpack.c.l.b16 %v246
  %v675 = vunpack.c.l.b16 %v278
  %v676 = vunpack.c.l.b16 %v310
  %v677 = vunpack.c.l.b16 %v343
  %v678 = vunpack.c.l.b16 %v375
  %v679 = vunpack.c.l.b16 %v407
  %v680 = vunpack.c.l.b16 %v151
  %v681 = vunpack.c.l.b16 %v183
  %v682 = vunpack.c.l.b16 %v215
  %v683 = vunpack.c.l.b16 %v247
  %v684 = vunpack.c.l.b16 %v279
  %v685 = vunpack.c.l.b16 %v311
  %v686 = vunpack.c.l.b16 %v344
  %v687 = vunpack.c.l.b16 %v376
  %v688 = vunpack.c.l.b16 %v408
  %v689 = vunpack.c.l.b16 %v152
  %v690 = vunpack.c.l.b16 %v184
  %v691 = vunpack.c.l.b16 %v216
  %v692 = vunpack.c.l.b16 %v248
  %v693 = vunpack.c.l.b16 %v280
  %v694 = vunpack.c.l.b16 %v312
  %v695 = vunpack.c.l.b16 %v345
  %v696 = vunpack.c.l.b16 %v377
  %v697 = vunpack.c.l.b16 %v409
  %v698 = vld [vmem:[%s1] sm:$0xf]
  %v699 = vld [vmem:[%s1 + $0x4] sm:$0xf]
  %v700 = vld [vmem:[%s1 + $0x8] sm:$0xf]
  %v701 = vld [vmem:[%s1 + $0xc] sm:$0xf]
  %v702 = vld [vmem:[%s1 + $0x10] sm:$0xf]
  %v703 = vld [vmem:[%s1 + $0x14] sm:$0xf]
  %v704 = vld [vmem:[%s1 + $0x18] sm:$0xf]
  %v705 = vld [vmem:[%s1 + $0x1c] sm:$0xf]
  %v706 = vld [vmem:[%s1 + $0x20] sm:$0xf]
  %v707 = vld [vmem:[%s1 + $0x24] sm:$0xf]
  %v708 = vld [vmem:[%s1 + $0x28] sm:$0xf]
  %v709 = vld [vmem:[%s1 + $0x2c] sm:$0xf]
  %v710 = vld [vmem:[%s1 + $0x30] sm:$0xf]
  %v711 = vld [vmem:[%s1 + $0x34] sm:$0xf]
  %v712 = vld [vmem:[%s1 + $0x38] sm:$0xf]
  %v713 = vld [vmem:[%s1 + $0x3c] sm:$0xf]
  %v714 = vld [vmem:[%s1 + $0x40] sm:$0xf]
  %v715 = vld [vmem:[%s1 + $0x44] sm:$0xf]
  %v716 = vld [vmem:[%s1 + $0x48] sm:$0xf]
  %v717 = vld [vmem:[%s1 + $0x4c] sm:$0xf]
  %v718 = vld [vmem:[%s1 + $0x50] sm:$0xf]
  %v719 = vld [vmem:[%s1 + $0x54] sm:$0xf]
  %v720 = vld [vmem:[%s1 + $0x58] sm:$0xf]
  %v721 = vld [vmem:[%s1 + $0x5c] sm:$0xf]
  %v722 = vld [vmem:[%s1 + $0x60] sm:$0xf]
  %v723 = vld [vmem:[%s1 + $0x64] sm:$0xf]
  %v724 = vld [vmem:[%s1 + $0x68] sm:$0xf]
  %v725 = vld [vmem:[%s1 + $0x6c] sm:$0xf]
  %v726 = vld [vmem:[%s1 + $0x70] sm:$0xf]
  %v727 = vld [vmem:[%s1 + $0x74] sm:$0xf]
  %v728 = vld [vmem:[%s1 + $0x78] sm:$0xf]
  %v729 = vld [vmem:[%s1 + $0x7c] sm:$0xf]
  %v730 = vld [vmem:[%s1 + $0x80] sm:$0xf]
  %v731 = vld [vmem:[%s1 + $0x84] sm:$0xf]
  %v732 = vld [vmem:[%s1 + $0x88] sm:$0xf]
  %v733 = vld [vmem:[%s1 + $0x8c] sm:$0xf]
  %v734 = vld [vmem:[%s1 + $0x90] sm:$0xf]
  %v735 = vld [vmem:[%s1 + $0x94] sm:$0xf]
  %v736 = vld [vmem:[%s1 + $0x98] sm:$0xf]
  %v737 = vld [vmem:[%s1 + $0x9c] sm:$0xf]
  %v738 = vld [vmem:[%s1 + $0xa0] sm:$0xf]
  %v739 = vld [vmem:[%s1 + $0xa4] sm:$0xf]
  %v740 = vld [vmem:[%s1 + $0xa8] sm:$0xf]
  %v741 = vld [vmem:[%s1 + $0xac] sm:$0xf]
  %v742 = vld [vmem:[%s1 + $0xb0] sm:$0xf]
  %v743 = vld [vmem:[%s1 + $0xb4] sm:$0xf]
  %v744 = vld [vmem:[%s1 + $0xb8] sm:$0xf]
  %v745 = vld [vmem:[%s1 + $0xbc] sm:$0xf]
  %v746 = vld [vmem:[%s1 + $0xc0] sm:$0xf]
  %v747 = vld [vmem:[%s1 + $0xc4] sm:$0xf]
  %v748 = vld [vmem:[%s1 + $0xc8] sm:$0xf]
  %v749 = vld [vmem:[%s1 + $0xcc] sm:$0xf]
  %v750 = vld [vmem:[%s1 + $0xd0] sm:$0xf]
  %v751 = vld [vmem:[%s1 + $0xd4] sm:$0xf]
  %v752 = vld [vmem:[%s1 + $0xd8] sm:$0xf]
  %v753 = vld [vmem:[%s1 + $0xdc] sm:$0xf]
  %v754 = vld [vmem:[%s1 + $0xe0] sm:$0xf]
  %v755 = vld [vmem:[%s1 + $0xe4] sm:$0xf]
  %v756 = vld [vmem:[%s1 + $0xe8] sm:$0xf]
  %v757 = vld [vmem:[%s1 + $0xec] sm:$0xf]
  %v758 = vld [vmem:[%s1 + $0xf0] sm:$0xf]
  %v759 = vld [vmem:[%s1 + $0xf4] sm:$0xf]
  %v760 = vld [vmem:[%s1 + $0xf8] sm:$0xf]
  %v761 = vld [vmem:[%s1 + $0xfc] sm:$0xf]
  %v762 = vld [vmem:[%s1 + $0x100] sm:$0xf]
  %v763 = vld [vmem:[%s1 + $0x104] sm:$0xf]
  %v764 = vld [vmem:[%s1 + $0x108] sm:$0xf]
  %v765 = vld [vmem:[%s1 + $0x10c] sm:$0xf]
  %v766 = vld [vmem:[%s1 + $0x110] sm:$0xf]
  %v767 = vld [vmem:[%s1 + $0x114] sm:$0xf]
  %v768 = vld [vmem:[%s1 + $0x118] sm:$0xf]
  %v769 = vld [vmem:[%s1 + $0x11c] sm:$0xf]
  %v770 = vld [vmem:[%s1 + $0x120] sm:$0xf]
  %v771 = vld [vmem:[%s1 + $0x124] sm:$0xf]
  %v772 = vld [vmem:[%s1 + $0x128] sm:$0xf]
  %v773 = vld [vmem:[%s1 + $0x12c] sm:$0xf]
  %v774 = vld [vmem:[%s1 + $0x130] sm:$0xf]
  %v775 = vld [vmem:[%s1 + $0x134] sm:$0xf]
  %v776 = vld [vmem:[%s1 + $0x138] sm:$0xf]
  %v777 = vld [vmem:[%s1 + $0x13c] sm:$0xf]
  %v778 = vld [vmem:[%s1 + $0x140] sm:$0xf]
  %v779 = vld [vmem:[%s1 + $0x144] sm:$0xf]
  %v780 = vld [vmem:[%s1 + $0x148] sm:$0xf]
  %v781 = vld [vmem:[%s1 + $0x14c] sm:$0xf]
  %v782 = vld [vmem:[%s1 + $0x150] sm:$0xf]
  %v783 = vld [vmem:[%s1 + $0x154] sm:$0xf]
  %v784 = vld [vmem:[%s1 + $0x158] sm:$0xf]
  %v785 = vld [vmem:[%s1 + $0x15c] sm:$0xf]
  %v786 = vld [vmem:[%s1 + $0x160] sm:$0xf]
  %v787 = vld [vmem:[%s1 + $0x164] sm:$0xf]
  %v788 = vld [vmem:[%s1 + $0x168] sm:$0xf]
  %v789 = vld [vmem:[%s1 + $0x16c] sm:$0xf]
  %v790 = vld [vmem:[%s1 + $0x170] sm:$0xf]
  %v791 = vld [vmem:[%s1 + $0x174] sm:$0xf]
  %v792 = vld [vmem:[%s1 + $0x178] sm:$0xf]
  %v793 = vld [vmem:[%s1 + $0x17c] sm:$0xf]
  %v794 = vld [vmem:[%s1 + $0x180] sm:$0xf]
  %v795 = vld [vmem:[%s1 + $0x184] sm:$0xf]
  %v796 = vld [vmem:[%s1 + $0x188] sm:$0xf]
  %v797 = vld [vmem:[%s1 + $0x18c] sm:$0xf]
  %v798 = vld [vmem:[%s1 + $0x190] sm:$0xf]
  %v799 = vld [vmem:[%s1 + $0x194] sm:$0xf]
  %v800 = vld [vmem:[%s1 + $0x198] sm:$0xf]
  %v801 = vld [vmem:[%s1 + $0x19c] sm:$0xf]
  %v802 = vld [vmem:[%s1 + $0x1a0] sm:$0xf]
  %v803 = vld [vmem:[%s1 + $0x1a4] sm:$0xf]
  %v804 = vld [vmem:[%s1 + $0x1a8] sm:$0xf]
  %v805 = vld [vmem:[%s1 + $0x1ac] sm:$0xf]
  %v806 = vld [vmem:[%s1 + $0x1b0] sm:$0xf]
  %v807 = vld [vmem:[%s1 + $0x1b4] sm:$0xf]
  %v808 = vld [vmem:[%s1 + $0x1b8] sm:$0xf]
  %v809 = vld [vmem:[%s1 + $0x1bc] sm:$0xf]
  %v810 = vld [vmem:[%s1 + $0x1c0] sm:$0xf]
  %v811 = vld [vmem:[%s1 + $0x1c4] sm:$0xf]
  %v812 = vld [vmem:[%s1 + $0x1c8] sm:$0xf]
  %v813 = vld [vmem:[%s1 + $0x1cc] sm:$0xf]
  %v814 = vld [vmem:[%s1 + $0x1d0] sm:$0xf]
  %v815 = vld [vmem:[%s1 + $0x1d4] sm:$0xf]
  %v816 = vld [vmem:[%s1 + $0x1d8] sm:$0xf]
  %v817 = vld [vmem:[%s1 + $0x1dc] sm:$0xf]
  %v818 = vld [vmem:[%s1 + $0x1e0] sm:$0xf]
  %v819 = vld [vmem:[%s1 + $0x1e4] sm:$0xf]
  %v820 = vld [vmem:[%s1 + $0x1e8] sm:$0xf]
  %v821 = vld [vmem:[%s1 + $0x1ec] sm:$0xf]
  %v822 = vld [vmem:[%s1 + $0x1f0] sm:$0xf]
  %v823 = vld [vmem:[%s1 + $0x1f4] sm:$0xf]
  %v824 = vld [vmem:[%s1 + $0x1f8] sm:$0xf]
  %v825 = vld [vmem:[%s1 + $0x1fc] sm:$0xf]
  %v826 = vld [vmem:[%s1 + $0x200] sm:$0xf]
  %v827 = vld [vmem:[%s1 + $0x204] sm:$0xf]
  %v828 = vld [vmem:[%s1 + $0x208] sm:$0xf]
  %v829 = vld [vmem:[%s1 + $0x20c] sm:$0xf]
  %v830 = vld [vmem:[%s1 + $0x210] sm:$0xf]
  %v831 = vld [vmem:[%s1 + $0x214] sm:$0xf]
  %v832 = vld [vmem:[%s1 + $0x218] sm:$0xf]
  %v833 = vld [vmem:[%s1 + $0x21c] sm:$0xf]
  %v834 = vld [vmem:[%s1 + $0x220] sm:$0xf]
  %v835 = vld [vmem:[%s1 + $0x224] sm:$0xf]
  %v836 = vld [vmem:[%s1 + $0x228] sm:$0xf]
  %v837 = vld [vmem:[%s1 + $0x22c] sm:$0xf]
  %v838 = vld [vmem:[%s1 + $0x230] sm:$0xf]
  %v839 = vld [vmem:[%s1 + $0x234] sm:$0xf]
  %v840 = vld [vmem:[%s1 + $0x238] sm:$0xf]
  %v841 = vld [vmem:[%s1 + $0x23c] sm:$0xf]
  %v842 = vld [vmem:[%s2] sm:$0x1]
  %v844 = vlaneseq
  %v845 = vshrl.u32 %v844, 7
  %v846 = vsub.s32 0, %v845
  %v847 = vrot.slane %v842, %v846
  %v849 = vpack.c.b16 %v563, %v554
  %v850 = vpack.c.b16 %v564, %v555
  %v851 = vpack.c.b16 %v565, %v556
  %v852 = vpack.c.b16 %v566, %v557
  %v853 = vpack.c.b16 %v567, %v558
  %v854 = vpack.c.b16 %v568, %v559
  %v855 = vpack.c.b16 %v569, %v560
  %v856 = vpack.c.b16 %v570, %v561
  %v857 = vpack.c.b16 %v571, %v562
  %v858 = vpack.c.b16 %v581, %v572
  %v859 = vpack.c.b16 %v582, %v573
  %v860 = vpack.c.b16 %v583, %v574
  %v861 = vpack.c.b16 %v584, %v575
  %v862 = vpack.c.b16 %v585, %v576
  %v863 = vpack.c.b16 %v586, %v577
  %v864 = vpack.c.b16 %v587, %v578
  %v865 = vpack.c.b16 %v588, %v579
  %v866 = vpack.c.b16 %v589, %v580
  %v867 = vpack.c.b16 %v599, %v590
  %v868 = vpack.c.b16 %v600, %v591
  %v869 = vpack.c.b16 %v601, %v592
  %v870 = vpack.c.b16 %v602, %v593
  %v871 = vpack.c.b16 %v603, %v594
  %v872 = vpack.c.b16 %v604, %v595
  %v873 = vpack.c.b16 %v605, %v596
  %v874 = vpack.c.b16 %v606, %v597
  %v875 = vpack.c.b16 %v607, %v598
  %v876 = vpack.c.b16 %v617, %v608
  %v877 = vpack.c.b16 %v618, %v609
  %v878 = vpack.c.b16 %v619, %v610
  %v879 = vpack.c.b16 %v620, %v611
  %v880 = vpack.c.b16 %v621, %v612
  %v881 = vpack.c.b16 %v622, %v613
  %v882 = vpack.c.b16 %v623, %v614
  %v883 = vpack.c.b16 %v624, %v615
  %v884 = vpack.c.b16 %v625, %v616
  %v885 = vpack.c.b16 %v635, %v626
  %v886 = vpack.c.b16 %v636, %v627
  %v887 = vpack.c.b16 %v637, %v628
  %v888 = vpack.c.b16 %v638, %v629
  %v889 = vpack.c.b16 %v639, %v630
  %v890 = vpack.c.b16 %v640, %v631
  %v891 = vpack.c.b16 %v641, %v632
  %v892 = vpack.c.b16 %v642, %v633
  %v893 = vpack.c.b16 %v643, %v634
  %v894 = vpack.c.b16 %v653, %v644
  %v895 = vpack.c.b16 %v654, %v645
  %v896 = vpack.c.b16 %v655, %v646
  %v897 = vpack.c.b16 %v656, %v647
  %v898 = vpack.c.b16 %v657, %v648
  %v899 = vpack.c.b16 %v658, %v649
  %v900 = vpack.c.b16 %v659, %v650
  %v901 = vpack.c.b16 %v660, %v651
  %v902 = vpack.c.b16 %v661, %v652
  %v903 = vpack.c.b16 %v671, %v662
  %v904 = vpack.c.b16 %v672, %v663
  %v905 = vpack.c.b16 %v673, %v664
  %v906 = vpack.c.b16 %v674, %v665
  %v907 = vpack.c.b16 %v675, %v666
  %v908 = vpack.c.b16 %v676, %v667
  %v909 = vpack.c.b16 %v677, %v668
  %v910 = vpack.c.b16 %v678, %v669
  %v911 = vpack.c.b16 %v679, %v670
  %v912 = vpack.c.b16 %v689, %v680
  %v913 = vpack.c.b16 %v690, %v681
  %v914 = vpack.c.b16 %v691, %v682
  %v915 = vpack.c.b16 %v692, %v683
  %v916 = vpack.c.b16 %v693, %v684
  %v917 = vpack.c.b16 %v694, %v685
  %v918 = vpack.c.b16 %v695, %v686
  %v919 = vpack.c.b16 %v696, %v687
  %v920 = vpack.c.b16 %v697, %v688
  %v1137 = vunpack.c.l.b16 %v698
  %v1138 = vunpack.c.l.b16 %v699
  %v1139 = vunpack.c.l.b16 %v700
  %v1140 = vunpack.c.l.b16 %v701
  %v1141 = vunpack.c.l.b16 %v702
  %v1142 = vunpack.c.l.b16 %v703
  %v1143 = vunpack.c.l.b16 %v704
  %v1144 = vunpack.c.l.b16 %v705
  %v1145 = vunpack.c.l.b16 %v706
  %v1146 = vunpack.c.l.b16 %v707
  %v1147 = vunpack.c.l.b16 %v708
  %v1148 = vunpack.c.l.b16 %v709
  %v1149 = vunpack.c.l.b16 %v710
  %v1150 = vunpack.c.l.b16 %v711
  %v1151 = vunpack.c.l.b16 %v712
  %v1152 = vunpack.c.l.b16 %v713
  %v1153 = vunpack.c.l.b16 %v714
  %v1154 = vunpack.c.l.b16 %v715
  %v1155 = vunpack.c.l.b16 %v716
  %v1156 = vunpack.c.l.b16 %v717
  %v1157 = vunpack.c.l.b16 %v718
  %v1158 = vunpack.c.l.b16 %v719
  %v1159 = vunpack.c.l.b16 %v720
  %v1160 = vunpack.c.l.b16 %v721
  %v1161 = vunpack.c.l.b16 %v722
  %v1162 = vunpack.c.l.b16 %v723
  %v1163 = vunpack.c.l.b16 %v724
  %v1164 = vunpack.c.l.b16 %v725
  %v1165 = vunpack.c.l.b16 %v726
  %v1166 = vunpack.c.l.b16 %v727
  %v1167 = vunpack.c.l.b16 %v728
  %v1168 = vunpack.c.l.b16 %v729
  %v1169 = vunpack.c.l.b16 %v730
  %v1170 = vunpack.c.l.b16 %v731
  %v1171 = vunpack.c.l.b16 %v732
  %v1172 = vunpack.c.l.b16 %v733
  %v1173 = vunpack.c.l.b16 %v734
  %v1174 = vunpack.c.l.b16 %v735
  %v1175 = vunpack.c.l.b16 %v736
  %v1176 = vunpack.c.l.b16 %v737
  %v1177 = vunpack.c.l.b16 %v738
  %v1178 = vunpack.c.l.b16 %v739
  %v1179 = vunpack.c.l.b16 %v740
  %v1180 = vunpack.c.l.b16 %v741
  %v1181 = vunpack.c.l.b16 %v742
  %v1182 = vunpack.c.l.b16 %v743
  %v1183 = vunpack.c.l.b16 %v744
  %v1184 = vunpack.c.l.b16 %v745
  %v1185 = vunpack.c.l.b16 %v746
  %v1186 = vunpack.c.l.b16 %v747
  %v1187 = vunpack.c.l.b16 %v748
  %v1188 = vunpack.c.l.b16 %v749
  %v1189 = vunpack.c.l.b16 %v750
  %v1190 = vunpack.c.l.b16 %v751
  %v1191 = vunpack.c.l.b16 %v752
  %v1192 = vunpack.c.l.b16 %v753
  %v1193 = vunpack.c.l.b16 %v754
  %v1194 = vunpack.c.l.b16 %v755
  %v1195 = vunpack.c.l.b16 %v756
  %v1196 = vunpack.c.l.b16 %v757
  %v1197 = vunpack.c.l.b16 %v758
  %v1198 = vunpack.c.l.b16 %v759
  %v1199 = vunpack.c.l.b16 %v760
  %v1200 = vunpack.c.l.b16 %v761
  %v1201 = vunpack.c.l.b16 %v762
  %v1202 = vunpack.c.l.b16 %v763
  %v1203 = vunpack.c.l.b16 %v764
  %v1204 = vunpack.c.l.b16 %v765
  %v1205 = vunpack.c.l.b16 %v766
  %v1206 = vunpack.c.l.b16 %v767
  %v1207 = vunpack.c.l.b16 %v768
  %v1208 = vunpack.c.l.b16 %v769
  %v1209 = vunpack.c.l.b16 %v770
  %v1210 = vunpack.c.l.b16 %v771
  %v1211 = vunpack.c.l.b16 %v772
  %v1212 = vunpack.c.l.b16 %v773
  %v1213 = vunpack.c.l.b16 %v774
  %v1214 = vunpack.c.l.b16 %v775
  %v1215 = vunpack.c.l.b16 %v776
  %v1216 = vunpack.c.l.b16 %v777
  %v1217 = vunpack.c.l.b16 %v778
  %v1218 = vunpack.c.l.b16 %v779
  %v1219 = vunpack.c.l.b16 %v780
  %v1220 = vunpack.c.l.b16 %v781
  %v1221 = vunpack.c.l.b16 %v782
  %v1222 = vunpack.c.l.b16 %v783
  %v1223 = vunpack.c.l.b16 %v784
  %v1224 = vunpack.c.l.b16 %v785
  %v1225 = vunpack.c.l.b16 %v786
  %v1226 = vunpack.c.l.b16 %v787
  %v1227 = vunpack.c.l.b16 %v788
  %v1228 = vunpack.c.l.b16 %v789
  %v1229 = vunpack.c.l.b16 %v790
  %v1230 = vunpack.c.l.b16 %v791
  %v1231 = vunpack.c.l.b16 %v792
  %v1232 = vunpack.c.l.b16 %v793
  %v1233 = vunpack.c.l.b16 %v794
  %v1234 = vunpack.c.l.b16 %v795
  %v1235 = vunpack.c.l.b16 %v796
  %v1236 = vunpack.c.l.b16 %v797
  %v1237 = vunpack.c.l.b16 %v798
  %v1238 = vunpack.c.l.b16 %v799
  %v1239 = vunpack.c.l.b16 %v800
  %v1240 = vunpack.c.l.b16 %v801
  %v1241 = vunpack.c.l.b16 %v802
  %v1242 = vunpack.c.l.b16 %v803
  %v1243 = vunpack.c.l.b16 %v804
  %v1244 = vunpack.c.l.b16 %v805
  %v1245 = vunpack.c.l.b16 %v806
  %v1246 = vunpack.c.l.b16 %v807
  %v1247 = vunpack.c.l.b16 %v808
  %v1248 = vunpack.c.l.b16 %v809
  %v1249 = vunpack.c.l.b16 %v810
  %v1250 = vunpack.c.l.b16 %v811
  %v1251 = vunpack.c.l.b16 %v812
  %v1252 = vunpack.c.l.b16 %v813
  %v1253 = vunpack.c.l.b16 %v814
  %v1254 = vunpack.c.l.b16 %v815
  %v1255 = vunpack.c.l.b16 %v816
  %v1256 = vunpack.c.l.b16 %v817
  %v1257 = vunpack.c.l.b16 %v818
  %v1258 = vunpack.c.l.b16 %v819
  %v1259 = vunpack.c.l.b16 %v820
  %v1260 = vunpack.c.l.b16 %v821
  %v1261 = vunpack.c.l.b16 %v822
  %v1262 = vunpack.c.l.b16 %v823
  %v1263 = vunpack.c.l.b16 %v824
  %v1264 = vunpack.c.l.b16 %v825
  %v1265 = vunpack.c.l.b16 %v826
  %v1266 = vunpack.c.l.b16 %v827
  %v1267 = vunpack.c.l.b16 %v828
  %v1268 = vunpack.c.l.b16 %v829
  %v1269 = vunpack.c.l.b16 %v830
  %v1270 = vunpack.c.l.b16 %v831
  %v1271 = vunpack.c.l.b16 %v832
  %v1272 = vunpack.c.l.b16 %v833
  %v1273 = vunpack.c.l.b16 %v834
  %v1274 = vunpack.c.l.b16 %v835
  %v1275 = vunpack.c.l.b16 %v836
  %v1276 = vunpack.c.l.b16 %v837
  %v1277 = vunpack.c.l.b16 %v838
  %v1278 = vunpack.c.l.b16 %v839
  %v1279 = vunpack.c.l.b16 %v840
  %v1280 = vunpack.c.l.b16 %v841
  %v1281 = vpack.c.b16 %v1138, %v1137
  %v1282 = vpack.c.b16 %v1140, %v1139
  %v1283 = vpack.c.b16 %v1142, %v1141
  %v1284 = vpack.c.b16 %v1144, %v1143
  %v1285 = vpack.c.b16 %v1146, %v1145
  %v1286 = vpack.c.b16 %v1148, %v1147
  %v1287 = vpack.c.b16 %v1150, %v1149
  %v1288 = vpack.c.b16 %v1152, %v1151
  %v1289 = vpack.c.b16 %v1154, %v1153
  %v1290 = vpack.c.b16 %v1156, %v1155
  %v1291 = vpack.c.b16 %v1158, %v1157
  %v1292 = vpack.c.b16 %v1160, %v1159
  %v1293 = vpack.c.b16 %v1162, %v1161
  %v1294 = vpack.c.b16 %v1164, %v1163
  %v1295 = vpack.c.b16 %v1166, %v1165
  %v1296 = vpack.c.b16 %v1168, %v1167
  %v1297 = vpack.c.b16 %v1170, %v1169
  %v1298 = vpack.c.b16 %v1172, %v1171
  %v1299 = vpack.c.b16 %v1174, %v1173
  %v1300 = vpack.c.b16 %v1176, %v1175
  %v1301 = vpack.c.b16 %v1178, %v1177
  %v1302 = vpack.c.b16 %v1180, %v1179
  %v1303 = vpack.c.b16 %v1182, %v1181
  %v1304 = vpack.c.b16 %v1184, %v1183
  %v1305 = vpack.c.b16 %v1186, %v1185
  %v1306 = vpack.c.b16 %v1188, %v1187
  %v1307 = vpack.c.b16 %v1190, %v1189
  %v1308 = vpack.c.b16 %v1192, %v1191
  %v1309 = vpack.c.b16 %v1194, %v1193
  %v1310 = vpack.c.b16 %v1196, %v1195
  %v1311 = vpack.c.b16 %v1198, %v1197
  %v1312 = vpack.c.b16 %v1200, %v1199
  %v1313 = vpack.c.b16 %v1202, %v1201
  %v1314 = vpack.c.b16 %v1204, %v1203
  %v1315 = vpack.c.b16 %v1206, %v1205
  %v1316 = vpack.c.b16 %v1208, %v1207
  %v1317 = vpack.c.b16 %v1210, %v1209
  %v1318 = vpack.c.b16 %v1212, %v1211
  %v1319 = vpack.c.b16 %v1214, %v1213
  %v1320 = vpack.c.b16 %v1216, %v1215
  %v1321 = vpack.c.b16 %v1218, %v1217
  %v1322 = vpack.c.b16 %v1220, %v1219
  %v1323 = vpack.c.b16 %v1222, %v1221
  %v1324 = vpack.c.b16 %v1224, %v1223
  %v1325 = vpack.c.b16 %v1226, %v1225
  %v1326 = vpack.c.b16 %v1228, %v1227
  %v1327 = vpack.c.b16 %v1230, %v1229
  %v1328 = vpack.c.b16 %v1232, %v1231
  %v1329 = vpack.c.b16 %v1234, %v1233
  %v1330 = vpack.c.b16 %v1236, %v1235
  %v1331 = vpack.c.b16 %v1238, %v1237
  %v1332 = vpack.c.b16 %v1240, %v1239
  %v1333 = vpack.c.b16 %v1242, %v1241
  %v1334 = vpack.c.b16 %v1244, %v1243
  %v1335 = vpack.c.b16 %v1246, %v1245
  %v1336 = vpack.c.b16 %v1248, %v1247
  %v1337 = vpack.c.b16 %v1250, %v1249
  %v1338 = vpack.c.b16 %v1252, %v1251
  %v1339 = vpack.c.b16 %v1254, %v1253
  %v1340 = vpack.c.b16 %v1256, %v1255
  %v1341 = vpack.c.b16 %v1258, %v1257
  %v1342 = vpack.c.b16 %v1260, %v1259
  %v1343 = vpack.c.b16 %v1262, %v1261
  %v1344 = vpack.c.b16 %v1264, %v1263
  %v1345 = vpack.c.b16 %v1266, %v1265
  %v1346 = vpack.c.b16 %v1268, %v1267
  %v1347 = vpack.c.b16 %v1270, %v1269
  %v1348 = vpack.c.b16 %v1272, %v1271
  %v1349 = vpack.c.b16 %v1274, %v1273
  %v1350 = vpack.c.b16 %v1276, %v1275
  %v1351 = vpack.c.b16 %v1278, %v1277
  %v1352 = vpack.c.b16 %v1280, %v1279
  %1425 = vmatprep.subr.bf16.mxu0 0
  %1426 = vmatpush1.bf16.msra.mxu0 %v1288
  %1427 = vmatprep.subr.bf16.mxu0 0
  %1428 = vmatpush1.bf16.msra.mxu0 %v1287
  %1429 = vmatprep.subr.bf16.mxu0 0
  %1430 = vmatpush1.bf16.msra.mxu0 %v1286
  %1431 = vmatprep.subr.bf16.mxu0 0
  %1432 = vmatpush1.bf16.msra.mxu0 %v1285
  %1433 = vmatprep.subr.bf16.mxu0 0
  %1434 = vmatpush1.bf16.msra.mxu0 %v1284
  %1435 = vmatprep.subr.bf16.mxu0 0
  %1436 = vmatpush1.bf16.msra.mxu0 %v1283
  %1437 = vmatprep.subr.bf16.mxu0 0
  %1438 = vmatpush1.bf16.msra.mxu0 %v1282
  %1439 = vmatprep.subr.bf16.mxu0 0
  %1440 = vmatpush1.bf16.msra.mxu0 %v1281
  %1441 = vmatprep.subr.bf16.mxu0 0
  %1442 = vmatpush2.bf16.msra.mxu0 %v1296
  %1443 = vmatprep.subr.bf16.mxu0 0
  %1444 = vmatpush2.bf16.msra.mxu0 %v1295
  %1445 = vmatprep.subr.bf16.mxu0 0
  %1446 = vmatpush2.bf16.msra.mxu0 %v1294
  %1447 = vmatprep.subr.bf16.mxu0 0
  %1448 = vmatpush2.bf16.msra.mxu0 %v1293
  %1449 = vmatprep.subr.bf16.mxu0 0
  %1450 = vmatpush2.bf16.msra.mxu0 %v1292
  %1451 = vmatprep.subr.bf16.mxu0 0
  %1452 = vmatpush2.bf16.msra.mxu0 %v1291
  %1453 = vmatprep.subr.bf16.mxu0 0
  %1454 = vmatpush2.bf16.msra.mxu0 %v1290
  %1455 = vmatprep.subr.bf16.mxu0 0
  %1456 = vmatpush2.bf16.msra.mxu0 %v1289
  %1457 = vmatprep.mubr.bf16.mxu0 %v850
  %1458 = vmatmul.mubr.bf16.gmra.mxu0 %v849
  %v1459 = vpop.f32.mrf.mxu0
  %v1460 = vadd.f32 %v847, %v1459
  %v1461 = vpop.f32.mrf.mxu0
  %v1462 = vpop.f32.mrf.mxu0
  %v1463 = vadd.f32 %v847, %v1462
  %v1464 = vpop.f32.mrf.mxu0
  %1465 = vmatprep.mubr.bf16.mxu0 %v859
  %1466 = vmatmul.mubr.bf16.gmra.mxu0 %v858
  %v1467 = vpop.f32.mrf.mxu0
  %v1468 = vadd.f32 %v847, %v1467
  %v1469 = vpop.f32.mrf.mxu0
  %v1470 = vpop.f32.mrf.mxu0
  %v1471 = vadd.f32 %v847, %v1470
  %v1472 = vpop.f32.mrf.mxu0
  %1473 = vmatprep.mubr.bf16.mxu0 %v868
  %1474 = vmatmul.mubr.bf16.gmra.mxu0 %v867
  %v1475 = vpop.f32.mrf.mxu0
  %v1476 = vadd.f32 %v847, %v1475
  %v1477 = vpop.f32.mrf.mxu0
  %v1478 = vpop.f32.mrf.mxu0
  %v1479 = vadd.f32 %v847, %v1478
  %v1480 = vpop.f32.mrf.mxu0
  %1481 = vmatprep.mubr.bf16.mxu0 %v877
  %1482 = vmatmul.mubr.bf16.gmra.mxu0 %v876
  %v1483 = vpop.f32.mrf.mxu0
  %v1484 = vadd.f32 %v847, %v1483
  %v1485 = vpop.f32.mrf.mxu0
  %v1486 = vpop.f32.mrf.mxu0
  %v1487 = vadd.f32 %v847, %v1486
  %v1488 = vpop.f32.mrf.mxu0
  %1489 = vmatprep.mubr.bf16.mxu0 %v886
  %1490 = vmatmul.mubr.bf16.gmra.mxu0 %v885
  %v1491 = vpop.f32.mrf.mxu0
  %v1492 = vadd.f32 %v847, %v1491
  %v1493 = vpop.f32.mrf.mxu0
  %v1494 = vpop.f32.mrf.mxu0
  %v1495 = vadd.f32 %v847, %v1494
  %v1496 = vpop.f32.mrf.mxu0
  %1497 = vmatprep.mubr.bf16.mxu0 %v895
  %1498 = vmatmul.mubr.bf16.gmra.mxu0 %v894
  %v1499 = vpop.f32.mrf.mxu0
  %v1500 = vadd.f32 %v847, %v1499
  %v1501 = vpop.f32.mrf.mxu0
  %v1502 = vpop.f32.mrf.mxu0
  %v1503 = vadd.f32 %v847, %v1502
  %v1504 = vpop.f32.mrf.mxu0
  %1505 = vmatprep.mubr.bf16.mxu0 %v904
  %1506 = vmatmul.mubr.bf16.gmra.mxu0 %v903
  %v1507 = vpop.f32.mrf.mxu0
  %v1508 = vadd.f32 %v847, %v1507
  %v1509 = vpop.f32.mrf.mxu0
  %v1510 = vpop.f32.mrf.mxu0
  %v1511 = vadd.f32 %v847, %v1510
  %v1512 = vpop.f32.mrf.mxu0
  %1513 = vmatprep.mubr.bf16.mxu0 %v913
  %1514 = vmatmul.mubr.bf16.gmra.mxu0 %v912
  %v1515 = vpop.f32.mrf.mxu0
  %v1516 = vadd.f32 %v847, %v1515
  %v1517 = vpop.f32.mrf.mxu0
  %v1518 = vpop.f32.mrf.mxu0
  %v1519 = vadd.f32 %v847, %v1518
  %v1520 = vpop.f32.mrf.mxu0
  %1521 = vdwg.mxu0
  %1522 = vmatprep.subr.bf16.mxu0 0
  %1523 = vmatpush1.bf16.msra.mxu0 %v1304
  %1524 = vmatprep.subr.bf16.mxu0 0
  %1525 = vmatpush1.bf16.msra.mxu0 %v1303
  %1526 = vmatprep.subr.bf16.mxu0 0
  %1527 = vmatpush1.bf16.msra.mxu0 %v1302
  %1528 = vmatprep.subr.bf16.mxu0 0
  %1529 = vmatpush1.bf16.msra.mxu0 %v1301
  %1530 = vmatprep.subr.bf16.mxu0 0
  %1531 = vmatpush1.bf16.msra.mxu0 %v1300
  %1532 = vmatprep.subr.bf16.mxu0 0
  %1533 = vmatpush1.bf16.msra.mxu0 %v1299
  %1534 = vmatprep.subr.bf16.mxu0 0
  %1535 = vmatpush1.bf16.msra.mxu0 %v1298
  %1536 = vmatprep.subr.bf16.mxu0 0
  %1537 = vmatpush1.bf16.msra.mxu0 %v1297
  %1538 = vmatprep.subr.bf16.mxu0 0
  %1539 = vmatpush2.bf16.msra.mxu0 %v1312
  %1540 = vmatprep.subr.bf16.mxu0 0
  %1541 = vmatpush2.bf16.msra.mxu0 %v1311
  %1542 = vmatprep.subr.bf16.mxu0 0
  %1543 = vmatpush2.bf16.msra.mxu0 %v1310
  %1544 = vmatprep.subr.bf16.mxu0 0
  %1545 = vmatpush2.bf16.msra.mxu0 %v1309
  %1546 = vmatprep.subr.bf16.mxu0 0
  %1547 = vmatpush2.bf16.msra.mxu0 %v1308
  %1548 = vmatprep.subr.bf16.mxu0 0
  %1549 = vmatpush2.bf16.msra.mxu0 %v1307
  %1550 = vmatprep.subr.bf16.mxu0 0
  %1551 = vmatpush2.bf16.msra.mxu0 %v1306
  %1552 = vmatprep.subr.bf16.mxu0 0
  %1553 = vmatpush2.bf16.msra.mxu0 %v1305
  %1554 = vmatprep.mubr.bf16.mxu0 %v852
  %1555 = vmatmul.mubr.bf16.gmra.mxu0 %v851
  %v1556 = vpop.f32.mrf.mxu0
  %v1557 = vadd.f32 %v1460, %v1556
  %v1558 = vpop.f32.mrf.mxu0
  %v1559 = vpop.f32.mrf.mxu0
  %v1560 = vadd.f32 %v1463, %v1559
  %v1561 = vpop.f32.mrf.mxu0
  %1562 = vmatprep.mubr.bf16.mxu0 %v861
  %1563 = vmatmul.mubr.bf16.gmra.mxu0 %v860
  %v1564 = vpop.f32.mrf.mxu0
  %v1565 = vadd.f32 %v1468, %v1564
  %v1566 = vpop.f32.mrf.mxu0
  %v1567 = vpop.f32.mrf.mxu0
  %v1568 = vadd.f32 %v1471, %v1567
  %v1569 = vpop.f32.mrf.mxu0
  %1570 = vmatprep.mubr.bf16.mxu0 %v870
  %1571 = vmatmul.mubr.bf16.gmra.mxu0 %v869
  %v1572 = vpop.f32.mrf.mxu0
  %v1573 = vadd.f32 %v1476, %v1572
  %v1574 = vpop.f32.mrf.mxu0
  %v1575 = vpop.f32.mrf.mxu0
  %v1576 = vadd.f32 %v1479, %v1575
  %v1577 = vpop.f32.mrf.mxu0
  %1578 = vmatprep.mubr.bf16.mxu0 %v879
  %1579 = vmatmul.mubr.bf16.gmra.mxu0 %v878
  %v1580 = vpop.f32.mrf.mxu0
  %v1581 = vadd.f32 %v1484, %v1580
  %v1582 = vpop.f32.mrf.mxu0
  %v1583 = vpop.f32.mrf.mxu0
  %v1584 = vadd.f32 %v1487, %v1583
  %v1585 = vpop.f32.mrf.mxu0
  %1586 = vmatprep.mubr.bf16.mxu0 %v888
  %1587 = vmatmul.mubr.bf16.gmra.mxu0 %v887
  %v1588 = vpop.f32.mrf.mxu0
  %v1589 = vadd.f32 %v1492, %v1588
  %v1590 = vpop.f32.mrf.mxu0
  %v1591 = vpop.f32.mrf.mxu0
  %v1592 = vadd.f32 %v1495, %v1591
  %v1593 = vpop.f32.mrf.mxu0
  %1594 = vmatprep.mubr.bf16.mxu0 %v897
  %1595 = vmatmul.mubr.bf16.gmra.mxu0 %v896
  %v1596 = vpop.f32.mrf.mxu0
  %v1597 = vadd.f32 %v1500, %v1596
  %v1598 = vpop.f32.mrf.mxu0
  %v1599 = vpop.f32.mrf.mxu0
  %v1600 = vadd.f32 %v1503, %v1599
  %v1601 = vpop.f32.mrf.mxu0
  %1602 = vmatprep.mubr.bf16.mxu0 %v906
  %1603 = vmatmul.mubr.bf16.gmra.mxu0 %v905
  %v1604 = vpop.f32.mrf.mxu0
  %v1605 = vadd.f32 %v1508, %v1604
  %v1606 = vpop.f32.mrf.mxu0
  %v1607 = vpop.f32.mrf.mxu0
  %v1608 = vadd.f32 %v1511, %v1607
  %v1609 = vpop.f32.mrf.mxu0
  %1610 = vmatprep.mubr.bf16.mxu0 %v915
  %1611 = vmatmul.mubr.bf16.gmra.mxu0 %v914
  %v1612 = vpop.f32.mrf.mxu0
  %v1613 = vadd.f32 %v1516, %v1612
  %v1614 = vpop.f32.mrf.mxu0
  %v1615 = vpop.f32.mrf.mxu0
  %v1616 = vadd.f32 %v1519, %v1615
  %v1617 = vpop.f32.mrf.mxu0
  %1618 = vdwg.mxu0
  %1619 = vmatprep.subr.bf16.mxu0 0
  %1620 = vmatpush1.bf16.msra.mxu0 %v1320
  %1621 = vmatprep.subr.bf16.mxu0 0
  %1622 = vmatpush1.bf16.msra.mxu0 %v1319
  %1623 = vmatprep.subr.bf16.mxu0 0
  %1624 = vmatpush1.bf16.msra.mxu0 %v1318
  %1625 = vmatprep.subr.bf16.mxu0 0
  %1626 = vmatpush1.bf16.msra.mxu0 %v1317
  %1627 = vmatprep.subr.bf16.mxu0 0
  %1628 = vmatpush1.bf16.msra.mxu0 %v1316
  %1629 = vmatprep.subr.bf16.mxu0 0
  %1630 = vmatpush1.bf16.msra.mxu0 %v1315
  %1631 = vmatprep.subr.bf16.mxu0 0
  %1632 = vmatpush1.bf16.msra.mxu0 %v1314
  %1633 = vmatprep.subr.bf16.mxu0 0
  %1634 = vmatpush1.bf16.msra.mxu0 %v1313
  %1635 = vmatprep.subr.bf16.mxu0 0
  %1636 = vmatpush2.bf16.msra.mxu0 %v1328
  %1637 = vmatprep.subr.bf16.mxu0 0
  %1638 = vmatpush2.bf16.msra.mxu0 %v1327
  %1639 = vmatprep.subr.bf16.mxu0 0
  %1640 = vmatpush2.bf16.msra.mxu0 %v1326
  %1641 = vmatprep.subr.bf16.mxu0 0
  %1642 = vmatpush2.bf16.msra.mxu0 %v1325
  %1643 = vmatprep.subr.bf16.mxu0 0
  %1644 = vmatpush2.bf16.msra.mxu0 %v1324
  %1645 = vmatprep.subr.bf16.mxu0 0
  %1646 = vmatpush2.bf16.msra.mxu0 %v1323
  %1647 = vmatprep.subr.bf16.mxu0 0
  %1648 = vmatpush2.bf16.msra.mxu0 %v1322
  %1649 = vmatprep.subr.bf16.mxu0 0
  %1650 = vmatpush2.bf16.msra.mxu0 %v1321
  %1651 = vmatprep.mubr.bf16.mxu0 %v854
  %1652 = vmatmul.mubr.bf16.gmra.mxu0 %v853
  %v1653 = vpop.f32.mrf.mxu0
  %v1654 = vadd.f32 %v1557, %v1653
  %v1655 = vpop.f32.mrf.mxu0
  %v1656 = vpop.f32.mrf.mxu0
  %v1657 = vadd.f32 %v1560, %v1656
  %v1658 = vpop.f32.mrf.mxu0
  %1659 = vmatprep.mubr.bf16.mxu0 %v863
  %1660 = vmatmul.mubr.bf16.gmra.mxu0 %v862
  %v1661 = vpop.f32.mrf.mxu0
  %v1662 = vadd.f32 %v1565, %v1661
  %v1663 = vpop.f32.mrf.mxu0
  %v1664 = vpop.f32.mrf.mxu0
  %v1665 = vadd.f32 %v1568, %v1664
  %v1666 = vpop.f32.mrf.mxu0
  %1667 = vmatprep.mubr.bf16.mxu0 %v872
  %1668 = vmatmul.mubr.bf16.gmra.mxu0 %v871
  %v1669 = vpop.f32.mrf.mxu0
  %v1670 = vadd.f32 %v1573, %v1669
  %v1671 = vpop.f32.mrf.mxu0
  %v1672 = vpop.f32.mrf.mxu0
  %v1673 = vadd.f32 %v1576, %v1672
  %v1674 = vpop.f32.mrf.mxu0
  %1675 = vmatprep.mubr.bf16.mxu0 %v881
  %1676 = vmatmul.mubr.bf16.gmra.mxu0 %v880
  %v1677 = vpop.f32.mrf.mxu0
  %v1678 = vadd.f32 %v1581, %v1677
  %v1679 = vpop.f32.mrf.mxu0
  %v1680 = vpop.f32.mrf.mxu0
  %v1681 = vadd.f32 %v1584, %v1680
  %v1682 = vpop.f32.mrf.mxu0
  %1683 = vmatprep.mubr.bf16.mxu0 %v890
  %1684 = vmatmul.mubr.bf16.gmra.mxu0 %v889
  %v1685 = vpop.f32.mrf.mxu0
  %v1686 = vadd.f32 %v1589, %v1685
  %v1687 = vpop.f32.mrf.mxu0
  %v1688 = vpop.f32.mrf.mxu0
  %v1689 = vadd.f32 %v1592, %v1688
  %v1690 = vpop.f32.mrf.mxu0
  %1691 = vmatprep.mubr.bf16.mxu0 %v899
  %1692 = vmatmul.mubr.bf16.gmra.mxu0 %v898
  %v1693 = vpop.f32.mrf.mxu0
  %v1694 = vadd.f32 %v1597, %v1693
  %v1695 = vpop.f32.mrf.mxu0
  %v1696 = vpop.f32.mrf.mxu0
  %v1697 = vadd.f32 %v1600, %v1696
  %v1698 = vpop.f32.mrf.mxu0
  %1699 = vmatprep.mubr.bf16.mxu0 %v908
  %1700 = vmatmul.mubr.bf16.gmra.mxu0 %v907
  %v1701 = vpop.f32.mrf.mxu0
  %v1702 = vadd.f32 %v1605, %v1701
  %v1703 = vpop.f32.mrf.mxu0
  %v1704 = vpop.f32.mrf.mxu0
  %v1705 = vadd.f32 %v1608, %v1704
  %v1706 = vpop.f32.mrf.mxu0
  %1707 = vmatprep.mubr.bf16.mxu0 %v917
  %1708 = vmatmul.mubr.bf16.gmra.mxu0 %v916
  %v1709 = vpop.f32.mrf.mxu0
  %v1710 = vadd.f32 %v1613, %v1709
  %v1711 = vpop.f32.mrf.mxu0
  %v1712 = vpop.f32.mrf.mxu0
  %v1713 = vadd.f32 %v1616, %v1712
  %v1714 = vpop.f32.mrf.mxu0
  %1715 = vdwg.mxu0
  %1716 = vmatprep.subr.bf16.mxu0 0
  %1717 = vmatpush1.bf16.msra.mxu0 %v1336
  %1718 = vmatprep.subr.bf16.mxu0 0
  %1719 = vmatpush1.bf16.msra.mxu0 %v1335
  %1720 = vmatprep.subr.bf16.mxu0 0
  %1721 = vmatpush1.bf16.msra.mxu0 %v1334
  %1722 = vmatprep.subr.bf16.mxu0 0
  %1723 = vmatpush1.bf16.msra.mxu0 %v1333
  %1724 = vmatprep.subr.bf16.mxu0 0
  %1725 = vmatpush1.bf16.msra.mxu0 %v1332
  %1726 = vmatprep.subr.bf16.mxu0 0
  %1727 = vmatpush1.bf16.msra.mxu0 %v1331
  %1728 = vmatprep.subr.bf16.mxu0 0
  %1729 = vmatpush1.bf16.msra.mxu0 %v1330
  %1730 = vmatprep.subr.bf16.mxu0 0
  %1731 = vmatpush1.bf16.msra.mxu0 %v1329
  %1732 = vmatprep.subr.bf16.mxu0 0
  %1733 = vmatpush2.bf16.msra.mxu0 %v1344
  %1734 = vmatprep.subr.bf16.mxu0 0
  %1735 = vmatpush2.bf16.msra.mxu0 %v1343
  %1736 = vmatprep.subr.bf16.mxu0 0
  %1737 = vmatpush2.bf16.msra.mxu0 %v1342
  %1738 = vmatprep.subr.bf16.mxu0 0
  %1739 = vmatpush2.bf16.msra.mxu0 %v1341
  %1740 = vmatprep.subr.bf16.mxu0 0
  %1741 = vmatpush2.bf16.msra.mxu0 %v1340
  %1742 = vmatprep.subr.bf16.mxu0 0
  %1743 = vmatpush2.bf16.msra.mxu0 %v1339
  %1744 = vmatprep.subr.bf16.mxu0 0
  %1745 = vmatpush2.bf16.msra.mxu0 %v1338
  %1746 = vmatprep.subr.bf16.mxu0 0
  %1747 = vmatpush2.bf16.msra.mxu0 %v1337
  %1748 = vmatprep.mubr.bf16.mxu0 %v856
  %1749 = vmatmul.mubr.bf16.gmra.mxu0 %v855
  %v1750 = vpop.f32.mrf.mxu0
  %v1751 = vadd.f32 %v1654, %v1750
  %v1752 = vpop.f32.mrf.mxu0
  %v1753 = vpop.f32.mrf.mxu0
  %v1754 = vadd.f32 %v1657, %v1753
  %v1755 = vpop.f32.mrf.mxu0
  %1756 = vmatprep.mubr.bf16.mxu0 %v865
  %1757 = vmatmul.mubr.bf16.gmra.mxu0 %v864
  %v1758 = vpop.f32.mrf.mxu0
  %v1759 = vadd.f32 %v1662, %v1758
  %v1760 = vpop.f32.mrf.mxu0
  %v1761 = vpop.f32.mrf.mxu0
  %v1762 = vadd.f32 %v1665, %v1761
  %v1763 = vpop.f32.mrf.mxu0
  %1764 = vmatprep.mubr.bf16.mxu0 %v874
  %1765 = vmatmul.mubr.bf16.gmra.mxu0 %v873
  %v1766 = vpop.f32.mrf.mxu0
  %v1767 = vadd.f32 %v1670, %v1766
  %v1768 = vpop.f32.mrf.mxu0
  %v1769 = vpop.f32.mrf.mxu0
  %v1770 = vadd.f32 %v1673, %v1769
  %v1771 = vpop.f32.mrf.mxu0
  %1772 = vmatprep.mubr.bf16.mxu0 %v883
  %1773 = vmatmul.mubr.bf16.gmra.mxu0 %v882
  %v1774 = vpop.f32.mrf.mxu0
  %v1775 = vadd.f32 %v1678, %v1774
  %v1776 = vpop.f32.mrf.mxu0
  %v1777 = vpop.f32.mrf.mxu0
  %v1778 = vadd.f32 %v1681, %v1777
  %v1779 = vpop.f32.mrf.mxu0
  %1780 = vmatprep.mubr.bf16.mxu0 %v892
  %1781 = vmatmul.mubr.bf16.gmra.mxu0 %v891
  %v1782 = vpop.f32.mrf.mxu0
  %v1783 = vadd.f32 %v1686, %v1782
  %v1784 = vpop.f32.mrf.mxu0
  %v1785 = vpop.f32.mrf.mxu0
  %v1786 = vadd.f32 %v1689, %v1785
  %v1787 = vpop.f32.mrf.mxu0
  %1788 = vmatprep.mubr.bf16.mxu0 %v901
  %1789 = vmatmul.mubr.bf16.gmra.mxu0 %v900
  %v1790 = vpop.f32.mrf.mxu0
  %v1791 = vadd.f32 %v1694, %v1790
  %v1792 = vpop.f32.mrf.mxu0
  %v1793 = vpop.f32.mrf.mxu0
  %v1794 = vadd.f32 %v1697, %v1793
  %v1795 = vpop.f32.mrf.mxu0
  %1796 = vmatprep.mubr.bf16.mxu0 %v910
  %1797 = vmatmul.mubr.bf16.gmra.mxu0 %v909
  %v1798 = vpop.f32.mrf.mxu0
  %v1799 = vadd.f32 %v1702, %v1798
  %v1800 = vpop.f32.mrf.mxu0
  %v1801 = vpop.f32.mrf.mxu0
  %v1802 = vadd.f32 %v1705, %v1801
  %v1803 = vpop.f32.mrf.mxu0
  %1804 = vmatprep.mubr.bf16.mxu0 %v919
  %1805 = vmatmul.mubr.bf16.gmra.mxu0 %v918
  %v1806 = vpop.f32.mrf.mxu0
  %v1807 = vadd.f32 %v1710, %v1806
  %v1808 = vpop.f32.mrf.mxu0
  %v1809 = vpop.f32.mrf.mxu0
  %v1810 = vadd.f32 %v1713, %v1809
  %v1811 = vpop.f32.mrf.mxu0
  %1812 = vdwg.mxu0
  %1813 = vmatprep.subr.bf16.mxu0 0
  %1814 = vmatpush1.bf16.msra.mxu0 %v1352
  %1815 = vmatprep.subr.bf16.mxu0 0
  %1816 = vmatpush1.bf16.msra.mxu0 %v1351
  %1817 = vmatprep.subr.bf16.mxu0 0
  %1818 = vmatpush1.bf16.msra.mxu0 %v1350
  %1819 = vmatprep.subr.bf16.mxu0 0
  %1820 = vmatpush1.bf16.msra.mxu0 %v1349
  %1821 = vmatprep.subr.bf16.mxu0 0
  %1822 = vmatpush1.bf16.msra.mxu0 %v1348
  %1823 = vmatprep.subr.bf16.mxu0 0
  %1824 = vmatpush1.bf16.msra.mxu0 %v1347
  %1825 = vmatprep.subr.bf16.mxu0 0
  %1826 = vmatpush1.bf16.msra.mxu0 %v1346
  %1827 = vmatprep.subr.bf16.mxu0 0
  %1828 = vmatpush1.bf16.msra.mxu0 %v1345
  %1829 = vmatprep.subr.bf16.mxu0 0
  %1830 = vmatpush2.bf16.msra.mxu0 0
  %1831 = vmatprep.subr.bf16.mxu0 0
  %1832 = vmatpush2.bf16.msra.mxu0 0
  %1833 = vmatprep.subr.bf16.mxu0 0
  %1834 = vmatpush2.bf16.msra.mxu0 0
  %1835 = vmatprep.subr.bf16.mxu0 0
  %1836 = vmatpush2.bf16.msra.mxu0 0
  %1837 = vmatprep.subr.bf16.mxu0 0
  %1838 = vmatpush2.bf16.msra.mxu0 0
  %1839 = vmatprep.subr.bf16.mxu0 0
  %1840 = vmatpush2.bf16.msra.mxu0 0
  %1841 = vmatprep.subr.bf16.mxu0 0
  %1842 = vmatpush2.bf16.msra.mxu0 0
  %1843 = vmatprep.subr.bf16.mxu0 0
  %1844 = vmatpush2.bf16.msra.mxu0 0
  %1845 = vmatprep.mubr.bf16.mxu0 0
  %1846 = vmatmul.mubr.bf16.gmra.mxu0 %v857
  %v1847 = vpop.f32.mrf.mxu0
  %v1848 = vadd.f32 %v1751, %v1847
  %v1849 = vpop.f32.mrf.mxu0
  %v1850 = vpop.f32.mrf.mxu0
  %v1851 = vadd.f32 %v1754, %v1850
  %v1852 = vpop.f32.mrf.mxu0
  %1853 = vmatprep.mubr.bf16.mxu0 0
  %1854 = vmatmul.mubr.bf16.gmra.mxu0 %v866
  %v1855 = vpop.f32.mrf.mxu0
  %v1856 = vadd.f32 %v1759, %v1855
  %v1857 = vpop.f32.mrf.mxu0
  %v1858 = vpop.f32.mrf.mxu0
  %v1859 = vadd.f32 %v1762, %v1858
  %v1860 = vpop.f32.mrf.mxu0
  %1861 = vmatprep.mubr.bf16.mxu0 0
  %1862 = vmatmul.mubr.bf16.gmra.mxu0 %v875
  %v1863 = vpop.f32.mrf.mxu0
  %v1864 = vadd.f32 %v1767, %v1863
  %v1865 = vpop.f32.mrf.mxu0
  %v1866 = vpop.f32.mrf.mxu0
  %v1867 = vadd.f32 %v1770, %v1866
  %v1868 = vpop.f32.mrf.mxu0
  %1869 = vmatprep.mubr.bf16.mxu0 0
  %1870 = vmatmul.mubr.bf16.gmra.mxu0 %v884
  %v1871 = vpop.f32.mrf.mxu0
  %v1872 = vadd.f32 %v1775, %v1871
  %v1873 = vpop.f32.mrf.mxu0
  %v1874 = vpop.f32.mrf.mxu0
  %v1875 = vadd.f32 %v1778, %v1874
  %v1876 = vpop.f32.mrf.mxu0
  %1877 = vmatprep.mubr.bf16.mxu0 0
  %1878 = vmatmul.mubr.bf16.gmra.mxu0 %v893
  %v1879 = vpop.f32.mrf.mxu0
  %v1880 = vadd.f32 %v1783, %v1879
  %v1881 = vpop.f32.mrf.mxu0
  %v1882 = vpop.f32.mrf.mxu0
  %v1883 = vadd.f32 %v1786, %v1882
  %v1884 = vpop.f32.mrf.mxu0
  %1885 = vmatprep.mubr.bf16.mxu0 0
  %1886 = vmatmul.mubr.bf16.gmra.mxu0 %v902
  %v1887 = vpop.f32.mrf.mxu0
  %v1888 = vadd.f32 %v1791, %v1887
  %v1889 = vpop.f32.mrf.mxu0
  %v1890 = vpop.f32.mrf.mxu0
  %v1891 = vadd.f32 %v1794, %v1890
  %v1892 = vpop.f32.mrf.mxu0
  %1893 = vmatprep.mubr.bf16.mxu0 0
  %1894 = vmatmul.mubr.bf16.gmra.mxu0 %v911
  %v1895 = vpop.f32.mrf.mxu0
  %v1896 = vadd.f32 %v1799, %v1895
  %v1897 = vpop.f32.mrf.mxu0
  %v1898 = vpop.f32.mrf.mxu0
  %v1899 = vadd.f32 %v1802, %v1898
  %v1900 = vpop.f32.mrf.mxu0
  %1901 = vmatprep.mubr.bf16.mxu0 0
  %1902 = vmatmul.mubr.bf16.gmra.mxu0 %v920
  %v1903 = vpop.f32.mrf.mxu0
  %v1904 = vadd.f32 %v1807, %v1903
  %v1905 = vpop.f32.mrf.mxu0
  %v1906 = vpop.f32.mrf.mxu0
  %v1907 = vadd.f32 %v1810, %v1906
  %v1908 = vpop.f32.mrf.mxu0
  %1909 = vdwg.mxu0
  %vm1910 = vcmask 523264
  %v1911 = vsel %vm1910, %v1848, 0.0
  %v1912 = vsel %vm1910, %v1851, 0.0
  %v1913 = vadd.f32 %v1911, %v1912
  %v1914 = vsel %vm1910, %v1856, 0.0
  %v1915 = vadd.f32 %v1913, %v1914
  %v1916 = vsel %vm1910, %v1859, 0.0
  %v1917 = vadd.f32 %v1915, %v1916
  %v1918 = vsel %vm1910, %v1864, 0.0
  %v1919 = vadd.f32 %v1917, %v1918
  %v1920 = vsel %vm1910, %v1867, 0.0
  %v1921 = vadd.f32 %v1919, %v1920
  %v1922 = vsel %vm1910, %v1872, 0.0
  %v1923 = vadd.f32 %v1921, %v1922
  %v1924 = vsel %vm1910, %v1875, 0.0
  %v1925 = vadd.f32 %v1923, %v1924
  %v1926 = vsel %vm1910, %v1880, 0.0
  %v1927 = vadd.f32 %v1925, %v1926
  %v1928 = vsel %vm1910, %v1883, 0.0
  %v1929 = vadd.f32 %v1927, %v1928
  %v1930 = vsel %vm1910, %v1888, 0.0
  %v1931 = vadd.f32 %v1929, %v1930
  %v1932 = vsel %vm1910, %v1891, 0.0
  %v1933 = vadd.f32 %v1931, %v1932
  %v1934 = vsel %vm1910, %v1896, 0.0
  %v1935 = vadd.f32 %v1933, %v1934
  %v1936 = vsel %vm1910, %v1899, 0.0
  %v1937 = vadd.f32 %v1935, %v1936
  %v1938 = vsel %vm1910, %v1904, 0.0
  %v1939 = vadd.f32 %v1937, %v1938
  %v1940 = vsel %vm1910, %v1907, 0.0
  %v1941 = vadd.f32 %v1939, %v1940
  %v1942 = vrot.slane %v1941, 4
  %v1943 = vadd.f32 %v1941, %v1942
  %v1944 = vrot.slane %v1943, 2
  %v1945 = vadd.f32 %v1943, %v1944
  %v1946 = vrot.slane %v1945, 1
  %v1947 = vadd.f32 %v1945, %v1946
  %v1948 = vrcp.pop 128.0
  %v1949 = vmul.f32 %v1947, %v1948
  %v1950 = vmul.f32 %v1848, %v1848
  %v1951 = vmul.f32 %v1851, %v1851
  %v1952 = vmul.f32 %v1856, %v1856
  %v1953 = vmul.f32 %v1859, %v1859
  %v1954 = vmul.f32 %v1864, %v1864
  %v1955 = vmul.f32 %v1867, %v1867
  %v1956 = vmul.f32 %v1872, %v1872
  %v1957 = vmul.f32 %v1875, %v1875
  %v1958 = vmul.f32 %v1880, %v1880
  %v1959 = vmul.f32 %v1883, %v1883
  %v1960 = vmul.f32 %v1888, %v1888
  %v1961 = vmul.f32 %v1891, %v1891
  %v1962 = vmul.f32 %v1896, %v1896
  %v1963 = vmul.f32 %v1899, %v1899
  %v1964 = vmul.f32 %v1904, %v1904
  %v1965 = vmul.f32 %v1907, %v1907
  %v1966 = vsel %vm1910, %v1950, 0.0
  %v1967 = vsel %vm1910, %v1951, 0.0
  %v1968 = vadd.f32 %v1966, %v1967
  %v1969 = vsel %vm1910, %v1952, 0.0
  %v1970 = vadd.f32 %v1968, %v1969
  %v1971 = vsel %vm1910, %v1953, 0.0
  %v1972 = vadd.f32 %v1970, %v1971
  %v1973 = vsel %vm1910, %v1954, 0.0
  %v1974 = vadd.f32 %v1972, %v1973
  %v1975 = vsel %vm1910, %v1955, 0.0
  %v1976 = vadd.f32 %v1974, %v1975
  %v1977 = vsel %vm1910, %v1956, 0.0
  %v1978 = vadd.f32 %v1976, %v1977
  %v1979 = vsel %vm1910, %v1957, 0.0
  %v1980 = vadd.f32 %v1978, %v1979
  %v1981 = vsel %vm1910, %v1958, 0.0
  %v1982 = vadd.f32 %v1980, %v1981
  %v1983 = vsel %vm1910, %v1959, 0.0
  %v1984 = vadd.f32 %v1982, %v1983
  %v1985 = vsel %vm1910, %v1960, 0.0
  %v1986 = vadd.f32 %v1984, %v1985
  %v1987 = vsel %vm1910, %v1961, 0.0
  %v1988 = vadd.f32 %v1986, %v1987
  %v1989 = vsel %vm1910, %v1962, 0.0
  %v1990 = vadd.f32 %v1988, %v1989
  %v1991 = vsel %vm1910, %v1963, 0.0
  %v1992 = vadd.f32 %v1990, %v1991
  %v1993 = vsel %vm1910, %v1964, 0.0
  %v1994 = vadd.f32 %v1992, %v1993
  %v1995 = vsel %vm1910, %v1965, 0.0
  %v1996 = vadd.f32 %v1994, %v1995
  %v1997 = vrot.slane %v1996, 4
  %v1998 = vadd.f32 %v1996, %v1997
  %v1999 = vrot.slane %v1998, 2
  %v2000 = vadd.f32 %v1998, %v1999
  %v2001 = vrot.slane %v2000, 1
  %v2002 = vadd.f32 %v2000, %v2001
  %v2003 = vmul.f32 %v2002, %v1948
  %v2004 = vmul.f32 %v1949, %v1949
  %v2005 = vsub.f32 %v2003, %v2004
  %v2006 = vld [vmem:[%s3] sm:$0x1]
  %v2007 = vadd.f32 %v2005, 1e-05
  %v2008 = vrsqrt.pop %v2007
  %v2009 = vmul.f32 %v2006, %v2008
  %v2010 = vld [vmem:[%s4] sm:$0x1]
  %v2011 = vmul.f32 %v1949, %v2009
  %v2012 = vsub.f32 %v2010, %v2011
  %v2014 = vlaneseq
  %v2015 = vshrl.u32 %v2014, 7
  %v2016 = vsub.s32 0, %v2015
  %v2017 = vrot.slane %v2009, %v2016
  %v2019 = vmul.f32 %v1848, %v2017
  %v2020 = vmul.f32 %v1851, %v2017
  %v2021 = vmul.f32 %v1856, %v2017
  %v2022 = vmul.f32 %v1859, %v2017
  %v2023 = vmul.f32 %v1864, %v2017
  %v2024 = vmul.f32 %v1867, %v2017
  %v2025 = vmul.f32 %v1872, %v2017
  %v2026 = vmul.f32 %v1875, %v2017
  %v2027 = vmul.f32 %v1880, %v2017
  %v2028 = vmul.f32 %v1883, %v2017
  %v2029 = vmul.f32 %v1888, %v2017
  %v2030 = vmul.f32 %v1891, %v2017
  %v2031 = vmul.f32 %v1896, %v2017
  %v2032 = vmul.f32 %v1899, %v2017
  %v2033 = vmul.f32 %v1904, %v2017
  %v2034 = vmul.f32 %v1907, %v2017
  %v2036 = vlaneseq
  %v2037 = vshrl.u32 %v2036, 7
  %v2038 = vsub.s32 0, %v2037
  %v2039 = vrot.slane %v2012, %v2038
  %v2041 = vadd.f32 %v2019, %v2039
  %v2042 = vadd.f32 %v2020, %v2039
  %v2043 = vadd.f32 %v2021, %v2039
  %v2044 = vadd.f32 %v2022, %v2039
  %v2045 = vadd.f32 %v2023, %v2039
  %v2046 = vadd.f32 %v2024, %v2039
  %v2047 = vadd.f32 %v2025, %v2039
  %v2048 = vadd.f32 %v2026, %v2039
  %v2049 = vadd.f32 %v2027, %v2039
  %v2050 = vadd.f32 %v2028, %v2039
  %v2051 = vadd.f32 %v2029, %v2039
  %v2052 = vadd.f32 %v2030, %v2039
  %v2053 = vadd.f32 %v2031, %v2039
  %v2054 = vadd.f32 %v2032, %v2039
  %v2055 = vadd.f32 %v2033, %v2039
  %v2056 = vadd.f32 %v2034, %v2039
  %v2057 = vmax.f32 %v2041, 0.0
  %v2058 = vmax.f32 %v2042, 0.0
  %v2059 = vmax.f32 %v2043, 0.0
  %v2060 = vmax.f32 %v2044, 0.0
  %v2061 = vmax.f32 %v2045, 0.0
  %v2062 = vmax.f32 %v2046, 0.0
  %v2063 = vmax.f32 %v2047, 0.0
  %v2064 = vmax.f32 %v2048, 0.0
  %v2065 = vmax.f32 %v2049, 0.0
  %v2066 = vmax.f32 %v2050, 0.0
  %v2067 = vmax.f32 %v2051, 0.0
  %v2068 = vmax.f32 %v2052, 0.0
  %v2069 = vmax.f32 %v2053, 0.0
  %v2070 = vmax.f32 %v2054, 0.0
  %v2071 = vmax.f32 %v2055, 0.0
  %v2072 = vmax.f32 %v2056, 0.0
  %v2089 = vcombine.high %v2057, %v2057
  %v2091 = vunpack.c.l.s4 1983009808
  %v2092 = vunpack.c.0.s8 %v2091
  %v2093 = vlaneseq
  %v2094 = vshrl.u32 %v2093, 7
  %v2095 = vsub.s32 %v2092, %v2094
  %v2096 = vrot.slane %v2057, %v2095
  %v2098 = vunpack.c.l.s4 1983009808
  %v2099 = vunpack.c.0.s8 %v2098
  %v2100 = vlaneseq
  %v2101 = vshrl.u32 %v2100, 7
  %v2102 = vsub.s32 %v2099, %v2101
  %v2103 = vrot.slane %v2089, %v2102
  %v2104 = vcombine.high %v2096, %v2096
  %v2105 = vcombine.high %v2103, %v2103
  %v2106 = vcombine.high %v2058, %v2058
  %v2108 = vunpack.c.l.s4 1983009808
  %v2109 = vunpack.c.0.s8 %v2108
  %v2110 = vlaneseq
  %v2111 = vshrl.u32 %v2110, 7
  %v2112 = vsub.s32 %v2109, %v2111
  %v2113 = vrot.slane %v2058, %v2112
  %v2115 = vunpack.c.l.s4 1983009808
  %v2116 = vunpack.c.0.s8 %v2115
  %v2117 = vlaneseq
  %v2118 = vshrl.u32 %v2117, 7
  %v2119 = vsub.s32 %v2116, %v2118
  %v2120 = vrot.slane %v2106, %v2119
  %v2121 = vcombine.high %v2113, %v2113
  %v2122 = vcombine.high %v2120, %v2120
  %v2123 = vcombine.high %v2059, %v2059
  %v2125 = vunpack.c.l.s4 1983009808
  %v2126 = vunpack.c.0.s8 %v2125
  %v2127 = vlaneseq
  %v2128 = vshrl.u32 %v2127, 7
  %v2129 = vsub.s32 %v2126, %v2128
  %v2130 = vrot.slane %v2059, %v2129
  %v2132 = vunpack.c.l.s4 1983009808
  %v2133 = vunpack.c.0.s8 %v2132
  %v2134 = vlaneseq
  %v2135 = vshrl.u32 %v2134, 7
  %v2136 = vsub.s32 %v2133, %v2135
  %v2137 = vrot.slane %v2123, %v2136
  %v2138 = vcombine.high %v2130, %v2130
  %v2139 = vcombine.high %v2137, %v2137
  %v2140 = vcombine.high %v2060, %v2060
  %v2142 = vunpack.c.l.s4 1983009808
  %v2143 = vunpack.c.0.s8 %v2142
  %v2144 = vlaneseq
  %v2145 = vshrl.u32 %v2144, 7
  %v2146 = vsub.s32 %v2143, %v2145
  %v2147 = vrot.slane %v2060, %v2146
  %v2149 = vunpack.c.l.s4 1983009808
  %v2150 = vunpack.c.0.s8 %v2149
  %v2151 = vlaneseq
  %v2152 = vshrl.u32 %v2151, 7
  %v2153 = vsub.s32 %v2150, %v2152
  %v2154 = vrot.slane %v2140, %v2153
  %v2155 = vcombine.high %v2147, %v2147
  %v2156 = vcombine.high %v2154, %v2154
  %v2157 = vcombine.high %v2061, %v2061
  %v2159 = vunpack.c.l.s4 1983009808
  %v2160 = vunpack.c.0.s8 %v2159
  %v2161 = vlaneseq
  %v2162 = vshrl.u32 %v2161, 7
  %v2163 = vsub.s32 %v2160, %v2162
  %v2164 = vrot.slane %v2061, %v2163
  %v2166 = vunpack.c.l.s4 1983009808
  %v2167 = vunpack.c.0.s8 %v2166
  %v2168 = vlaneseq
  %v2169 = vshrl.u32 %v2168, 7
  %v2170 = vsub.s32 %v2167, %v2169
  %v2171 = vrot.slane %v2157, %v2170
  %v2172 = vcombine.high %v2164, %v2164
  %v2173 = vcombine.high %v2171, %v2171
  %v2174 = vcombine.high %v2062, %v2062
  %v2176 = vunpack.c.l.s4 1983009808
  %v2177 = vunpack.c.0.s8 %v2176
  %v2178 = vlaneseq
  %v2179 = vshrl.u32 %v2178, 7
  %v2180 = vsub.s32 %v2177, %v2179
  %v2181 = vrot.slane %v2062, %v2180
  %v2183 = vunpack.c.l.s4 1983009808
  %v2184 = vunpack.c.0.s8 %v2183
  %v2185 = vlaneseq
  %v2186 = vshrl.u32 %v2185, 7
  %v2187 = vsub.s32 %v2184, %v2186
  %v2188 = vrot.slane %v2174, %v2187
  %v2189 = vcombine.high %v2181, %v2181
  %v2190 = vcombine.high %v2188, %v2188
  %v2191 = vcombine.high %v2063, %v2063
  %v2193 = vunpack.c.l.s4 1983009808
  %v2194 = vunpack.c.0.s8 %v2193
  %v2195 = vlaneseq
  %v2196 = vshrl.u32 %v2195, 7
  %v2197 = vsub.s32 %v2194, %v2196
  %v2198 = vrot.slane %v2063, %v2197
  %v2200 = vunpack.c.l.s4 1983009808
  %v2201 = vunpack.c.0.s8 %v2200
  %v2202 = vlaneseq
  %v2203 = vshrl.u32 %v2202, 7
  %v2204 = vsub.s32 %v2201, %v2203
  %v2205 = vrot.slane %v2191, %v2204
  %v2206 = vcombine.high %v2198, %v2198
  %v2207 = vcombine.high %v2205, %v2205
  %v2208 = vcombine.high %v2064, %v2064
  %v2210 = vunpack.c.l.s4 1983009808
  %v2211 = vunpack.c.0.s8 %v2210
  %v2212 = vlaneseq
  %v2213 = vshrl.u32 %v2212, 7
  %v2214 = vsub.s32 %v2211, %v2213
  %v2215 = vrot.slane %v2064, %v2214
  %v2217 = vunpack.c.l.s4 1983009808
  %v2218 = vunpack.c.0.s8 %v2217
  %v2219 = vlaneseq
  %v2220 = vshrl.u32 %v2219, 7
  %v2221 = vsub.s32 %v2218, %v2220
  %v2222 = vrot.slane %v2208, %v2221
  %v2223 = vcombine.high %v2215, %v2215
  %v2224 = vcombine.high %v2222, %v2222
  %v2225 = vcombine.high %v2065, %v2065
  %v2227 = vunpack.c.l.s4 1983009808
  %v2228 = vunpack.c.0.s8 %v2227
  %v2229 = vlaneseq
  %v2230 = vshrl.u32 %v2229, 7
  %v2231 = vsub.s32 %v2228, %v2230
  %v2232 = vrot.slane %v2065, %v2231
  %v2234 = vunpack.c.l.s4 1983009808
  %v2235 = vunpack.c.0.s8 %v2234
  %v2236 = vlaneseq
  %v2237 = vshrl.u32 %v2236, 7
  %v2238 = vsub.s32 %v2235, %v2237
  %v2239 = vrot.slane %v2225, %v2238
  %v2240 = vcombine.high %v2232, %v2232
  %v2241 = vcombine.high %v2239, %v2239
  %v2242 = vcombine.high %v2066, %v2066
  %v2244 = vunpack.c.l.s4 1983009808
  %v2245 = vunpack.c.0.s8 %v2244
  %v2246 = vlaneseq
  %v2247 = vshrl.u32 %v2246, 7
  %v2248 = vsub.s32 %v2245, %v2247
  %v2249 = vrot.slane %v2066, %v2248
  %v2251 = vunpack.c.l.s4 1983009808
  %v2252 = vunpack.c.0.s8 %v2251
  %v2253 = vlaneseq
  %v2254 = vshrl.u32 %v2253, 7
  %v2255 = vsub.s32 %v2252, %v2254
  %v2256 = vrot.slane %v2242, %v2255
  %v2257 = vcombine.high %v2249, %v2249
  %v2258 = vcombine.high %v2256, %v2256
  %v2259 = vcombine.high %v2067, %v2067
  %v2261 = vunpack.c.l.s4 1983009808
  %v2262 = vunpack.c.0.s8 %v2261
  %v2263 = vlaneseq
  %v2264 = vshrl.u32 %v2263, 7
  %v2265 = vsub.s32 %v2262, %v2264
  %v2266 = vrot.slane %v2067, %v2265
  %v2268 = vunpack.c.l.s4 1983009808
  %v2269 = vunpack.c.0.s8 %v2268
  %v2270 = vlaneseq
  %v2271 = vshrl.u32 %v2270, 7
  %v2272 = vsub.s32 %v2269, %v2271
  %v2273 = vrot.slane %v2259, %v2272
  %v2274 = vcombine.high %v2266, %v2266
  %v2275 = vcombine.high %v2273, %v2273
  %v2276 = vcombine.high %v2068, %v2068
  %v2278 = vunpack.c.l.s4 1983009808
  %v2279 = vunpack.c.0.s8 %v2278
  %v2280 = vlaneseq
  %v2281 = vshrl.u32 %v2280, 7
  %v2282 = vsub.s32 %v2279, %v2281
  %v2283 = vrot.slane %v2068, %v2282
  %v2285 = vunpack.c.l.s4 1983009808
  %v2286 = vunpack.c.0.s8 %v2285
  %v2287 = vlaneseq
  %v2288 = vshrl.u32 %v2287, 7
  %v2289 = vsub.s32 %v2286, %v2288
  %v2290 = vrot.slane %v2276, %v2289
  %v2291 = vcombine.high %v2283, %v2283
  %v2292 = vcombine.high %v2290, %v2290
  %v2293 = vcombine.high %v2069, %v2069
  %v2295 = vunpack.c.l.s4 1983009808
  %v2296 = vunpack.c.0.s8 %v2295
  %v2297 = vlaneseq
  %v2298 = vshrl.u32 %v2297, 7
  %v2299 = vsub.s32 %v2296, %v2298
  %v2300 = vrot.slane %v2069, %v2299
  %v2302 = vunpack.c.l.s4 1983009808
  %v2303 = vunpack.c.0.s8 %v2302
  %v2304 = vlaneseq
  %v2305 = vshrl.u32 %v2304, 7
  %v2306 = vsub.s32 %v2303, %v2305
  %v2307 = vrot.slane %v2293, %v2306
  %v2308 = vcombine.high %v2300, %v2300
  %v2309 = vcombine.high %v2307, %v2307
  %v2310 = vcombine.high %v2070, %v2070
  %v2312 = vunpack.c.l.s4 1983009808
  %v2313 = vunpack.c.0.s8 %v2312
  %v2314 = vlaneseq
  %v2315 = vshrl.u32 %v2314, 7
  %v2316 = vsub.s32 %v2313, %v2315
  %v2317 = vrot.slane %v2070, %v2316
  %v2319 = vunpack.c.l.s4 1983009808
  %v2320 = vunpack.c.0.s8 %v2319
  %v2321 = vlaneseq
  %v2322 = vshrl.u32 %v2321, 7
  %v2323 = vsub.s32 %v2320, %v2322
  %v2324 = vrot.slane %v2310, %v2323
  %v2325 = vcombine.high %v2317, %v2317
  %v2326 = vcombine.high %v2324, %v2324
  %v2327 = vcombine.high %v2071, %v2071
  %v2329 = vunpack.c.l.s4 1983009808
  %v2330 = vunpack.c.0.s8 %v2329
  %v2331 = vlaneseq
  %v2332 = vshrl.u32 %v2331, 7
  %v2333 = vsub.s32 %v2330, %v2332
  %v2334 = vrot.slane %v2071, %v2333
  %v2336 = vunpack.c.l.s4 1983009808
  %v2337 = vunpack.c.0.s8 %v2336
  %v2338 = vlaneseq
  %v2339 = vshrl.u32 %v2338, 7
  %v2340 = vsub.s32 %v2337, %v2339
  %v2341 = vrot.slane %v2327, %v2340
  %v2342 = vcombine.high %v2334, %v2334
  %v2343 = vcombine.high %v2341, %v2341
  %v2344 = vcombine.high %v2072, %v2072
  %v2346 = vunpack.c.l.s4 1983009808
  %v2347 = vunpack.c.0.s8 %v2346
  %v2348 = vlaneseq
  %v2349 = vshrl.u32 %v2348, 7
  %v2350 = vsub.s32 %v2347, %v2349
  %v2351 = vrot.slane %v2072, %v2350
  %v2353 = vunpack.c.l.s4 1983009808
  %v2354 = vunpack.c.0.s8 %v2353
  %v2355 = vlaneseq
  %v2356 = vshrl.u32 %v2355, 7
  %v2357 = vsub.s32 %v2354, %v2356
  %v2358 = vrot.slane %v2344, %v2357
  %v2359 = vcombine.high %v2351, %v2351
  %v2360 = vcombine.high %v2358, %v2358
  %vm2425 = vcmask 517120
  %v2426 = vsel %vm2425, %v2096, -inf
  %v2427 = vrot.slane %v2426, 4
  %v2428 = vmax.f32 %v2426, %v2427
  %v2429 = vrot.slane %v2428, 2
  %v2430 = vmax.f32 %v2428, %v2429
  %v2431 = vrot.slane %v2430, 1
  %v2432 = vmax.f32 %v2430, %v2431
  %v2433 = vsel %vm2425, %v2104, -inf
  %v2434 = vrot.slane %v2433, 4
  %v2435 = vmax.f32 %v2433, %v2434
  %v2436 = vrot.slane %v2435, 2
  %v2437 = vmax.f32 %v2435, %v2436
  %v2438 = vrot.slane %v2437, 1
  %v2439 = vmax.f32 %v2437, %v2438
  %v2440 = vsel %vm2425, %v2103, -inf
  %v2441 = vrot.slane %v2440, 4
  %v2442 = vmax.f32 %v2440, %v2441
  %v2443 = vrot.slane %v2442, 2
  %v2444 = vmax.f32 %v2442, %v2443
  %v2445 = vrot.slane %v2444, 1
  %v2446 = vmax.f32 %v2444, %v2445
  %v2447 = vsel %vm2425, %v2105, -inf
  %v2448 = vrot.slane %v2447, 4
  %v2449 = vmax.f32 %v2447, %v2448
  %v2450 = vrot.slane %v2449, 2
  %v2451 = vmax.f32 %v2449, %v2450
  %v2452 = vrot.slane %v2451, 1
  %v2453 = vmax.f32 %v2451, %v2452
  %v2454 = vsel %vm2425, %v2113, -inf
  %v2455 = vrot.slane %v2454, 4
  %v2456 = vmax.f32 %v2454, %v2455
  %v2457 = vrot.slane %v2456, 2
  %v2458 = vmax.f32 %v2456, %v2457
  %v2459 = vrot.slane %v2458, 1
  %v2460 = vmax.f32 %v2458, %v2459
  %v2461 = vsel %vm2425, %v2121, -inf
  %v2462 = vrot.slane %v2461, 4
  %v2463 = vmax.f32 %v2461, %v2462
  %v2464 = vrot.slane %v2463, 2
  %v2465 = vmax.f32 %v2463, %v2464
  %v2466 = vrot.slane %v2465, 1
  %v2467 = vmax.f32 %v2465, %v2466
  %v2468 = vsel %vm2425, %v2120, -inf
  %v2469 = vrot.slane %v2468, 4
  %v2470 = vmax.f32 %v2468, %v2469
  %v2471 = vrot.slane %v2470, 2
  %v2472 = vmax.f32 %v2470, %v2471
  %v2473 = vrot.slane %v2472, 1
  %v2474 = vmax.f32 %v2472, %v2473
  %v2475 = vsel %vm2425, %v2122, -inf
  %v2476 = vrot.slane %v2475, 4
  %v2477 = vmax.f32 %v2475, %v2476
  %v2478 = vrot.slane %v2477, 2
  %v2479 = vmax.f32 %v2477, %v2478
  %v2480 = vrot.slane %v2479, 1
  %v2481 = vmax.f32 %v2479, %v2480
  %v2482 = vsel %vm2425, %v2130, -inf
  %v2483 = vrot.slane %v2482, 4
  %v2484 = vmax.f32 %v2482, %v2483
  %v2485 = vrot.slane %v2484, 2
  %v2486 = vmax.f32 %v2484, %v2485
  %v2487 = vrot.slane %v2486, 1
  %v2488 = vmax.f32 %v2486, %v2487
  %v2489 = vsel %vm2425, %v2138, -inf
  %v2490 = vrot.slane %v2489, 4
  %v2491 = vmax.f32 %v2489, %v2490
  %v2492 = vrot.slane %v2491, 2
  %v2493 = vmax.f32 %v2491, %v2492
  %v2494 = vrot.slane %v2493, 1
  %v2495 = vmax.f32 %v2493, %v2494
  %v2496 = vsel %vm2425, %v2137, -inf
  %v2497 = vrot.slane %v2496, 4
  %v2498 = vmax.f32 %v2496, %v2497
  %v2499 = vrot.slane %v2498, 2
  %v2500 = vmax.f32 %v2498, %v2499
  %v2501 = vrot.slane %v2500, 1
  %v2502 = vmax.f32 %v2500, %v2501
  %v2503 = vsel %vm2425, %v2139, -inf
  %v2504 = vrot.slane %v2503, 4
  %v2505 = vmax.f32 %v2503, %v2504
  %v2506 = vrot.slane %v2505, 2
  %v2507 = vmax.f32 %v2505, %v2506
  %v2508 = vrot.slane %v2507, 1
  %v2509 = vmax.f32 %v2507, %v2508
  %v2510 = vsel %vm2425, %v2147, -inf
  %v2511 = vrot.slane %v2510, 4
  %v2512 = vmax.f32 %v2510, %v2511
  %v2513 = vrot.slane %v2512, 2
  %v2514 = vmax.f32 %v2512, %v2513
  %v2515 = vrot.slane %v2514, 1
  %v2516 = vmax.f32 %v2514, %v2515
  %v2517 = vsel %vm2425, %v2155, -inf
  %v2518 = vrot.slane %v2517, 4
  %v2519 = vmax.f32 %v2517, %v2518
  %v2520 = vrot.slane %v2519, 2
  %v2521 = vmax.f32 %v2519, %v2520
  %v2522 = vrot.slane %v2521, 1
  %v2523 = vmax.f32 %v2521, %v2522
  %v2524 = vsel %vm2425, %v2154, -inf
  %v2525 = vrot.slane %v2524, 4
  %v2526 = vmax.f32 %v2524, %v2525
  %v2527 = vrot.slane %v2526, 2
  %v2528 = vmax.f32 %v2526, %v2527
  %v2529 = vrot.slane %v2528, 1
  %v2530 = vmax.f32 %v2528, %v2529
  %v2531 = vsel %vm2425, %v2156, -inf
  %v2532 = vrot.slane %v2531, 4
  %v2533 = vmax.f32 %v2531, %v2532
  %v2534 = vrot.slane %v2533, 2
  %v2535 = vmax.f32 %v2533, %v2534
  %v2536 = vrot.slane %v2535, 1
  %v2537 = vmax.f32 %v2535, %v2536
  %v2538 = vsel %vm2425, %v2164, -inf
  %v2539 = vrot.slane %v2538, 4
  %v2540 = vmax.f32 %v2538, %v2539
  %v2541 = vrot.slane %v2540, 2
  %v2542 = vmax.f32 %v2540, %v2541
  %v2543 = vrot.slane %v2542, 1
  %v2544 = vmax.f32 %v2542, %v2543
  %v2545 = vsel %vm2425, %v2172, -inf
  %v2546 = vrot.slane %v2545, 4
  %v2547 = vmax.f32 %v2545, %v2546
  %v2548 = vrot.slane %v2547, 2
  %v2549 = vmax.f32 %v2547, %v2548
  %v2550 = vrot.slane %v2549, 1
  %v2551 = vmax.f32 %v2549, %v2550
  %v2552 = vsel %vm2425, %v2171, -inf
  %v2553 = vrot.slane %v2552, 4
  %v2554 = vmax.f32 %v2552, %v2553
  %v2555 = vrot.slane %v2554, 2
  %v2556 = vmax.f32 %v2554, %v2555
  %v2557 = vrot.slane %v2556, 1
  %v2558 = vmax.f32 %v2556, %v2557
  %v2559 = vsel %vm2425, %v2173, -inf
  %v2560 = vrot.slane %v2559, 4
  %v2561 = vmax.f32 %v2559, %v2560
  %v2562 = vrot.slane %v2561, 2
  %v2563 = vmax.f32 %v2561, %v2562
  %v2564 = vrot.slane %v2563, 1
  %v2565 = vmax.f32 %v2563, %v2564
  %v2566 = vsel %vm2425, %v2181, -inf
  %v2567 = vrot.slane %v2566, 4
  %v2568 = vmax.f32 %v2566, %v2567
  %v2569 = vrot.slane %v2568, 2
  %v2570 = vmax.f32 %v2568, %v2569
  %v2571 = vrot.slane %v2570, 1
  %v2572 = vmax.f32 %v2570, %v2571
  %v2573 = vsel %vm2425, %v2189, -inf
  %v2574 = vrot.slane %v2573, 4
  %v2575 = vmax.f32 %v2573, %v2574
  %v2576 = vrot.slane %v2575, 2
  %v2577 = vmax.f32 %v2575, %v2576
  %v2578 = vrot.slane %v2577, 1
  %v2579 = vmax.f32 %v2577, %v2578
  %v2580 = vsel %vm2425, %v2188, -inf
  %v2581 = vrot.slane %v2580, 4
  %v2582 = vmax.f32 %v2580, %v2581
  %v2583 = vrot.slane %v2582, 2
  %v2584 = vmax.f32 %v2582, %v2583
  %v2585 = vrot.slane %v2584, 1
  %v2586 = vmax.f32 %v2584, %v2585
  %v2587 = vsel %vm2425, %v2190, -inf
  %v2588 = vrot.slane %v2587, 4
  %v2589 = vmax.f32 %v2587, %v2588
  %v2590 = vrot.slane %v2589, 2
  %v2591 = vmax.f32 %v2589, %v2590
  %v2592 = vrot.slane %v2591, 1
  %v2593 = vmax.f32 %v2591, %v2592
  %v2594 = vsel %vm2425, %v2198, -inf
  %v2595 = vrot.slane %v2594, 4
  %v2596 = vmax.f32 %v2594, %v2595
  %v2597 = vrot.slane %v2596, 2
  %v2598 = vmax.f32 %v2596, %v2597
  %v2599 = vrot.slane %v2598, 1
  %v2600 = vmax.f32 %v2598, %v2599
  %v2601 = vsel %vm2425, %v2206, -inf
  %v2602 = vrot.slane %v2601, 4
  %v2603 = vmax.f32 %v2601, %v2602
  %v2604 = vrot.slane %v2603, 2
  %v2605 = vmax.f32 %v2603, %v2604
  %v2606 = vrot.slane %v2605, 1
  %v2607 = vmax.f32 %v2605, %v2606
  %v2608 = vsel %vm2425, %v2205, -inf
  %v2609 = vrot.slane %v2608, 4
  %v2610 = vmax.f32 %v2608, %v2609
  %v2611 = vrot.slane %v2610, 2
  %v2612 = vmax.f32 %v2610, %v2611
  %v2613 = vrot.slane %v2612, 1
  %v2614 = vmax.f32 %v2612, %v2613
  %v2615 = vsel %vm2425, %v2207, -inf
  %v2616 = vrot.slane %v2615, 4
  %v2617 = vmax.f32 %v2615, %v2616
  %v2618 = vrot.slane %v2617, 2
  %v2619 = vmax.f32 %v2617, %v2618
  %v2620 = vrot.slane %v2619, 1
  %v2621 = vmax.f32 %v2619, %v2620
  %v2622 = vsel %vm2425, %v2215, -inf
  %v2623 = vrot.slane %v2622, 4
  %v2624 = vmax.f32 %v2622, %v2623
  %v2625 = vrot.slane %v2624, 2
  %v2626 = vmax.f32 %v2624, %v2625
  %v2627 = vrot.slane %v2626, 1
  %v2628 = vmax.f32 %v2626, %v2627
  %v2629 = vsel %vm2425, %v2223, -inf
  %v2630 = vrot.slane %v2629, 4
  %v2631 = vmax.f32 %v2629, %v2630
  %v2632 = vrot.slane %v2631, 2
  %v2633 = vmax.f32 %v2631, %v2632
  %v2634 = vrot.slane %v2633, 1
  %v2635 = vmax.f32 %v2633, %v2634
  %v2636 = vsel %vm2425, %v2222, -inf
  %v2637 = vrot.slane %v2636, 4
  %v2638 = vmax.f32 %v2636, %v2637
  %v2639 = vrot.slane %v2638, 2
  %v2640 = vmax.f32 %v2638, %v2639
  %v2641 = vrot.slane %v2640, 1
  %v2642 = vmax.f32 %v2640, %v2641
  %v2643 = vsel %vm2425, %v2224, -inf
  %v2644 = vrot.slane %v2643, 4
  %v2645 = vmax.f32 %v2643, %v2644
  %v2646 = vrot.slane %v2645, 2
  %v2647 = vmax.f32 %v2645, %v2646
  %v2648 = vrot.slane %v2647, 1
  %v2649 = vmax.f32 %v2647, %v2648
  %v2650 = vsel %vm2425, %v2232, -inf
  %v2651 = vrot.slane %v2650, 4
  %v2652 = vmax.f32 %v2650, %v2651
  %v2653 = vrot.slane %v2652, 2
  %v2654 = vmax.f32 %v2652, %v2653
  %v2655 = vrot.slane %v2654, 1
  %v2656 = vmax.f32 %v2654, %v2655
  %v2657 = vsel %vm2425, %v2240, -inf
  %v2658 = vrot.slane %v2657, 4
  %v2659 = vmax.f32 %v2657, %v2658
  %v2660 = vrot.slane %v2659, 2
  %v2661 = vmax.f32 %v2659, %v2660
  %v2662 = vrot.slane %v2661, 1
  %v2663 = vmax.f32 %v2661, %v2662
  %v2664 = vsel %vm2425, %v2239, -inf
  %v2665 = vrot.slane %v2664, 4
  %v2666 = vmax.f32 %v2664, %v2665
  %v2667 = vrot.slane %v2666, 2
  %v2668 = vmax.f32 %v2666, %v2667
  %v2669 = vrot.slane %v2668, 1
  %v2670 = vmax.f32 %v2668, %v2669
  %v2671 = vsel %vm2425, %v2241, -inf
  %v2672 = vrot.slane %v2671, 4
  %v2673 = vmax.f32 %v2671, %v2672
  %v2674 = vrot.slane %v2673, 2
  %v2675 = vmax.f32 %v2673, %v2674
  %v2676 = vrot.slane %v2675, 1
  %v2677 = vmax.f32 %v2675, %v2676
  %v2678 = vsel %vm2425, %v2249, -inf
  %v2679 = vrot.slane %v2678, 4
  %v2680 = vmax.f32 %v2678, %v2679
  %v2681 = vrot.slane %v2680, 2
  %v2682 = vmax.f32 %v2680, %v2681
  %v2683 = vrot.slane %v2682, 1
  %v2684 = vmax.f32 %v2682, %v2683
  %v2685 = vsel %vm2425, %v2257, -inf
  %v2686 = vrot.slane %v2685, 4
  %v2687 = vmax.f32 %v2685, %v2686
  %v2688 = vrot.slane %v2687, 2
  %v2689 = vmax.f32 %v2687, %v2688
  %v2690 = vrot.slane %v2689, 1
  %v2691 = vmax.f32 %v2689, %v2690
  %v2692 = vsel %vm2425, %v2256, -inf
  %v2693 = vrot.slane %v2692, 4
  %v2694 = vmax.f32 %v2692, %v2693
  %v2695 = vrot.slane %v2694, 2
  %v2696 = vmax.f32 %v2694, %v2695
  %v2697 = vrot.slane %v2696, 1
  %v2698 = vmax.f32 %v2696, %v2697
  %v2699 = vsel %vm2425, %v2258, -inf
  %v2700 = vrot.slane %v2699, 4
  %v2701 = vmax.f32 %v2699, %v2700
  %v2702 = vrot.slane %v2701, 2
  %v2703 = vmax.f32 %v2701, %v2702
  %v2704 = vrot.slane %v2703, 1
  %v2705 = vmax.f32 %v2703, %v2704
  %v2706 = vsel %vm2425, %v2266, -inf
  %v2707 = vrot.slane %v2706, 4
  %v2708 = vmax.f32 %v2706, %v2707
  %v2709 = vrot.slane %v2708, 2
  %v2710 = vmax.f32 %v2708, %v2709
  %v2711 = vrot.slane %v2710, 1
  %v2712 = vmax.f32 %v2710, %v2711
  %v2713 = vsel %vm2425, %v2274, -inf
  %v2714 = vrot.slane %v2713, 4
  %v2715 = vmax.f32 %v2713, %v2714
  %v2716 = vrot.slane %v2715, 2
  %v2717 = vmax.f32 %v2715, %v2716
  %v2718 = vrot.slane %v2717, 1
  %v2719 = vmax.f32 %v2717, %v2718
  %v2720 = vsel %vm2425, %v2273, -inf
  %v2721 = vrot.slane %v2720, 4
  %v2722 = vmax.f32 %v2720, %v2721
  %v2723 = vrot.slane %v2722, 2
  %v2724 = vmax.f32 %v2722, %v2723
  %v2725 = vrot.slane %v2724, 1
  %v2726 = vmax.f32 %v2724, %v2725
  %v2727 = vsel %vm2425, %v2275, -inf
  %v2728 = vrot.slane %v2727, 4
  %v2729 = vmax.f32 %v2727, %v2728
  %v2730 = vrot.slane %v2729, 2
  %v2731 = vmax.f32 %v2729, %v2730
  %v2732 = vrot.slane %v2731, 1
  %v2733 = vmax.f32 %v2731, %v2732
  %v2734 = vsel %vm2425, %v2283, -inf
  %v2735 = vrot.slane %v2734, 4
  %v2736 = vmax.f32 %v2734, %v2735
  %v2737 = vrot.slane %v2736, 2
  %v2738 = vmax.f32 %v2736, %v2737
  %v2739 = vrot.slane %v2738, 1
  %v2740 = vmax.f32 %v2738, %v2739
  %v2741 = vsel %vm2425, %v2291, -inf
  %v2742 = vrot.slane %v2741, 4
  %v2743 = vmax.f32 %v2741, %v2742
  %v2744 = vrot.slane %v2743, 2
  %v2745 = vmax.f32 %v2743, %v2744
  %v2746 = vrot.slane %v2745, 1
  %v2747 = vmax.f32 %v2745, %v2746
  %v2748 = vsel %vm2425, %v2290, -inf
  %v2749 = vrot.slane %v2748, 4
  %v2750 = vmax.f32 %v2748, %v2749
  %v2751 = vrot.slane %v2750, 2
  %v2752 = vmax.f32 %v2750, %v2751
  %v2753 = vrot.slane %v2752, 1
  %v2754 = vmax.f32 %v2752, %v2753
  %v2755 = vsel %vm2425, %v2292, -inf
  %v2756 = vrot.slane %v2755, 4
  %v2757 = vmax.f32 %v2755, %v2756
  %v2758 = vrot.slane %v2757, 2
  %v2759 = vmax.f32 %v2757, %v2758
  %v2760 = vrot.slane %v2759, 1
  %v2761 = vmax.f32 %v2759, %v2760
  %v2762 = vsel %vm2425, %v2300, -inf
  %v2763 = vrot.slane %v2762, 4
  %v2764 = vmax.f32 %v2762, %v2763
  %v2765 = vrot.slane %v2764, 2
  %v2766 = vmax.f32 %v2764, %v2765
  %v2767 = vrot.slane %v2766, 1
  %v2768 = vmax.f32 %v2766, %v2767
  %v2769 = vsel %vm2425, %v2308, -inf
  %v2770 = vrot.slane %v2769, 4
  %v2771 = vmax.f32 %v2769, %v2770
  %v2772 = vrot.slane %v2771, 2
  %v2773 = vmax.f32 %v2771, %v2772
  %v2774 = vrot.slane %v2773, 1
  %v2775 = vmax.f32 %v2773, %v2774
  %v2776 = vsel %vm2425, %v2307, -inf
  %v2777 = vrot.slane %v2776, 4
  %v2778 = vmax.f32 %v2776, %v2777
  %v2779 = vrot.slane %v2778, 2
  %v2780 = vmax.f32 %v2778, %v2779
  %v2781 = vrot.slane %v2780, 1
  %v2782 = vmax.f32 %v2780, %v2781
  %v2783 = vsel %vm2425, %v2309, -inf
  %v2784 = vrot.slane %v2783, 4
  %v2785 = vmax.f32 %v2783, %v2784
  %v2786 = vrot.slane %v2785, 2
  %v2787 = vmax.f32 %v2785, %v2786
  %v2788 = vrot.slane %v2787, 1
  %v2789 = vmax.f32 %v2787, %v2788
  %v2790 = vsel %vm2425, %v2317, -inf
  %v2791 = vrot.slane %v2790, 4
  %v2792 = vmax.f32 %v2790, %v2791
  %v2793 = vrot.slane %v2792, 2
  %v2794 = vmax.f32 %v2792, %v2793
  %v2795 = vrot.slane %v2794, 1
  %v2796 = vmax.f32 %v2794, %v2795
  %v2797 = vsel %vm2425, %v2325, -inf
  %v2798 = vrot.slane %v2797, 4
  %v2799 = vmax.f32 %v2797, %v2798
  %v2800 = vrot.slane %v2799, 2
  %v2801 = vmax.f32 %v2799, %v2800
  %v2802 = vrot.slane %v2801, 1
  %v2803 = vmax.f32 %v2801, %v2802
  %v2804 = vsel %vm2425, %v2324, -inf
  %v2805 = vrot.slane %v2804, 4
  %v2806 = vmax.f32 %v2804, %v2805
  %v2807 = vrot.slane %v2806, 2
  %v2808 = vmax.f32 %v2806, %v2807
  %v2809 = vrot.slane %v2808, 1
  %v2810 = vmax.f32 %v2808, %v2809
  %v2811 = vsel %vm2425, %v2326, -inf
  %v2812 = vrot.slane %v2811, 4
  %v2813 = vmax.f32 %v2811, %v2812
  %v2814 = vrot.slane %v2813, 2
  %v2815 = vmax.f32 %v2813, %v2814
  %v2816 = vrot.slane %v2815, 1
  %v2817 = vmax.f32 %v2815, %v2816
  %v2818 = vsel %vm2425, %v2334, -inf
  %v2819 = vrot.slane %v2818, 4
  %v2820 = vmax.f32 %v2818, %v2819
  %v2821 = vrot.slane %v2820, 2
  %v2822 = vmax.f32 %v2820, %v2821
  %v2823 = vrot.slane %v2822, 1
  %v2824 = vmax.f32 %v2822, %v2823
  %v2825 = vsel %vm2425, %v2342, -inf
  %v2826 = vrot.slane %v2825, 4
  %v2827 = vmax.f32 %v2825, %v2826
  %v2828 = vrot.slane %v2827, 2
  %v2829 = vmax.f32 %v2827, %v2828
  %v2830 = vrot.slane %v2829, 1
  %v2831 = vmax.f32 %v2829, %v2830
  %v2832 = vsel %vm2425, %v2341, -inf
  %v2833 = vrot.slane %v2832, 4
  %v2834 = vmax.f32 %v2832, %v2833
  %v2835 = vrot.slane %v2834, 2
  %v2836 = vmax.f32 %v2834, %v2835
  %v2837 = vrot.slane %v2836, 1
  %v2838 = vmax.f32 %v2836, %v2837
  %v2839 = vsel %vm2425, %v2343, -inf
  %v2840 = vrot.slane %v2839, 4
  %v2841 = vmax.f32 %v2839, %v2840
  %v2842 = vrot.slane %v2841, 2
  %v2843 = vmax.f32 %v2841, %v2842
  %v2844 = vrot.slane %v2843, 1
  %v2845 = vmax.f32 %v2843, %v2844
  %v2846 = vsel %vm2425, %v2351, -inf
  %v2847 = vrot.slane %v2846, 4
  %v2848 = vmax.f32 %v2846, %v2847
  %v2849 = vrot.slane %v2848, 2
  %v2850 = vmax.f32 %v2848, %v2849
  %v2851 = vrot.slane %v2850, 1
  %v2852 = vmax.f32 %v2850, %v2851
  %v2853 = vsel %vm2425, %v2359, -inf
  %v2854 = vrot.slane %v2853, 4
  %v2855 = vmax.f32 %v2853, %v2854
  %v2856 = vrot.slane %v2855, 2
  %v2857 = vmax.f32 %v2855, %v2856
  %v2858 = vrot.slane %v2857, 1
  %v2859 = vmax.f32 %v2857, %v2858
  %v2860 = vsel %vm2425, %v2358, -inf
  %v2861 = vrot.slane %v2860, 4
  %v2862 = vmax.f32 %v2860, %v2861
  %v2863 = vrot.slane %v2862, 2
  %v2864 = vmax.f32 %v2862, %v2863
  %v2865 = vrot.slane %v2864, 1
  %v2866 = vmax.f32 %v2864, %v2865
  %v2867 = vsel %vm2425, %v2360, -inf
  %v2868 = vrot.slane %v2867, 4
  %v2869 = vmax.f32 %v2867, %v2868
  %v2870 = vrot.slane %v2869, 2
  %v2871 = vmax.f32 %v2869, %v2870
  %v2872 = vrot.slane %v2871, 1
  %v2873 = vmax.f32 %v2871, %v2872
  %v2874 = vsel %vm1910, %v2432, -inf
  %v2875 = vsel %vm1910, %v2460, -inf
  %v2876 = vmax.f32 %v2874, %v2875
  %v2877 = vsel %vm1910, %v2439, -inf
  %v2878 = vsel %vm1910, %v2467, -inf
  %v2879 = vmax.f32 %v2877, %v2878
  %v2880 = vsel %vm1910, %v2446, -inf
  %v2881 = vsel %vm1910, %v2474, -inf
  %v2882 = vmax.f32 %v2880, %v2881
  %v2883 = vsel %vm1910, %v2453, -inf
  %v2884 = vsel %vm1910, %v2481, -inf
  %v2885 = vmax.f32 %v2883, %v2884
  %v2886 = vsel %vm1910, %v2488, -inf
  %v2887 = vsel %vm1910, %v2516, -inf
  %v2888 = vmax.f32 %v2886, %v2887
  %v2889 = vsel %vm1910, %v2495, -inf
  %v2890 = vsel %vm1910, %v2523, -inf
  %v2891 = vmax.f32 %v2889, %v2890
  %v2892 = vsel %vm1910, %v2502, -inf
  %v2893 = vsel %vm1910, %v2530, -inf
  %v2894 = vmax.f32 %v2892, %v2893
  %v2895 = vsel %vm1910, %v2509, -inf
  %v2896 = vsel %vm1910, %v2537, -inf
  %v2897 = vmax.f32 %v2895, %v2896
  %v2898 = vsel %vm1910, %v2544, -inf
  %v2899 = vsel %vm1910, %v2572, -inf
  %v2900 = vmax.f32 %v2898, %v2899
  %v2901 = vsel %vm1910, %v2551, -inf
  %v2902 = vsel %vm1910, %v2579, -inf
  %v2903 = vmax.f32 %v2901, %v2902
  %v2904 = vsel %vm1910, %v2558, -inf
  %v2905 = vsel %vm1910, %v2586, -inf
  %v2906 = vmax.f32 %v2904, %v2905
  %v2907 = vsel %vm1910, %v2565, -inf
  %v2908 = vsel %vm1910, %v2593, -inf
  %v2909 = vmax.f32 %v2907, %v2908
  %v2910 = vsel %vm1910, %v2600, -inf
  %v2911 = vsel %vm1910, %v2628, -inf
  %v2912 = vmax.f32 %v2910, %v2911
  %v2913 = vsel %vm1910, %v2607, -inf
  %v2914 = vsel %vm1910, %v2635, -inf
  %v2915 = vmax.f32 %v2913, %v2914
  %v2916 = vsel %vm1910, %v2614, -inf
  %v2917 = vsel %vm1910, %v2642, -inf
  %v2918 = vmax.f32 %v2916, %v2917
  %v2919 = vsel %vm1910, %v2621, -inf
  %v2920 = vsel %vm1910, %v2649, -inf
  %v2921 = vmax.f32 %v2919, %v2920
  %v2922 = vsel %vm1910, %v2656, -inf
  %v2923 = vsel %vm1910, %v2684, -inf
  %v2924 = vmax.f32 %v2922, %v2923
  %v2925 = vsel %vm1910, %v2663, -inf
  %v2926 = vsel %vm1910, %v2691, -inf
  %v2927 = vmax.f32 %v2925, %v2926
  %v2928 = vsel %vm1910, %v2670, -inf
  %v2929 = vsel %vm1910, %v2698, -inf
  %v2930 = vmax.f32 %v2928, %v2929
  %v2931 = vsel %vm1910, %v2677, -inf
  %v2932 = vsel %vm1910, %v2705, -inf
  %v2933 = vmax.f32 %v2931, %v2932
  %v2934 = vsel %vm1910, %v2712, -inf
  %v2935 = vsel %vm1910, %v2740, -inf
  %v2936 = vmax.f32 %v2934, %v2935
  %v2937 = vsel %vm1910, %v2719, -inf
  %v2938 = vsel %vm1910, %v2747, -inf
  %v2939 = vmax.f32 %v2937, %v2938
  %v2940 = vsel %vm1910, %v2726, -inf
  %v2941 = vsel %vm1910, %v2754, -inf
  %v2942 = vmax.f32 %v2940, %v2941
  %v2943 = vsel %vm1910, %v2733, -inf
  %v2944 = vsel %vm1910, %v2761, -inf
  %v2945 = vmax.f32 %v2943, %v2944
  %v2946 = vsel %vm1910, %v2768, -inf
  %v2947 = vsel %vm1910, %v2796, -inf
  %v2948 = vmax.f32 %v2946, %v2947
  %v2949 = vsel %vm1910, %v2775, -inf
  %v2950 = vsel %vm1910, %v2803, -inf
  %v2951 = vmax.f32 %v2949, %v2950
  %v2952 = vsel %vm1910, %v2782, -inf
  %v2953 = vsel %vm1910, %v2810, -inf
  %v2954 = vmax.f32 %v2952, %v2953
  %v2955 = vsel %vm1910, %v2789, -inf
  %v2956 = vsel %vm1910, %v2817, -inf
  %v2957 = vmax.f32 %v2955, %v2956
  %v2958 = vsel %vm1910, %v2824, -inf
  %v2959 = vsel %vm1910, %v2852, -inf
  %v2960 = vmax.f32 %v2958, %v2959
  %v2961 = vsel %vm1910, %v2831, -inf
  %v2962 = vsel %vm1910, %v2859, -inf
  %v2963 = vmax.f32 %v2961, %v2962
  %v2964 = vsel %vm1910, %v2838, -inf
  %v2965 = vsel %vm1910, %v2866, -inf
  %v2966 = vmax.f32 %v2964, %v2965
  %v2967 = vsel %vm1910, %v2845, -inf
  %v2968 = vsel %vm1910, %v2873, -inf
  %v2969 = vmax.f32 %v2967, %v2968
  %vm2970 = vcmask 521216
  %2971 = vst.msk [vmem:[#allocation3] sm:$0x3f] %vm2970, 0.0
  %2972 = vst.msk [vmem:[#allocation3 + $0x30] sm:$0x3f] %vm2970, 0.0
  %s2973 = scalar_lea.vmem [#allocation3], 40
  %2974 = vst.msk [vmem:[%s2973] sm:$0x3f] %vm2970, 0.0
  %2975 = vst.msk [vmem:[%s2973 + $0x30] sm:$0x3f] %vm2970, 0.0
  %s2976 = scalar_lea.vmem [#allocation3], 8
  %vm2977 = vcmask 516096
  %2978 = vst.msk [vmem:[%s2976] sm:$0x1] %vm2977, 0.0
  %2979 = vst.msk [vmem:[%s2976 + $0x8] sm:$0x1] %vm2977, 0.0
  %2980 = vst.msk [vmem:[%s2976 + $0x10] sm:$0x1] %vm2977, 0.0
  %2981 = vst.msk [vmem:[%s2976 + $0x18] sm:$0x1] %vm2977, 0.0
  %2982 = vst.msk [vmem:[%s2976 + $0x30] sm:$0x1] %vm2977, 0.0
  %2983 = vst.msk [vmem:[%s2976 + $0x38] sm:$0x1] %vm2977, 0.0
  %2984 = vst.msk [vmem:[%s2976 + $0x40] sm:$0x1] %vm2977, 0.0
  %2985 = vst.msk [vmem:[%s2976 + $0x48] sm:$0x1] %vm2977, 0.0
  %2986 = vst.msk [vmem:[%s2976 + $0x5] sm:$0x1] %vm2977, 0.0
  %2987 = vst.msk [vmem:[%s2976 + $0xd] sm:$0x1] %vm2977, 0.0
  %2988 = vst.msk [vmem:[%s2976 + $0x15] sm:$0x1] %vm2977, 0.0
  %2989 = vst.msk [vmem:[%s2976 + $0x1d] sm:$0x1] %vm2977, 0.0
  %2990 = vst.msk [vmem:[%s2976 + $0x35] sm:$0x1] %vm2977, 0.0
  %2991 = vst.msk [vmem:[%s2976 + $0x3d] sm:$0x1] %vm2977, 0.0
  %2992 = vst.msk [vmem:[%s2976 + $0x45] sm:$0x1] %vm2977, 0.0
  %2993 = vst.msk [vmem:[%s2976 + $0x4d] sm:$0x1] %vm2977, 0.0
  %vm3026 = vcmask 1041409
  %v3027 = vsel %vm3026, %v2879, %v2876
  %vm3028 = vcmask 1042434
  %v3029 = vsel %vm3028, %v2882, %v3027
  %vm3030 = vcmask 1043459
  %v3031 = vsel %vm3030, %v2885, %v3029
  %v3032 = vsel %vm3026, %v2891, %v2888
  %v3033 = vsel %vm3028, %v2894, %v3032
  %v3034 = vsel %vm3030, %v2897, %v3033
  %v3035 = vsel %vm3026, %v2903, %v2900
  %v3036 = vsel %vm3028, %v2906, %v3035
  %v3037 = vsel %vm3030, %v2909, %v3036
  %v3038 = vsel %vm3026, %v2915, %v2912
  %v3039 = vsel %vm3028, %v2918, %v3038
  %v3040 = vsel %vm3030, %v2921, %v3039
  %v3041 = vsel %vm3026, %v2927, %v2924
  %v3042 = vsel %vm3028, %v2930, %v3041
  %v3043 = vsel %vm3030, %v2933, %v3042
  %v3044 = vsel %vm3026, %v2939, %v2936
  %v3045 = vsel %vm3028, %v2942, %v3044
  %v3046 = vsel %vm3030, %v2945, %v3045
  %v3047 = vsel %vm3026, %v2951, %v2948
  %v3048 = vsel %vm3028, %v2954, %v3047
  %v3049 = vsel %vm3030, %v2957, %v3048
  %v3050 = vsel %vm3026, %v2963, %v2960
  %v3051 = vsel %vm3028, %v2966, %v3050
  %v3052 = vsel %vm3030, %v2969, %v3051
  %vm3061 = vcmask 519168
  %3062 = vst.msk [vmem:[%s2976 + $0x1] sm:$0xf] %vm3061, %v3031
  %3063 = vst.msk [vmem:[%s2976 + $0x9] sm:$0xf] %vm3061, %v3034
  %3064 = vst.msk [vmem:[%s2976 + $0x11] sm:$0xf] %vm3061, %v3037
  %3065 = vst.msk [vmem:[%s2976 + $0x19] sm:$0xf] %vm3061, %v3040
  %3066 = vst.msk [vmem:[%s2976 + $0x31] sm:$0xf] %vm3061, %v3043
  %3067 = vst.msk [vmem:[%s2976 + $0x39] sm:$0xf] %vm3061, %v3046
  %3068 = vst.msk [vmem:[%s2976 + $0x41] sm:$0xf] %vm3061, %v3049
  %3069 = vst.msk [vmem:[%s2976 + $0x49] sm:$0xf] %vm3061, %v3052
  %v3070 = vld [vmem:[#allocation3] sm:$0xf]
  %v3071 = vld [vmem:[#allocation3 + $0x8] sm:$0xf]
  %v3072 = vld [vmem:[#allocation3 + $0x10] sm:$0xf]
  %v3073 = vld [vmem:[#allocation3 + $0x18] sm:$0xf]
  %v3074 = vld [vmem:[#allocation3 + $0x30] sm:$0xf]
  %v3075 = vld [vmem:[#allocation3 + $0x38] sm:$0xf]
  %v3076 = vld [vmem:[#allocation3 + $0x40] sm:$0xf]
  %v3077 = vld [vmem:[#allocation3 + $0x48] sm:$0xf]
  %v3078 = vpack.c.bf16 %v3070, %v3070
  %v3079 = vpack.c.bf16 %v3071, %v3071
  %v3080 = vpack.c.bf16 %v3072, %v3072
  %v3081 = vpack.c.bf16 %v3073, %v3073
  %v3082 = vpack.c.bf16 %v3074, %v3074
  %v3083 = vpack.c.bf16 %v3075, %v3075
  %v3084 = vpack.c.bf16 %v3076, %v3076
  %v3085 = vpack.c.bf16 %v3077, %v3077
  %v3086 = vld [vmem:[#allocation3 + $0x1] sm:$0xf]
  %v3087 = vld [vmem:[#allocation3 + $0x9] sm:$0xf]
  %v3088 = vld [vmem:[#allocation3 + $0x11] sm:$0xf]
  %v3089 = vld [vmem:[#allocation3 + $0x19] sm:$0xf]
  %v3090 = vld [vmem:[#allocation3 + $0x31] sm:$0xf]
  %v3091 = vld [vmem:[#allocation3 + $0x39] sm:$0xf]
  %v3092 = vld [vmem:[#allocation3 + $0x41] sm:$0xf]
  %v3093 = vld [vmem:[#allocation3 + $0x49] sm:$0xf]
  %v3094 = vpack.c.bf16 %v3086, %v3086
  %v3095 = vpack.c.bf16 %v3087, %v3087
  %v3096 = vpack.c.bf16 %v3088, %v3088
  %v3097 = vpack.c.bf16 %v3089, %v3089
  %v3098 = vpack.c.bf16 %v3090, %v3090
  %v3099 = vpack.c.bf16 %v3091, %v3091
  %v3100 = vpack.c.bf16 %v3092, %v3092
  %v3101 = vpack.c.bf16 %v3093, %v3093
  %v3102 = vld [vmem:[#allocation3 + $0x2] sm:$0xf]
  %v3103 = vld [vmem:[#allocation3 + $0xa] sm:$0xf]
  %v3104 = vld [vmem:[#allocation3 + $0x12] sm:$0xf]
  %v3105 = vld [vmem:[#allocation3 + $0x1a] sm:$0xf]
  %v3106 = vld [vmem:[#allocation3 + $0x32] sm:$0xf]
  %v3107 = vld [vmem:[#allocation3 + $0x3a] sm:$0xf]
  %v3108 = vld [vmem:[#allocation3 + $0x42] sm:$0xf]
  %v3109 = vld [vmem:[#allocation3 + $0x4a] sm:$0xf]
  %v3110 = vpack.c.bf16 %v3102, %v3102
  %v3111 = vpack.c.bf16 %v3103, %v3103
  %v3112 = vpack.c.bf16 %v3104, %v3104
  %v3113 = vpack.c.bf16 %v3105, %v3105
  %v3114 = vpack.c.bf16 %v3106, %v3106
  %v3115 = vpack.c.bf16 %v3107, %v3107
  %v3116 = vpack.c.bf16 %v3108, %v3108
  %v3117 = vpack.c.bf16 %v3109, %v3109
  %v3118 = vld [vmem:[%s2976] sm:$0xf]
  %v3119 = vld [vmem:[%s2976 + $0x8] sm:$0xf]
  %v3120 = vld [vmem:[%s2976 + $0x10] sm:$0xf]
  %v3121 = vld [vmem:[%s2976 + $0x18] sm:$0xf]
  %v3122 = vld [vmem:[%s2976 + $0x30] sm:$0xf]
  %v3123 = vld [vmem:[%s2976 + $0x38] sm:$0xf]
  %v3124 = vld [vmem:[%s2976 + $0x40] sm:$0xf]
  %v3125 = vld [vmem:[%s2976 + $0x48] sm:$0xf]
  %v3126 = vpack.c.bf16 %v3118, %v3118
  %v3127 = vpack.c.bf16 %v3119, %v3119
  %v3128 = vpack.c.bf16 %v3120, %v3120
  %v3129 = vpack.c.bf16 %v3121, %v3121
  %v3130 = vpack.c.bf16 %v3122, %v3122
  %v3131 = vpack.c.bf16 %v3123, %v3123
  %v3132 = vpack.c.bf16 %v3124, %v3124
  %v3133 = vpack.c.bf16 %v3125, %v3125
  %v3134 = vld [vmem:[%s2976 + $0x1] sm:$0xf]
  %v3135 = vld [vmem:[%s2976 + $0x9] sm:$0xf]
  %v3136 = vld [vmem:[%s2976 + $0x11] sm:$0xf]
  %v3137 = vld [vmem:[%s2976 + $0x19] sm:$0xf]
  %v3138 = vld [vmem:[%s2976 + $0x31] sm:$0xf]
  %v3139 = vld [vmem:[%s2976 + $0x39] sm:$0xf]
  %v3140 = vld [vmem:[%s2976 + $0x41] sm:$0xf]
  %v3141 = vld [vmem:[%s2976 + $0x49] sm:$0xf]
  %v3142 = vpack.c.bf16 %v3134, %v3134
  %v3143 = vpack.c.bf16 %v3135, %v3135
  %v3144 = vpack.c.bf16 %v3136, %v3136
  %v3145 = vpack.c.bf16 %v3137, %v3137
  %v3146 = vpack.c.bf16 %v3138, %v3138
  %v3147 = vpack.c.bf16 %v3139, %v3139
  %v3148 = vpack.c.bf16 %v3140, %v3140
  %v3149 = vpack.c.bf16 %v3141, %v3141
  %v3150 = vld [vmem:[%s2976 + $0x2] sm:$0xf]
  %v3151 = vld [vmem:[%s2976 + $0xa] sm:$0xf]
  %v3152 = vld [vmem:[%s2976 + $0x12] sm:$0xf]
  %v3153 = vld [vmem:[%s2976 + $0x1a] sm:$0xf]
  %v3154 = vld [vmem:[%s2976 + $0x32] sm:$0xf]
  %v3155 = vld [vmem:[%s2976 + $0x3a] sm:$0xf]
  %v3156 = vld [vmem:[%s2976 + $0x42] sm:$0xf]
  %v3157 = vld [vmem:[%s2976 + $0x4a] sm:$0xf]
  %v3158 = vpack.c.bf16 %v3150, %v3150
  %v3159 = vpack.c.bf16 %v3151, %v3151
  %v3160 = vpack.c.bf16 %v3152, %v3152
  %v3161 = vpack.c.bf16 %v3153, %v3153
  %v3162 = vpack.c.bf16 %v3154, %v3154
  %v3163 = vpack.c.bf16 %v3155, %v3155
  %v3164 = vpack.c.bf16 %v3156, %v3156
  %v3165 = vpack.c.bf16 %v3157, %v3157
  %s3166 = scalar_lea.vmem [#allocation3], 16
  %v3167 = vld [vmem:[%s3166] sm:$0xf]
  %v3168 = vld [vmem:[%s3166 + $0x8] sm:$0xf]
  %v3169 = vld [vmem:[%s3166 + $0x10] sm:$0xf]
  %v3170 = vld [vmem:[%s3166 + $0x18] sm:$0xf]
  %v3171 = vld [vmem:[%s3166 + $0x30] sm:$0xf]
  %v3172 = vld [vmem:[%s3166 + $0x38] sm:$0xf]
  %v3173 = vld [vmem:[%s3166 + $0x40] sm:$0xf]
  %v3174 = vld [vmem:[%s3166 + $0x48] sm:$0xf]
  %v3175 = vpack.c.bf16 %v3167, %v3167
  %v3176 = vpack.c.bf16 %v3168, %v3168
  %v3177 = vpack.c.bf16 %v3169, %v3169
  %v3178 = vpack.c.bf16 %v3170, %v3170
  %v3179 = vpack.c.bf16 %v3171, %v3171
  %v3180 = vpack.c.bf16 %v3172, %v3172
  %v3181 = vpack.c.bf16 %v3173, %v3173
  %v3182 = vpack.c.bf16 %v3174, %v3174
  %v3183 = vld [vmem:[%s3166 + $0x1] sm:$0xf]
  %v3184 = vld [vmem:[%s3166 + $0x9] sm:$0xf]
  %v3185 = vld [vmem:[%s3166 + $0x11] sm:$0xf]
  %v3186 = vld [vmem:[%s3166 + $0x19] sm:$0xf]
  %v3187 = vld [vmem:[%s3166 + $0x31] sm:$0xf]
  %v3188 = vld [vmem:[%s3166 + $0x39] sm:$0xf]
  %v3189 = vld [vmem:[%s3166 + $0x41] sm:$0xf]
  %v3190 = vld [vmem:[%s3166 + $0x49] sm:$0xf]
  %v3191 = vpack.c.bf16 %v3183, %v3183
  %v3192 = vpack.c.bf16 %v3184, %v3184
  %v3193 = vpack.c.bf16 %v3185, %v3185
  %v3194 = vpack.c.bf16 %v3186, %v3186
  %v3195 = vpack.c.bf16 %v3187, %v3187
  %v3196 = vpack.c.bf16 %v3188, %v3188
  %v3197 = vpack.c.bf16 %v3189, %v3189
  %v3198 = vpack.c.bf16 %v3190, %v3190
  %v3199 = vld [vmem:[%s3166 + $0x2] sm:$0xf]
  %v3200 = vld [vmem:[%s3166 + $0xa] sm:$0xf]
  %v3201 = vld [vmem:[%s3166 + $0x12] sm:$0xf]
  %v3202 = vld [vmem:[%s3166 + $0x1a] sm:$0xf]
  %v3203 = vld [vmem:[%s3166 + $0x32] sm:$0xf]
  %v3204 = vld [vmem:[%s3166 + $0x3a] sm:$0xf]
  %v3205 = vld [vmem:[%s3166 + $0x42] sm:$0xf]
  %v3206 = vld [vmem:[%s3166 + $0x4a] sm:$0xf]
  %v3207 = vpack.c.bf16 %v3199, %v3199
  %v3208 = vpack.c.bf16 %v3200, %v3200
  %v3209 = vpack.c.bf16 %v3201, %v3201
  %v3210 = vpack.c.bf16 %v3202, %v3202
  %v3211 = vpack.c.bf16 %v3203, %v3203
  %v3212 = vpack.c.bf16 %v3204, %v3204
  %v3213 = vpack.c.bf16 %v3205, %v3205
  %v3214 = vpack.c.bf16 %v3206, %v3206
  %3223 = vrot.lane.b32.xlu0 %v3094, 64
  %v3224 = vpop.permute.xlu0 %3223
  %3225 = vrot.lane.b32.xlu0 %v3095, 64
  %v3226 = vpop.permute.xlu0 %3225
  %3227 = vrot.lane.b32.xlu0 %v3096, 64
  %v3228 = vpop.permute.xlu0 %3227
  %3229 = vrot.lane.b32.xlu0 %v3097, 64
  %v3230 = vpop.permute.xlu0 %3229
  %3231 = vrot.lane.b32.xlu0 %v3098, 64
  %v3232 = vpop.permute.xlu0 %3231
  %3233 = vrot.lane.b32.xlu0 %v3099, 64
  %v3234 = vpop.permute.xlu0 %3233
  %3235 = vrot.lane.b32.xlu0 %v3100, 64
  %v3236 = vpop.permute.xlu0 %3235
  %3237 = vrot.lane.b32.xlu0 %v3101, 64
  %v3238 = vpop.permute.xlu0 %3237
  %3247 = vrot.lane.b32.xlu0 %v3126, 64
  %v3248 = vpop.permute.xlu0 %3247
  %3249 = vrot.lane.b32.xlu0 %v3127, 64
  %v3250 = vpop.permute.xlu0 %3249
  %3251 = vrot.lane.b32.xlu0 %v3128, 64
  %v3252 = vpop.permute.xlu0 %3251
  %3253 = vrot.lane.b32.xlu0 %v3129, 64
  %v3254 = vpop.permute.xlu0 %3253
  %3255 = vrot.lane.b32.xlu0 %v3130, 64
  %v3256 = vpop.permute.xlu0 %3255
  %3257 = vrot.lane.b32.xlu0 %v3131, 64
  %v3258 = vpop.permute.xlu0 %3257
  %3259 = vrot.lane.b32.xlu0 %v3132, 64
  %v3260 = vpop.permute.xlu0 %3259
  %3261 = vrot.lane.b32.xlu0 %v3133, 64
  %v3262 = vpop.permute.xlu0 %3261
  %3271 = vrot.lane.b32.xlu0 %v3158, 64
  %v3272 = vpop.permute.xlu0 %3271
  %3273 = vrot.lane.b32.xlu0 %v3159, 64
  %v3274 = vpop.permute.xlu0 %3273
  %3275 = vrot.lane.b32.xlu0 %v3160, 64
  %v3276 = vpop.permute.xlu0 %3275
  %3277 = vrot.lane.b32.xlu0 %v3161, 64
  %v3278 = vpop.permute.xlu0 %3277
  %3279 = vrot.lane.b32.xlu0 %v3162, 64
  %v3280 = vpop.permute.xlu0 %3279
  %3281 = vrot.lane.b32.xlu0 %v3163, 64
  %v3282 = vpop.permute.xlu0 %3281
  %3283 = vrot.lane.b32.xlu0 %v3164, 64
  %v3284 = vpop.permute.xlu0 %3283
  %3285 = vrot.lane.b32.xlu0 %v3165, 64
  %v3286 = vpop.permute.xlu0 %3285
  %3295 = vrot.lane.b32.xlu0 %v3191, 64
  %v3296 = vpop.permute.xlu0 %3295
  %3297 = vrot.lane.b32.xlu0 %v3192, 64
  %v3298 = vpop.permute.xlu0 %3297
  %3299 = vrot.lane.b32.xlu0 %v3193, 64
  %v3300 = vpop.permute.xlu0 %3299
  %3301 = vrot.lane.b32.xlu0 %v3194, 64
  %v3302 = vpop.permute.xlu0 %3301
  %3303 = vrot.lane.b32.xlu0 %v3195, 64
  %v3304 = vpop.permute.xlu0 %3303
  %3305 = vrot.lane.b32.xlu0 %v3196, 64
  %v3306 = vpop.permute.xlu0 %3305
  %3307 = vrot.lane.b32.xlu0 %v3197, 64
  %v3308 = vpop.permute.xlu0 %3307
  %3309 = vrot.lane.b32.xlu0 %v3198, 64
  %v3310 = vpop.permute.xlu0 %3309
  %v3313 = vsel %vm1910, %v3078, %v3224
  %v3316 = vsel %vm1910, %v3079, %v3226
  %v3319 = vsel %vm1910, %v3080, %v3228
  %v3322 = vsel %vm1910, %v3081, %v3230
  %v3325 = vsel %vm1910, %v3082, %v3232
  %v3328 = vsel %vm1910, %v3083, %v3234
  %v3331 = vsel %vm1910, %v3084, %v3236
  %v3334 = vsel %vm1910, %v3085, %v3238
  %v3337 = vsel %vm1910, %v3110, %v3248
  %v3340 = vsel %vm1910, %v3111, %v3250
  %v3343 = vsel %vm1910, %v3112, %v3252
  %v3346 = vsel %vm1910, %v3113, %v3254
  %v3349 = vsel %vm1910, %v3114, %v3256
  %v3352 = vsel %vm1910, %v3115, %v3258
  %v3355 = vsel %vm1910, %v3116, %v3260
  %v3358 = vsel %vm1910, %v3117, %v3262
  %v3361 = vsel %vm1910, %v3142, %v3272
  %v3364 = vsel %vm1910, %v3143, %v3274
  %v3367 = vsel %vm1910, %v3144, %v3276
  %v3370 = vsel %vm1910, %v3145, %v3278
  %v3373 = vsel %vm1910, %v3146, %v3280
  %v3376 = vsel %vm1910, %v3147, %v3282
  %v3379 = vsel %vm1910, %v3148, %v3284
  %v3382 = vsel %vm1910, %v3149, %v3286
  %v3385 = vsel %vm1910, %v3175, %v3296
  %v3388 = vsel %vm1910, %v3176, %v3298
  %v3391 = vsel %vm1910, %v3177, %v3300
  %v3394 = vsel %vm1910, %v3178, %v3302
  %v3397 = vsel %vm1910, %v3179, %v3304
  %v3400 = vsel %vm1910, %v3180, %v3306
  %v3403 = vsel %vm1910, %v3181, %v3308
  %v3406 = vsel %vm1910, %v3182, %v3310
  %v3447 = vcombine.low %v3313, %v3337
  %v3448 = vcombine.low %v3361, %v3385
  %v3450 = vunpack.c.l.s4 1983009808
  %v3451 = vunpack.c.0.s8 %v3450
  %v3452 = vlaneseq
  %v3453 = vshrl.u32 %v3452, 7
  %v3454 = vsub.s32 %v3451, %v3453
  %v3455 = vrot.slane %v3447, %v3454
  %v3457 = vunpack.c.l.s4 1983009808
  %v3458 = vunpack.c.0.s8 %v3457
  %v3459 = vlaneseq
  %v3460 = vshrl.u32 %v3459, 7
  %v3461 = vsub.s32 %v3458, %v3460
  %v3462 = vrot.slane %v3448, %v3461
  %v3463 = vcombine.low %v3455, %v3462
  %v3465 = vunpack.c.l.s4 1983009808
  %v3466 = vunpack.c.0.s8 %v3465
  %v3467 = vlaneseq
  %v3468 = vshrl.u32 %v3467, 7
  %v3469 = vsub.s32 %v3466, %v3468
  %v3470 = vrot.slane %v3207, %v3469
  %v3471 = vcombine.low %v3316, %v3340
  %v3472 = vcombine.low %v3364, %v3388
  %v3474 = vunpack.c.l.s4 1983009808
  %v3475 = vunpack.c.0.s8 %v3474
  %v3476 = vlaneseq
  %v3477 = vshrl.u32 %v3476, 7
  %v3478 = vsub.s32 %v3475, %v3477
  %v3479 = vrot.slane %v3471, %v3478
  %v3481 = vunpack.c.l.s4 1983009808
  %v3482 = vunpack.c.0.s8 %v3481
  %v3483 = vlaneseq
  %v3484 = vshrl.u32 %v3483, 7
  %v3485 = vsub.s32 %v3482, %v3484
  %v3486 = vrot.slane %v3472, %v3485
  %v3487 = vcombine.low %v3479, %v3486
  %v3489 = vunpack.c.l.s4 1983009808
  %v3490 = vunpack.c.0.s8 %v3489
  %v3491 = vlaneseq
  %v3492 = vshrl.u32 %v3491, 7
  %v3493 = vsub.s32 %v3490, %v3492
  %v3494 = vrot.slane %v3208, %v3493
  %v3495 = vcombine.low %v3319, %v3343
  %v3496 = vcombine.low %v3367, %v3391
  %v3498 = vunpack.c.l.s4 1983009808
  %v3499 = vunpack.c.0.s8 %v3498
  %v3500 = vlaneseq
  %v3501 = vshrl.u32 %v3500, 7
  %v3502 = vsub.s32 %v3499, %v3501
  %v3503 = vrot.slane %v3495, %v3502
  %v3505 = vunpack.c.l.s4 1983009808
  %v3506 = vunpack.c.0.s8 %v3505
  %v3507 = vlaneseq
  %v3508 = vshrl.u32 %v3507, 7
  %v3509 = vsub.s32 %v3506, %v3508
  %v3510 = vrot.slane %v3496, %v3509
  %v3511 = vcombine.low %v3503, %v3510
  %v3513 = vunpack.c.l.s4 1983009808
  %v3514 = vunpack.c.0.s8 %v3513
  %v3515 = vlaneseq
  %v3516 = vshrl.u32 %v3515, 7
  %v3517 = vsub.s32 %v3514, %v3516
  %v3518 = vrot.slane %v3209, %v3517
  %v3519 = vcombine.low %v3322, %v3346
  %v3520 = vcombine.low %v3370, %v3394
  %v3522 = vunpack.c.l.s4 1983009808
  %v3523 = vunpack.c.0.s8 %v3522
  %v3524 = vlaneseq
  %v3525 = vshrl.u32 %v3524, 7
  %v3526 = vsub.s32 %v3523, %v3525
  %v3527 = vrot.slane %v3519, %v3526
  %v3529 = vunpack.c.l.s4 1983009808
  %v3530 = vunpack.c.0.s8 %v3529
  %v3531 = vlaneseq
  %v3532 = vshrl.u32 %v3531, 7
  %v3533 = vsub.s32 %v3530, %v3532
  %v3534 = vrot.slane %v3520, %v3533
  %v3535 = vcombine.low %v3527, %v3534
  %v3537 = vunpack.c.l.s4 1983009808
  %v3538 = vunpack.c.0.s8 %v3537
  %v3539 = vlaneseq
  %v3540 = vshrl.u32 %v3539, 7
  %v3541 = vsub.s32 %v3538, %v3540
  %v3542 = vrot.slane %v3210, %v3541
  %v3543 = vcombine.low %v3325, %v3349
  %v3544 = vcombine.low %v3373, %v3397
  %v3546 = vunpack.c.l.s4 1983009808
  %v3547 = vunpack.c.0.s8 %v3546
  %v3548 = vlaneseq
  %v3549 = vshrl.u32 %v3548, 7
  %v3550 = vsub.s32 %v3547, %v3549
  %v3551 = vrot.slane %v3543, %v3550
  %v3553 = vunpack.c.l.s4 1983009808
  %v3554 = vunpack.c.0.s8 %v3553
  %v3555 = vlaneseq
  %v3556 = vshrl.u32 %v3555, 7
  %v3557 = vsub.s32 %v3554, %v3556
  %v3558 = vrot.slane %v3544, %v3557
  %v3559 = vcombine.low %v3551, %v3558
  %v3561 = vunpack.c.l.s4 1983009808
  %v3562 = vunpack.c.0.s8 %v3561
  %v3563 = vlaneseq
  %v3564 = vshrl.u32 %v3563, 7
  %v3565 = vsub.s32 %v3562, %v3564
  %v3566 = vrot.slane %v3211, %v3565
  %v3567 = vcombine.low %v3328, %v3352
  %v3568 = vcombine.low %v3376, %v3400
  %v3570 = vunpack.c.l.s4 1983009808
  %v3571 = vunpack.c.0.s8 %v3570
  %v3572 = vlaneseq
  %v3573 = vshrl.u32 %v3572, 7
  %v3574 = vsub.s32 %v3571, %v3573
  %v3575 = vrot.slane %v3567, %v3574
  %v3577 = vunpack.c.l.s4 1983009808
  %v3578 = vunpack.c.0.s8 %v3577
  %v3579 = vlaneseq
  %v3580 = vshrl.u32 %v3579, 7
  %v3581 = vsub.s32 %v3578, %v3580
  %v3582 = vrot.slane %v3568, %v3581
  %v3583 = vcombine.low %v3575, %v3582
  %v3585 = vunpack.c.l.s4 1983009808
  %v3586 = vunpack.c.0.s8 %v3585
  %v3587 = vlaneseq
  %v3588 = vshrl.u32 %v3587, 7
  %v3589 = vsub.s32 %v3586, %v3588
  %v3590 = vrot.slane %v3212, %v3589
  %v3591 = vcombine.low %v3331, %v3355
  %v3592 = vcombine.low %v3379, %v3403
  %v3594 = vunpack.c.l.s4 1983009808
  %v3595 = vunpack.c.0.s8 %v3594
  %v3596 = vlaneseq
  %v3597 = vshrl.u32 %v3596, 7
  %v3598 = vsub.s32 %v3595, %v3597
  %v3599 = vrot.slane %v3591, %v3598
  %v3601 = vunpack.c.l.s4 1983009808
  %v3602 = vunpack.c.0.s8 %v3601
  %v3603 = vlaneseq
  %v3604 = vshrl.u32 %v3603, 7
  %v3605 = vsub.s32 %v3602, %v3604
  %v3606 = vrot.slane %v3592, %v3605
  %v3607 = vcombine.low %v3599, %v3606
  %v3609 = vunpack.c.l.s4 1983009808
  %v3610 = vunpack.c.0.s8 %v3609
  %v3611 = vlaneseq
  %v3612 = vshrl.u32 %v3611, 7
  %v3613 = vsub.s32 %v3610, %v3612
  %v3614 = vrot.slane %v3213, %v3613
  %v3615 = vcombine.low %v3334, %v3358
  %v3616 = vcombine.low %v3382, %v3406
  %v3618 = vunpack.c.l.s4 1983009808
  %v3619 = vunpack.c.0.s8 %v3618
  %v3620 = vlaneseq
  %v3621 = vshrl.u32 %v3620, 7
  %v3622 = vsub.s32 %v3619, %v3621
  %v3623 = vrot.slane %v3615, %v3622
  %v3625 = vunpack.c.l.s4 1983009808
  %v3626 = vunpack.c.0.s8 %v3625
  %v3627 = vlaneseq
  %v3628 = vshrl.u32 %v3627, 7
  %v3629 = vsub.s32 %v3626, %v3628
  %v3630 = vrot.slane %v3616, %v3629
  %v3631 = vcombine.low %v3623, %v3630
  %v3633 = vunpack.c.l.s4 1983009808
  %v3634 = vunpack.c.0.s8 %v3633
  %v3635 = vlaneseq
  %v3636 = vshrl.u32 %v3635, 7
  %v3637 = vsub.s32 %v3634, %v3636
  %v3638 = vrot.slane %v3214, %v3637
  %v3639 = vld [vmem:[%s5] sm:$0xf]
  %v3640 = vld [vmem:[%s5 + $0x4] sm:$0xf]
  %v3641 = vld [vmem:[%s5 + $0x8] sm:$0xf]
  %v3642 = vld [vmem:[%s5 + $0xc] sm:$0xf]
  %v3643 = vld [vmem:[%s5 + $0x10] sm:$0xf]
  %v3644 = vld [vmem:[%s5 + $0x14] sm:$0xf]
  %v3645 = vld [vmem:[%s5 + $0x18] sm:$0xf]
  %v3646 = vld [vmem:[%s5 + $0x1c] sm:$0xf]
  %v3647 = vld [vmem:[%s5 + $0x20] sm:$0xf]
  %v3648 = vld [vmem:[%s5 + $0x24] sm:$0xf]
  %v3649 = vld [vmem:[%s5 + $0x28] sm:$0xf]
  %v3650 = vld [vmem:[%s5 + $0x2c] sm:$0xf]
  %v3651 = vld [vmem:[%s5 + $0x30] sm:$0xf]
  %v3652 = vld [vmem:[%s5 + $0x34] sm:$0xf]
  %v3653 = vld [vmem:[%s5 + $0x38] sm:$0xf]
  %v3654 = vld [vmem:[%s5 + $0x3c] sm:$0xf]
  %v3655 = vld [vmem:[%s5 + $0x40] sm:$0xf]
  %v3656 = vld [vmem:[%s5 + $0x44] sm:$0xf]
  %v3657 = vld [vmem:[%s5 + $0x48] sm:$0xf]
  %v3658 = vld [vmem:[%s5 + $0x4c] sm:$0xf]
  %v3659 = vld [vmem:[%s5 + $0x50] sm:$0xf]
  %v3660 = vld [vmem:[%s5 + $0x54] sm:$0xf]
  %v3661 = vld [vmem:[%s5 + $0x58] sm:$0xf]
  %v3662 = vld [vmem:[%s5 + $0x5c] sm:$0xf]
  %v3663 = vld [vmem:[%s5 + $0x60] sm:$0xf]
  %v3664 = vld [vmem:[%s5 + $0x64] sm:$0xf]
  %v3665 = vld [vmem:[%s5 + $0x68] sm:$0xf]
  %v3666 = vld [vmem:[%s5 + $0x6c] sm:$0xf]
  %v3667 = vld [vmem:[%s5 + $0x70] sm:$0xf]
  %v3668 = vld [vmem:[%s5 + $0x74] sm:$0xf]
  %v3669 = vld [vmem:[%s5 + $0x78] sm:$0xf]
  %v3670 = vld [vmem:[%s5 + $0x7c] sm:$0xf]
  %v3671 = vld [vmem:[%s5 + $0x80] sm:$0xf]
  %v3672 = vld [vmem:[%s5 + $0x84] sm:$0xf]
  %v3673 = vld [vmem:[%s5 + $0x88] sm:$0xf]
  %v3674 = vld [vmem:[%s5 + $0x8c] sm:$0xf]
  %v3675 = vld [vmem:[%s5 + $0x90] sm:$0xf]
  %v3676 = vld [vmem:[%s5 + $0x94] sm:$0xf]
  %v3677 = vld [vmem:[%s5 + $0x98] sm:$0xf]
  %v3678 = vld [vmem:[%s5 + $0x9c] sm:$0xf]
  %v3679 = vld [vmem:[%s5 + $0xa0] sm:$0xf]
  %v3680 = vld [vmem:[%s5 + $0xa4] sm:$0xf]
  %v3681 = vld [vmem:[%s5 + $0xa8] sm:$0xf]
  %v3682 = vld [vmem:[%s5 + $0xac] sm:$0xf]
  %v3683 = vld [vmem:[%s5 + $0xb0] sm:$0xf]
  %v3684 = vld [vmem:[%s5 + $0xb4] sm:$0xf]
  %v3685 = vld [vmem:[%s5 + $0xb8] sm:$0xf]
  %v3686 = vld [vmem:[%s5 + $0xbc] sm:$0xf]
  %v3687 = vld [vmem:[%s5 + $0xc0] sm:$0xf]
  %v3688 = vld [vmem:[%s5 + $0xc4] sm:$0xf]
  %v3689 = vld [vmem:[%s5 + $0xc8] sm:$0xf]
  %v3690 = vld [vmem:[%s5 + $0xcc] sm:$0xf]
  %v3691 = vld [vmem:[%s5 + $0xd0] sm:$0xf]
  %v3692 = vld [vmem:[%s5 + $0xd4] sm:$0xf]
  %v3693 = vld [vmem:[%s5 + $0xd8] sm:$0xf]
  %v3694 = vld [vmem:[%s5 + $0xdc] sm:$0xf]
  %v3695 = vld [vmem:[%s5 + $0xe0] sm:$0xf]
  %v3696 = vld [vmem:[%s5 + $0xe4] sm:$0xf]
  %v3697 = vld [vmem:[%s5 + $0xe8] sm:$0xf]
  %v3698 = vld [vmem:[%s5 + $0xec] sm:$0xf]
  %v3699 = vld [vmem:[%s5 + $0xf0] sm:$0xf]
  %v3700 = vld [vmem:[%s5 + $0xf4] sm:$0xf]
  %v3701 = vld [vmem:[%s5 + $0xf8] sm:$0xf]
  %v3702 = vld [vmem:[%s5 + $0xfc] sm:$0xf]
  %v3703 = vld [vmem:[%s5 + $0x100] sm:$0xf]
  %v3704 = vld [vmem:[%s5 + $0x104] sm:$0xf]
  %v3705 = vld [vmem:[%s5 + $0x108] sm:$0xf]
  %v3706 = vld [vmem:[%s5 + $0x10c] sm:$0xf]
  %v3707 = vld [vmem:[%s5 + $0x110] sm:$0xf]
  %v3708 = vld [vmem:[%s5 + $0x114] sm:$0xf]
  %v3709 = vld [vmem:[%s5 + $0x118] sm:$0xf]
  %v3710 = vld [vmem:[%s5 + $0x11c] sm:$0xf]
  %v3711 = vld [vmem:[%s6] sm:$0x1]
  %v3713 = vlaneseq
  %v3714 = vshrl.u32 %v3713, 7
  %v3715 = vsub.s32 0, %v3714
  %v3716 = vrot.slane %v3711, %v3715
  %v3718 = vcombine.low %v3463, %v3487
  %v3719 = vcombine.high %v3463, %v3487
  %v3720 = vcombine.low %v3511, %v3535
  %v3721 = vcombine.high %v3511, %v3535
  %v3723 = vunpack.c.l.s4 1983009808
  %v3724 = vunpack.c.0.s8 %v3723
  %v3725 = vlaneseq
  %v3726 = vshrl.u32 %v3725, 7
  %v3727 = vsub.s32 %v3724, %v3726
  %v3728 = vrot.slane %v3718, %v3727
  %v3730 = vunpack.c.l.s4 1983009808
  %v3731 = vunpack.c.0.s8 %v3730
  %v3732 = vlaneseq
  %v3733 = vshrl.u32 %v3732, 7
  %v3734 = vsub.s32 %v3731, %v3733
  %v3735 = vrot.slane %v3719, %v3734
  %v3737 = vunpack.c.l.s4 1983009808
  %v3738 = vunpack.c.0.s8 %v3737
  %v3739 = vlaneseq
  %v3740 = vshrl.u32 %v3739, 7
  %v3741 = vsub.s32 %v3738, %v3740
  %v3742 = vrot.slane %v3720, %v3741
  %v3744 = vunpack.c.l.s4 1983009808
  %v3745 = vunpack.c.0.s8 %v3744
  %v3746 = vlaneseq
  %v3747 = vshrl.u32 %v3746, 7
  %v3748 = vsub.s32 %v3745, %v3747
  %v3749 = vrot.slane %v3721, %v3748
  %v3750 = vcombine.low %v3728, %v3742
  %v3751 = vcombine.high %v3728, %v3742
  %v3752 = vcombine.low %v3735, %v3749
  %v3753 = vcombine.high %v3735, %v3749
  %v3754 = vcombine.low %v3470, %v3494
  %v3755 = vcombine.low %v3518, %v3542
  %v3757 = vunpack.c.l.s4 1983009808
  %v3758 = vunpack.c.0.s8 %v3757
  %v3759 = vlaneseq
  %v3760 = vshrl.u32 %v3759, 7
  %v3761 = vsub.s32 %v3758, %v3760
  %v3762 = vrot.slane %v3754, %v3761
  %v3764 = vunpack.c.l.s4 1983009808
  %v3765 = vunpack.c.0.s8 %v3764
  %v3766 = vlaneseq
  %v3767 = vshrl.u32 %v3766, 7
  %v3768 = vsub.s32 %v3765, %v3767
  %v3769 = vrot.slane %v3755, %v3768
  %v3770 = vcombine.low %v3762, %v3769
  %v3771 = vcombine.low %v3559, %v3583
  %v3772 = vcombine.high %v3559, %v3583
  %v3773 = vcombine.low %v3607, %v3631
  %v3774 = vcombine.high %v3607, %v3631
  %v3776 = vunpack.c.l.s4 1983009808
  %v3777 = vunpack.c.0.s8 %v3776
  %v3778 = vlaneseq
  %v3779 = vshrl.u32 %v3778, 7
  %v3780 = vsub.s32 %v3777, %v3779
  %v3781 = vrot.slane %v3771, %v3780
  %v3783 = vunpack.c.l.s4 1983009808
  %v3784 = vunpack.c.0.s8 %v3783
  %v3785 = vlaneseq
  %v3786 = vshrl.u32 %v3785, 7
  %v3787 = vsub.s32 %v3784, %v3786
  %v3788 = vrot.slane %v3772, %v3787
  %v3790 = vunpack.c.l.s4 1983009808
  %v3791 = vunpack.c.0.s8 %v3790
  %v3792 = vlaneseq
  %v3793 = vshrl.u32 %v3792, 7
  %v3794 = vsub.s32 %v3791, %v3793
  %v3795 = vrot.slane %v3773, %v3794
  %v3797 = vunpack.c.l.s4 1983009808
  %v3798 = vunpack.c.0.s8 %v3797
  %v3799 = vlaneseq
  %v3800 = vshrl.u32 %v3799, 7
  %v3801 = vsub.s32 %v3798, %v3800
  %v3802 = vrot.slane %v3774, %v3801
  %v3803 = vcombine.low %v3781, %v3795
  %v3804 = vcombine.high %v3781, %v3795
  %v3805 = vcombine.low %v3788, %v3802
  %v3806 = vcombine.high %v3788, %v3802
  %v3807 = vcombine.low %v3566, %v3590
  %v3808 = vcombine.low %v3614, %v3638
  %v3810 = vunpack.c.l.s4 1983009808
  %v3811 = vunpack.c.0.s8 %v3810
  %v3812 = vlaneseq
  %v3813 = vshrl.u32 %v3812, 7
  %v3814 = vsub.s32 %v3811, %v3813
  %v3815 = vrot.slane %v3807, %v3814
  %v3817 = vunpack.c.l.s4 1983009808
  %v3818 = vunpack.c.0.s8 %v3817
  %v3819 = vlaneseq
  %v3820 = vshrl.u32 %v3819, 7
  %v3821 = vsub.s32 %v3818, %v3820
  %v3822 = vrot.slane %v3808, %v3821
  %v3823 = vcombine.low %v3815, %v3822
  %v3904 = vunpack.c.l.b16 %v3639
  %v3905 = vunpack.c.l.b16 %v3640
  %v3906 = vunpack.c.l.b16 %v3641
  %v3907 = vunpack.c.l.b16 %v3642
  %v3908 = vunpack.c.l.b16 %v3643
  %v3909 = vunpack.c.l.b16 %v3644
  %v3910 = vunpack.c.l.b16 %v3645
  %v3911 = vunpack.c.l.b16 %v3646
  %v3912 = vunpack.c.l.b16 %v3647
  %v3913 = vunpack.c.l.b16 %v3648
  %v3914 = vunpack.c.l.b16 %v3649
  %v3915 = vunpack.c.l.b16 %v3650
  %v3916 = vunpack.c.l.b16 %v3651
  %v3917 = vunpack.c.l.b16 %v3652
  %v3918 = vunpack.c.l.b16 %v3653
  %v3919 = vunpack.c.l.b16 %v3654
  %v3920 = vunpack.c.l.b16 %v3655
  %v3921 = vunpack.c.l.b16 %v3656
  %v3922 = vunpack.c.l.b16 %v3657
  %v3923 = vunpack.c.l.b16 %v3658
  %v3924 = vunpack.c.l.b16 %v3659
  %v3925 = vunpack.c.l.b16 %v3660
  %v3926 = vunpack.c.l.b16 %v3661
  %v3927 = vunpack.c.l.b16 %v3662
  %v3928 = vunpack.c.l.b16 %v3663
  %v3929 = vunpack.c.l.b16 %v3664
  %v3930 = vunpack.c.l.b16 %v3665
  %v3931 = vunpack.c.l.b16 %v3666
  %v3932 = vunpack.c.l.b16 %v3667
  %v3933 = vunpack.c.l.b16 %v3668
  %v3934 = vunpack.c.l.b16 %v3669
  %v3935 = vunpack.c.l.b16 %v3670
  %v3936 = vunpack.c.l.b16 %v3671
  %v3937 = vunpack.c.l.b16 %v3672
  %v3938 = vunpack.c.l.b16 %v3673
  %v3939 = vunpack.c.l.b16 %v3674
  %v3940 = vunpack.c.l.b16 %v3675
  %v3941 = vunpack.c.l.b16 %v3676
  %v3942 = vunpack.c.l.b16 %v3677
  %v3943 = vunpack.c.l.b16 %v3678
  %v3944 = vunpack.c.l.b16 %v3679
  %v3945 = vunpack.c.l.b16 %v3680
  %v3946 = vunpack.c.l.b16 %v3681
  %v3947 = vunpack.c.l.b16 %v3682
  %v3948 = vunpack.c.l.b16 %v3683
  %v3949 = vunpack.c.l.b16 %v3684
  %v3950 = vunpack.c.l.b16 %v3685
  %v3951 = vunpack.c.l.b16 %v3686
  %v3952 = vunpack.c.l.b16 %v3687
  %v3953 = vunpack.c.l.b16 %v3688
  %v3954 = vunpack.c.l.b16 %v3689
  %v3955 = vunpack.c.l.b16 %v3690
  %v3956 = vunpack.c.l.b16 %v3691
  %v3957 = vunpack.c.l.b16 %v3692
  %v3958 = vunpack.c.l.b16 %v3693
  %v3959 = vunpack.c.l.b16 %v3694
  %v3960 = vunpack.c.l.b16 %v3695
  %v3961 = vunpack.c.l.b16 %v3696
  %v3962 = vunpack.c.l.b16 %v3697
  %v3963 = vunpack.c.l.b16 %v3698
  %v3964 = vunpack.c.l.b16 %v3699
  %v3965 = vunpack.c.l.b16 %v3700
  %v3966 = vunpack.c.l.b16 %v3701
  %v3967 = vunpack.c.l.b16 %v3702
  %v3968 = vunpack.c.l.b16 %v3703
  %v3969 = vunpack.c.l.b16 %v3704
  %v3970 = vunpack.c.l.b16 %v3705
  %v3971 = vunpack.c.l.b16 %v3706
  %v3972 = vunpack.c.l.b16 %v3707
  %v3973 = vunpack.c.l.b16 %v3708
  %v3974 = vunpack.c.l.b16 %v3709
  %v3975 = vunpack.c.l.b16 %v3710
  %v3976 = vpack.c.b16 %v3905, %v3904
  %v3977 = vpack.c.b16 %v3907, %v3906
  %v3978 = vpack.c.b16 %v3909, %v3908
  %v3979 = vpack.c.b16 %v3911, %v3910
  %v3980 = vpack.c.b16 %v3913, %v3912
  %v3981 = vpack.c.b16 %v3915, %v3914
  %v3982 = vpack.c.b16 %v3917, %v3916
  %v3983 = vpack.c.b16 %v3919, %v3918
  %v3984 = vpack.c.b16 %v3921, %v3920
  %v3985 = vpack.c.b16 %v3923, %v3922
  %v3986 = vpack.c.b16 %v3925, %v3924
  %v3987 = vpack.c.b16 %v3927, %v3926
  %v3988 = vpack.c.b16 %v3929, %v3928
  %v3989 = vpack.c.b16 %v3931, %v3930
  %v3990 = vpack.c.b16 %v3933, %v3932
  %v3991 = vpack.c.b16 %v3935, %v3934
  %v3992 = vpack.c.b16 %v3937, %v3936
  %v3993 = vpack.c.b16 %v3939, %v3938
  %v3994 = vpack.c.b16 %v3941, %v3940
  %v3995 = vpack.c.b16 %v3943, %v3942
  %v3996 = vpack.c.b16 %v3945, %v3944
  %v3997 = vpack.c.b16 %v3947, %v3946
  %v3998 = vpack.c.b16 %v3949, %v3948
  %v3999 = vpack.c.b16 %v3951, %v3950
  %v4000 = vpack.c.b16 %v3953, %v3952
  %v4001 = vpack.c.b16 %v3955, %v3954
  %v4002 = vpack.c.b16 %v3957, %v3956
  %v4003 = vpack.c.b16 %v3959, %v3958
  %v4004 = vpack.c.b16 %v3961, %v3960
  %v4005 = vpack.c.b16 %v3963, %v3962
  %v4006 = vpack.c.b16 %v3965, %v3964
  %v4007 = vpack.c.b16 %v3967, %v3966
  %v4008 = vpack.c.b16 %v3969, %v3968
  %v4009 = vpack.c.b16 %v3971, %v3970
  %v4010 = vpack.c.b16 %v3973, %v3972
  %v4011 = vpack.c.b16 %v3975, %v3974
  %v4049 = vsel %vm1910, %v3770, 0
  %v4052 = vsel %vm1910, %v3823, 0
  %4054 = vmatprep.subr.bf16.mxu0 0
  %4055 = vmatpush1.bf16.msra.mxu0 %v3983
  %4056 = vmatprep.subr.bf16.mxu0 0
  %4057 = vmatpush1.bf16.msra.mxu0 %v3982
  %4058 = vmatprep.subr.bf16.mxu0 0
  %4059 = vmatpush1.bf16.msra.mxu0 %v3981
  %4060 = vmatprep.subr.bf16.mxu0 0
  %4061 = vmatpush1.bf16.msra.mxu0 %v3980
  %4062 = vmatprep.subr.bf16.mxu0 0
  %4063 = vmatpush1.bf16.msra.mxu0 %v3979
  %4064 = vmatprep.subr.bf16.mxu0 0
  %4065 = vmatpush1.bf16.msra.mxu0 %v3978
  %4066 = vmatprep.subr.bf16.mxu0 0
  %4067 = vmatpush1.bf16.msra.mxu0 %v3977
  %4068 = vmatprep.subr.bf16.mxu0 0
  %4069 = vmatpush1.bf16.msra.mxu0 %v3976
  %4070 = vmatprep.subr.bf16.mxu0 0
  %4071 = vmatpush2.bf16.msra.mxu0 %v3991
  %4072 = vmatprep.subr.bf16.mxu0 0
  %4073 = vmatpush2.bf16.msra.mxu0 %v3990
  %4074 = vmatprep.subr.bf16.mxu0 0
  %4075 = vmatpush2.bf16.msra.mxu0 %v3989
  %4076 = vmatprep.subr.bf16.mxu0 0
  %4077 = vmatpush2.bf16.msra.mxu0 %v3988
  %4078 = vmatprep.subr.bf16.mxu0 0
  %4079 = vmatpush2.bf16.msra.mxu0 %v3987
  %4080 = vmatprep.subr.bf16.mxu0 0
  %4081 = vmatpush2.bf16.msra.mxu0 %v3986
  %4082 = vmatprep.subr.bf16.mxu0 0
  %4083 = vmatpush2.bf16.msra.mxu0 %v3985
  %4084 = vmatprep.subr.bf16.mxu0 0
  %4085 = vmatpush2.bf16.msra.mxu0 %v3984
  %4086 = vmatprep.mubr.bf16.mxu0 %v3751
  %4087 = vmatmul.mubr.bf16.gmra.mxu0 %v3750
  %v4088 = vpop.f32.mrf.mxu0
  %v4089 = vadd.f32 %v3716, %v4088
  %v4090 = vpop.f32.mrf.mxu0
  %v4091 = vpop.f32.mrf.mxu0
  %v4092 = vadd.f32 %v3716, %v4091
  %v4093 = vpop.f32.mrf.mxu0
  %4094 = vmatprep.mubr.bf16.mxu0 %v3804
  %4095 = vmatmul.mubr.bf16.gmra.mxu0 %v3803
  %v4096 = vpop.f32.mrf.mxu0
  %v4097 = vadd.f32 %v3716, %v4096
  %v4098 = vpop.f32.mrf.mxu0
  %v4099 = vpop.f32.mrf.mxu0
  %v4100 = vadd.f32 %v3716, %v4099
  %v4101 = vpop.f32.mrf.mxu0
  %4102 = vdwg.mxu0
  %4103 = vmatprep.subr.bf16.mxu0 0
  %4104 = vmatpush1.bf16.msra.mxu0 %v3999
  %4105 = vmatprep.subr.bf16.mxu0 0
  %4106 = vmatpush1.bf16.msra.mxu0 %v3998
  %4107 = vmatprep.subr.bf16.mxu0 0
  %4108 = vmatpush1.bf16.msra.mxu0 %v3997
  %4109 = vmatprep.subr.bf16.mxu0 0
  %4110 = vmatpush1.bf16.msra.mxu0 %v3996
  %4111 = vmatprep.subr.bf16.mxu0 0
  %4112 = vmatpush1.bf16.msra.mxu0 %v3995
  %4113 = vmatprep.subr.bf16.mxu0 0
  %4114 = vmatpush1.bf16.msra.mxu0 %v3994
  %4115 = vmatprep.subr.bf16.mxu0 0
  %4116 = vmatpush1.bf16.msra.mxu0 %v3993
  %4117 = vmatprep.subr.bf16.mxu0 0
  %4118 = vmatpush1.bf16.msra.mxu0 %v3992
  %4119 = vmatprep.subr.bf16.mxu0 0
  %4120 = vmatpush2.bf16.msra.mxu0 %v4007
  %4121 = vmatprep.subr.bf16.mxu0 0
  %4122 = vmatpush2.bf16.msra.mxu0 %v4006
  %4123 = vmatprep.subr.bf16.mxu0 0
  %4124 = vmatpush2.bf16.msra.mxu0 %v4005
  %4125 = vmatprep.subr.bf16.mxu0 0
  %4126 = vmatpush2.bf16.msra.mxu0 %v4004
  %4127 = vmatprep.subr.bf16.mxu0 0
  %4128 = vmatpush2.bf16.msra.mxu0 %v4003
  %4129 = vmatprep.subr.bf16.mxu0 0
  %4130 = vmatpush2.bf16.msra.mxu0 %v4002
  %4131 = vmatprep.subr.bf16.mxu0 0
  %4132 = vmatpush2.bf16.msra.mxu0 %v4001
  %4133 = vmatprep.subr.bf16.mxu0 0
  %4134 = vmatpush2.bf16.msra.mxu0 %v4000
  %4135 = vmatprep.mubr.bf16.mxu0 %v3753
  %4136 = vmatmul.mubr.bf16.gmra.mxu0 %v3752
  %v4137 = vpop.f32.mrf.mxu0
  %v4138 = vadd.f32 %v4089, %v4137
  %v4139 = vpop.f32.mrf.mxu0
  %v4140 = vpop.f32.mrf.mxu0
  %v4141 = vadd.f32 %v4092, %v4140
  %v4142 = vpop.f32.mrf.mxu0
  %4143 = vmatprep.mubr.bf16.mxu0 %v3806
  %4144 = vmatmul.mubr.bf16.gmra.mxu0 %v3805
  %v4145 = vpop.f32.mrf.mxu0
  %v4146 = vadd.f32 %v4097, %v4145
  %v4147 = vpop.f32.mrf.mxu0
  %v4148 = vpop.f32.mrf.mxu0
  %v4149 = vadd.f32 %v4100, %v4148
  %v4150 = vpop.f32.mrf.mxu0
  %4151 = vdwg.mxu0
  %4152 = vmatprep.subr.bf16.mxu0 0
  %4153 = vmatpush1.bf16.msra.mxu0 0
  %4154 = vmatprep.subr.bf16.mxu0 0
  %4155 = vmatpush1.bf16.msra.mxu0 0
  %4156 = vmatprep.subr.bf16.mxu0 0
  %4157 = vmatpush1.bf16.msra.mxu0 0
  %4158 = vmatprep.subr.bf16.mxu0 0
  %4159 = vmatpush1.bf16.msra.mxu0 0
  %4160 = vmatprep.subr.bf16.mxu0 0
  %4161 = vmatpush1.bf16.msra.mxu0 %v4011
  %4162 = vmatprep.subr.bf16.mxu0 0
  %4163 = vmatpush1.bf16.msra.mxu0 %v4010
  %4164 = vmatprep.subr.bf16.mxu0 0
  %4165 = vmatpush1.bf16.msra.mxu0 %v4009
  %4166 = vmatprep.subr.bf16.mxu0 0
  %4167 = vmatpush1.bf16.msra.mxu0 %v4008
  %4168 = vmatprep.subr.bf16.mxu0 0
  %4169 = vmatpush2.bf16.msra.mxu0 0
  %4170 = vmatprep.subr.bf16.mxu0 0
  %4171 = vmatpush2.bf16.msra.mxu0 0
  %4172 = vmatprep.subr.bf16.mxu0 0
  %4173 = vmatpush2.bf16.msra.mxu0 0
  %4174 = vmatprep.subr.bf16.mxu0 0
  %4175 = vmatpush2.bf16.msra.mxu0 0
  %4176 = vmatprep.subr.bf16.mxu0 0
  %4177 = vmatpush2.bf16.msra.mxu0 0
  %4178 = vmatprep.subr.bf16.mxu0 0
  %4179 = vmatpush2.bf16.msra.mxu0 0
  %4180 = vmatprep.subr.bf16.mxu0 0
  %4181 = vmatpush2.bf16.msra.mxu0 0
  %4182 = vmatprep.subr.bf16.mxu0 0
  %4183 = vmatpush2.bf16.msra.mxu0 0
  %4184 = vmatprep.mubr.bf16.mxu0 0
  %4185 = vmatmul.mubr.bf16.gmra.mxu0 %v4049
  %v4186 = vpop.f32.mrf.mxu0
  %v4187 = vadd.f32 %v4138, %v4186
  %v4188 = vpop.f32.mrf.mxu0
  %v4189 = vpop.f32.mrf.mxu0
  %v4190 = vadd.f32 %v4141, %v4189
  %v4191 = vpop.f32.mrf.mxu0
  %4192 = vmatprep.mubr.bf16.mxu0 0
  %4193 = vmatmul.mubr.bf16.gmra.mxu0 %v4052
  %v4194 = vpop.f32.mrf.mxu0
  %v4195 = vadd.f32 %v4146, %v4194
  %v4196 = vpop.f32.mrf.mxu0
  %v4197 = vpop.f32.mrf.mxu0
  %v4198 = vadd.f32 %v4149, %v4197
  %v4199 = vpop.f32.mrf.mxu0
  %4200 = vdwg.mxu0
  %v4201 = vsel %vm1910, %v4187, 0.0
  %v4202 = vsel %vm1910, %v4190, 0.0
  %v4203 = vadd.f32 %v4201, %v4202
  %v4204 = vsel %vm1910, %v4195, 0.0
  %v4205 = vadd.f32 %v4203, %v4204
  %v4206 = vsel %vm1910, %v4198, 0.0
  %v4207 = vadd.f32 %v4205, %v4206
  %v4208 = vrot.slane %v4207, 4
  %v4209 = vadd.f32 %v4207, %v4208
  %v4210 = vrot.slane %v4209, 2
  %v4211 = vadd.f32 %v4209, %v4210
  %v4212 = vrot.slane %v4211, 1
  %v4213 = vadd.f32 %v4211, %v4212
  %v4214 = vrcp.pop 32.0
  %v4215 = vmul.f32 %v4213, %v4214
  %v4216 = vmul.f32 %v4187, %v4187
  %v4217 = vmul.f32 %v4190, %v4190
  %v4218 = vmul.f32 %v4195, %v4195
  %v4219 = vmul.f32 %v4198, %v4198
  %v4220 = vsel %vm1910, %v4216, 0.0
  %v4221 = vsel %vm1910, %v4217, 0.0
  %v4222 = vadd.f32 %v4220, %v4221
  %v4223 = vsel %vm1910, %v4218, 0.0
  %v4224 = vadd.f32 %v4222, %v4223
  %v4225 = vsel %vm1910, %v4219, 0.0
  %v4226 = vadd.f32 %v4224, %v4225
  %v4227 = vrot.slane %v4226, 4
  %v4228 = vadd.f32 %v4226, %v4227
  %v4229 = vrot.slane %v4228, 2
  %v4230 = vadd.f32 %v4228, %v4229
  %v4231 = vrot.slane %v4230, 1
  %v4232 = vadd.f32 %v4230, %v4231
  %v4233 = vmul.f32 %v4232, %v4214
  %v4234 = vmul.f32 %v4215, %v4215
  %v4235 = vsub.f32 %v4233, %v4234
  %v4236 = vld [vmem:[%s7] sm:$0x1]
  %v4237 = vadd.f32 %v4235, 1e-05
  %v4238 = vrsqrt.pop %v4237
  %v4239 = vmul.f32 %v4236, %v4238
  %v4240 = vld [vmem:[%s8] sm:$0x1]
  %v4241 = vmul.f32 %v4215, %v4239
  %v4242 = vsub.f32 %v4240, %v4241
  %v4244 = vlaneseq
  %v4245 = vshrl.u32 %v4244, 7
  %v4246 = vsub.s32 0, %v4245
  %v4247 = vrot.slane %v4239, %v4246
  %v4249 = vmul.f32 %v4187, %v4247
  %v4250 = vmul.f32 %v4190, %v4247
  %v4251 = vmul.f32 %v4195, %v4247
  %v4252 = vmul.f32 %v4198, %v4247
  %v4254 = vlaneseq
  %v4255 = vshrl.u32 %v4254, 7
  %v4256 = vsub.s32 0, %v4255
  %v4257 = vrot.slane %v4242, %v4256
  %v4259 = vadd.f32 %v4249, %v4257
  %v4260 = vadd.f32 %v4250, %v4257
  %v4261 = vadd.f32 %v4251, %v4257
  %v4262 = vadd.f32 %v4252, %v4257
  %v4263 = vmax.f32 %v4259, 0.0
  %v4264 = vmax.f32 %v4260, 0.0
  %v4265 = vmax.f32 %v4261, 0.0
  %v4266 = vmax.f32 %v4262, 0.0
  %v4271 = vcombine.high %v4263, %v4263
  %v4273 = vunpack.c.l.s4 1983009808
  %v4274 = vunpack.c.0.s8 %v4273
  %v4275 = vlaneseq
  %v4276 = vshrl.u32 %v4275, 7
  %v4277 = vsub.s32 %v4274, %v4276
  %v4278 = vrot.slane %v4263, %v4277
  %v4280 = vunpack.c.l.s4 1983009808
  %v4281 = vunpack.c.0.s8 %v4280
  %v4282 = vlaneseq
  %v4283 = vshrl.u32 %v4282, 7
  %v4284 = vsub.s32 %v4281, %v4283
  %v4285 = vrot.slane %v4271, %v4284
  %v4286 = vcombine.high %v4278, %v4278
  %v4287 = vcombine.high %v4285, %v4285
  %v4288 = vcombine.high %v4264, %v4264
  %v4290 = vunpack.c.l.s4 1983009808
  %v4291 = vunpack.c.0.s8 %v4290
  %v4292 = vlaneseq
  %v4293 = vshrl.u32 %v4292, 7
  %v4294 = vsub.s32 %v4291, %v4293
  %v4295 = vrot.slane %v4264, %v4294
  %v4297 = vunpack.c.l.s4 1983009808
  %v4298 = vunpack.c.0.s8 %v4297
  %v4299 = vlaneseq
  %v4300 = vshrl.u32 %v4299, 7
  %v4301 = vsub.s32 %v4298, %v4300
  %v4302 = vrot.slane %v4288, %v4301
  %v4303 = vcombine.high %v4295, %v4295
  %v4304 = vcombine.high %v4302, %v4302
  %v4305 = vcombine.high %v4265, %v4265
  %v4307 = vunpack.c.l.s4 1983009808
  %v4308 = vunpack.c.0.s8 %v4307
  %v4309 = vlaneseq
  %v4310 = vshrl.u32 %v4309, 7
  %v4311 = vsub.s32 %v4308, %v4310
  %v4312 = vrot.slane %v4265, %v4311
  %v4314 = vunpack.c.l.s4 1983009808
  %v4315 = vunpack.c.0.s8 %v4314
  %v4316 = vlaneseq
  %v4317 = vshrl.u32 %v4316, 7
  %v4318 = vsub.s32 %v4315, %v4317
  %v4319 = vrot.slane %v4305, %v4318
  %v4320 = vcombine.high %v4312, %v4312
  %v4321 = vcombine.high %v4319, %v4319
  %v4322 = vcombine.high %v4266, %v4266
  %v4324 = vunpack.c.l.s4 1983009808
  %v4325 = vunpack.c.0.s8 %v4324
  %v4326 = vlaneseq
  %v4327 = vshrl.u32 %v4326, 7
  %v4328 = vsub.s32 %v4325, %v4327
  %v4329 = vrot.slane %v4266, %v4328
  %v4331 = vunpack.c.l.s4 1983009808
  %v4332 = vunpack.c.0.s8 %v4331
  %v4333 = vlaneseq
  %v4334 = vshrl.u32 %v4333, 7
  %v4335 = vsub.s32 %v4332, %v4334
  %v4336 = vrot.slane %v4322, %v4335
  %v4337 = vcombine.high %v4329, %v4329
  %v4338 = vcombine.high %v4336, %v4336
  %v4355 = vsel %vm2425, %v4278, -inf
  %v4356 = vrot.slane %v4355, 4
  %v4357 = vmax.f32 %v4355, %v4356
  %v4358 = vrot.slane %v4357, 2
  %v4359 = vmax.f32 %v4357, %v4358
  %v4360 = vrot.slane %v4359, 1
  %v4361 = vmax.f32 %v4359, %v4360
  %v4362 = vsel %vm2425, %v4286, -inf
  %v4363 = vrot.slane %v4362, 4
  %v4364 = vmax.f32 %v4362, %v4363
  %v4365 = vrot.slane %v4364, 2
  %v4366 = vmax.f32 %v4364, %v4365
  %v4367 = vrot.slane %v4366, 1
  %v4368 = vmax.f32 %v4366, %v4367
  %v4369 = vsel %vm2425, %v4285, -inf
  %v4370 = vrot.slane %v4369, 4
  %v4371 = vmax.f32 %v4369, %v4370
  %v4372 = vrot.slane %v4371, 2
  %v4373 = vmax.f32 %v4371, %v4372
  %v4374 = vrot.slane %v4373, 1
  %v4375 = vmax.f32 %v4373, %v4374
  %v4376 = vsel %vm2425, %v4287, -inf
  %v4377 = vrot.slane %v4376, 4
  %v4378 = vmax.f32 %v4376, %v4377
  %v4379 = vrot.slane %v4378, 2
  %v4380 = vmax.f32 %v4378, %v4379
  %v4381 = vrot.slane %v4380, 1
  %v4382 = vmax.f32 %v4380, %v4381
  %v4383 = vsel %vm2425, %v4295, -inf
  %v4384 = vrot.slane %v4383, 4
  %v4385 = vmax.f32 %v4383, %v4384
  %v4386 = vrot.slane %v4385, 2
  %v4387 = vmax.f32 %v4385, %v4386
  %v4388 = vrot.slane %v4387, 1
  %v4389 = vmax.f32 %v4387, %v4388
  %v4390 = vsel %vm2425, %v4303, -inf
  %v4391 = vrot.slane %v4390, 4
  %v4392 = vmax.f32 %v4390, %v4391
  %v4393 = vrot.slane %v4392, 2
  %v4394 = vmax.f32 %v4392, %v4393
  %v4395 = vrot.slane %v4394, 1
  %v4396 = vmax.f32 %v4394, %v4395
  %v4397 = vsel %vm2425, %v4302, -inf
  %v4398 = vrot.slane %v4397, 4
  %v4399 = vmax.f32 %v4397, %v4398
  %v4400 = vrot.slane %v4399, 2
  %v4401 = vmax.f32 %v4399, %v4400
  %v4402 = vrot.slane %v4401, 1
  %v4403 = vmax.f32 %v4401, %v4402
  %v4404 = vsel %vm2425, %v4304, -inf
  %v4405 = vrot.slane %v4404, 4
  %v4406 = vmax.f32 %v4404, %v4405
  %v4407 = vrot.slane %v4406, 2
  %v4408 = vmax.f32 %v4406, %v4407
  %v4409 = vrot.slane %v4408, 1
  %v4410 = vmax.f32 %v4408, %v4409
  %v4411 = vsel %vm2425, %v4312, -inf
  %v4412 = vrot.slane %v4411, 4
  %v4413 = vmax.f32 %v4411, %v4412
  %v4414 = vrot.slane %v4413, 2
  %v4415 = vmax.f32 %v4413, %v4414
  %v4416 = vrot.slane %v4415, 1
  %v4417 = vmax.f32 %v4415, %v4416
  %v4418 = vsel %vm2425, %v4320, -inf
  %v4419 = vrot.slane %v4418, 4
  %v4420 = vmax.f32 %v4418, %v4419
  %v4421 = vrot.slane %v4420, 2
  %v4422 = vmax.f32 %v4420, %v4421
  %v4423 = vrot.slane %v4422, 1
  %v4424 = vmax.f32 %v4422, %v4423
  %v4425 = vsel %vm2425, %v4319, -inf
  %v4426 = vrot.slane %v4425, 4
  %v4427 = vmax.f32 %v4425, %v4426
  %v4428 = vrot.slane %v4427, 2
  %v4429 = vmax.f32 %v4427, %v4428
  %v4430 = vrot.slane %v4429, 1
  %v4431 = vmax.f32 %v4429, %v4430
  %v4432 = vsel %vm2425, %v4321, -inf
  %v4433 = vrot.slane %v4432, 4
  %v4434 = vmax.f32 %v4432, %v4433
  %v4435 = vrot.slane %v4434, 2
  %v4436 = vmax.f32 %v4434, %v4435
  %v4437 = vrot.slane %v4436, 1
  %v4438 = vmax.f32 %v4436, %v4437
  %v4439 = vsel %vm2425, %v4329, -inf
  %v4440 = vrot.slane %v4439, 4
  %v4441 = vmax.f32 %v4439, %v4440
  %v4442 = vrot.slane %v4441, 2
  %v4443 = vmax.f32 %v4441, %v4442
  %v4444 = vrot.slane %v4443, 1
  %v4445 = vmax.f32 %v4443, %v4444
  %v4446 = vsel %vm2425, %v4337, -inf
  %v4447 = vrot.slane %v4446, 4
  %v4448 = vmax.f32 %v4446, %v4447
  %v4449 = vrot.slane %v4448, 2
  %v4450 = vmax.f32 %v4448, %v4449
  %v4451 = vrot.slane %v4450, 1
  %v4452 = vmax.f32 %v4450, %v4451
  %v4453 = vsel %vm2425, %v4336, -inf
  %v4454 = vrot.slane %v4453, 4
  %v4455 = vmax.f32 %v4453, %v4454
  %v4456 = vrot.slane %v4455, 2
  %v4457 = vmax.f32 %v4455, %v4456
  %v4458 = vrot.slane %v4457, 1
  %v4459 = vmax.f32 %v4457, %v4458
  %v4460 = vsel %vm2425, %v4338, -inf
  %v4461 = vrot.slane %v4460, 4
  %v4462 = vmax.f32 %v4460, %v4461
  %v4463 = vrot.slane %v4462, 2
  %v4464 = vmax.f32 %v4462, %v4463
  %v4465 = vrot.slane %v4464, 1
  %v4466 = vmax.f32 %v4464, %v4465
  %v4467 = vsel %vm1910, %v4361, -inf
  %v4468 = vsel %vm1910, %v4375, -inf
  %v4469 = vmax.f32 %v4467, %v4468
  %v4470 = vsel %vm1910, %v4368, -inf
  %v4471 = vsel %vm1910, %v4382, -inf
  %v4472 = vmax.f32 %v4470, %v4471
  %v4473 = vsel %vm1910, %v4389, -inf
  %v4474 = vsel %vm1910, %v4403, -inf
  %v4475 = vmax.f32 %v4473, %v4474
  %v4476 = vsel %vm1910, %v4396, -inf
  %v4477 = vsel %vm1910, %v4410, -inf
  %v4478 = vmax.f32 %v4476, %v4477
  %v4479 = vsel %vm1910, %v4417, -inf
  %v4480 = vsel %vm1910, %v4431, -inf
  %v4481 = vmax.f32 %v4479, %v4480
  %v4482 = vsel %vm1910, %v4424, -inf
  %v4483 = vsel %vm1910, %v4438, -inf
  %v4484 = vmax.f32 %v4482, %v4483
  %v4485 = vsel %vm1910, %v4445, -inf
  %v4486 = vsel %vm1910, %v4459, -inf
  %v4487 = vmax.f32 %v4485, %v4486
  %v4488 = vsel %vm1910, %v4452, -inf
  %v4489 = vsel %vm1910, %v4466, -inf
  %v4490 = vmax.f32 %v4488, %v4489
  %v4493 = vsel %vm3026, %v4481, %v4469
  %v4497 = vsel %vm3026, %v4484, %v4472
  %4498 = vrot.lane.b32.xlu0 %v4497, 64
  %v4499 = vpop.permute.xlu0 %4498
  %v4503 = vsel %vm3026, %v4487, %v4475
  %v4507 = vsel %vm3026, %v4490, %v4478
  %4508 = vrot.lane.b32.xlu0 %v4507, 64
  %v4509 = vpop.permute.xlu0 %4508
  %v4511 = vsel %vm1910, %v4493, %v4499
  %v4512 = vsel %vm1910, %v4503, %v4509
  %v4513 = vld [vmem:[%s9] sm:$0xff]
  %v4514 = vld [vmem:[%s9 + $0x8] sm:$0xff]
  %v4515 = vld [vmem:[%s9 + $0x10] sm:$0xff]
  %v4516 = vld [vmem:[%s9 + $0x18] sm:$0xff]
  %v4517 = vld [vmem:[%s9 + $0x20] sm:$0xff]
  %v4518 = vld [vmem:[%s9 + $0x28] sm:$0xff]
  %v4519 = vld [vmem:[%s9 + $0x30] sm:$0xff]
  %v4520 = vld [vmem:[%s9 + $0x38] sm:$0xff]
  %v4521 = vld [vmem:[%s9 + $0x40] sm:$0xff]
  %v4522 = vld [vmem:[%s9 + $0x48] sm:$0xff]
  %v4523 = vld [vmem:[%s9 + $0x50] sm:$0xff]
  %v4524 = vld [vmem:[%s9 + $0x58] sm:$0xff]
  %v4525 = vld [vmem:[%s9 + $0x60] sm:$0xff]
  %v4526 = vld [vmem:[%s9 + $0x68] sm:$0xff]
  %v4527 = vld [vmem:[%s9 + $0x70] sm:$0xff]
  %v4528 = vld [vmem:[%s9 + $0x78] sm:$0xff]
  %v4529 = vld [vmem:[%s9 + $0x80] sm:$0xff]
  %v4530 = vld [vmem:[%s9 + $0x88] sm:$0xff]
  %v4531 = vld [vmem:[%s9 + $0x90] sm:$0xff]
  %v4532 = vld [vmem:[%s9 + $0x98] sm:$0xff]
  %v4533 = vld [vmem:[%s9 + $0xa0] sm:$0xff]
  %v4534 = vld [vmem:[%s9 + $0xa8] sm:$0xff]
  %v4535 = vld [vmem:[%s9 + $0xb0] sm:$0xff]
  %v4536 = vld [vmem:[%s9 + $0xb8] sm:$0xff]
  %v4537 = vld [vmem:[%s9 + $0xc0] sm:$0xff]
  %v4538 = vld [vmem:[%s9 + $0xc8] sm:$0xff]
  %v4539 = vld [vmem:[%s9 + $0xd0] sm:$0xff]
  %v4540 = vld [vmem:[%s9 + $0xd8] sm:$0xff]
  %v4541 = vld [vmem:[%s9 + $0xe0] sm:$0xff]
  %v4542 = vld [vmem:[%s9 + $0xe8] sm:$0xff]
  %v4543 = vld [vmem:[%s9 + $0xf0] sm:$0xff]
  %v4544 = vld [vmem:[%s9 + $0xf8] sm:$0xff]
  %v4545 = vld [vmem:[%s10] sm:$0x1]
  %v4547 = vlaneseq
  %v4548 = vshrl.u32 %v4547, 7
  %v4549 = vsub.s32 0, %v4548
  %v4550 = vrot.slane %v4545, %v4549
  %4552 = vmatprep.subr.mxu0 0.0
  %4553 = vmatpush1.msra.mxu0 %v4528
  %4554 = vmatprep.subr.mxu0 0.0
  %4555 = vmatpush1.msra.mxu0 %v4527
  %4556 = vmatprep.subr.mxu0 0.0
  %4557 = vmatpush1.msra.mxu0 %v4526
  %4558 = vmatprep.subr.mxu0 0.0
  %4559 = vmatpush1.msra.mxu0 %v4525
  %4560 = vmatprep.subr.mxu0 0.0
  %4561 = vmatpush1.msra.mxu0 %v4524
  %4562 = vmatprep.subr.mxu0 0.0
  %4563 = vmatpush1.msra.mxu0 %v4523
  %4564 = vmatprep.subr.mxu0 0.0
  %4565 = vmatpush1.msra.mxu0 %v4522
  %4566 = vmatprep.subr.mxu0 0.0
  %4567 = vmatpush1.msra.mxu0 %v4521
  %4568 = vmatprep.subr.mxu0 0.0
  %4569 = vmatpush1.msra.mxu0 %v4520
  %4570 = vmatprep.subr.mxu0 0.0
  %4571 = vmatpush1.msra.mxu0 %v4519
  %4572 = vmatprep.subr.mxu0 0.0
  %4573 = vmatpush1.msra.mxu0 %v4518
  %4574 = vmatprep.subr.mxu0 0.0
  %4575 = vmatpush1.msra.mxu0 %v4517
  %4576 = vmatprep.subr.mxu0 0.0
  %4577 = vmatpush1.msra.mxu0 %v4516
  %4578 = vmatprep.subr.mxu0 0.0
  %4579 = vmatpush1.msra.mxu0 %v4515
  %4580 = vmatprep.subr.mxu0 0.0
  %4581 = vmatpush1.msra.mxu0 %v4514
  %4582 = vmatprep.subr.mxu0 0.0
  %4583 = vmatpush1.msra.mxu0 %v4513
  %4584 = vmatprep.subr.mxu0 0.0
  %4585 = vmatpush2.msra.mxu0 %v4544
  %4586 = vmatprep.subr.mxu0 0.0
  %4587 = vmatpush2.msra.mxu0 %v4543
  %4588 = vmatprep.subr.mxu0 0.0
  %4589 = vmatpush2.msra.mxu0 %v4542
  %4590 = vmatprep.subr.mxu0 0.0
  %4591 = vmatpush2.msra.mxu0 %v4541
  %4592 = vmatprep.subr.mxu0 0.0
  %4593 = vmatpush2.msra.mxu0 %v4540
  %4594 = vmatprep.subr.mxu0 0.0
  %4595 = vmatpush2.msra.mxu0 %v4539
  %4596 = vmatprep.subr.mxu0 0.0
  %4597 = vmatpush2.msra.mxu0 %v4538
  %4598 = vmatprep.subr.mxu0 0.0
  %4599 = vmatpush2.msra.mxu0 %v4537
  %4600 = vmatprep.subr.mxu0 0.0
  %4601 = vmatpush2.msra.mxu0 %v4536
  %4602 = vmatprep.subr.mxu0 0.0
  %4603 = vmatpush2.msra.mxu0 %v4535
  %4604 = vmatprep.subr.mxu0 0.0
  %4605 = vmatpush2.msra.mxu0 %v4534
  %4606 = vmatprep.subr.mxu0 0.0
  %4607 = vmatpush2.msra.mxu0 %v4533
  %4608 = vmatprep.subr.mxu0 0.0
  %4609 = vmatpush2.msra.mxu0 %v4532
  %4610 = vmatprep.subr.mxu0 0.0
  %4611 = vmatpush2.msra.mxu0 %v4531
  %4612 = vmatprep.subr.mxu0 0.0
  %4613 = vmatpush2.msra.mxu0 %v4530
  %4614 = vmatprep.subr.mxu0 0.0
  %4615 = vmatpush2.msra.mxu0 %v4529
  %4616 = vmatprep.mubr.f32.mxu0 %v4512
  %4617 = vmatmul.mubr.f32.gmra.mxu0 %v4511
  %v4618 = vpop.f32.mrf.mxu0
  %v4619 = vadd.f32 %v4550, %v4618
  %v4620 = vpop.f32.mrf.mxu0
  %4621 = vdwg.mxu0
  %v4622 = vmax.f32 %v4619, 0.0
  %v4623 = vld [vmem:[%s11] sm:$0xff]
  %v4624 = vld [vmem:[#allocation4] sm:$0x1]
  %v4626 = vlaneseq
  %v4627 = vshrl.u32 %v4626, 7
  %v4628 = vsub.s32 0, %v4627
  %v4629 = vrot.slane %v4624, %v4628
  %vm4631 = vcmask 64512
  %v4633 = vsel %vm4631, %v4622, 0
  %4635 = vmatprep.subr.mxu0 0.0
  %4636 = vmatpush1.msra.mxu0 0.0
  %4637 = vmatprep.subr.mxu0 0.0
  %4638 = vmatpush1.msra.mxu0 0.0
  %4639 = vmatprep.subr.mxu0 0.0
  %4640 = vmatpush1.msra.mxu0 0.0
  %4641 = vmatprep.subr.mxu0 0.0
  %4642 = vmatpush1.msra.mxu0 0.0
  %4643 = vmatprep.subr.mxu0 0.0
  %4644 = vmatpush1.msra.mxu0 0.0
  %4645 = vmatprep.subr.mxu0 0.0
  %4646 = vmatpush1.msra.mxu0 0.0
  %4647 = vmatprep.subr.mxu0 0.0
  %4648 = vmatpush1.msra.mxu0 0.0
  %4649 = vmatprep.subr.mxu0 0.0
  %4650 = vmatpush1.msra.mxu0 0.0
  %4651 = vmatprep.subr.mxu0 0.0
  %4652 = vmatpush1.msra.mxu0 0.0
  %4653 = vmatprep.subr.mxu0 0.0
  %4654 = vmatpush1.msra.mxu0 0.0
  %4655 = vmatprep.subr.mxu0 0.0
  %4656 = vmatpush1.msra.mxu0 0.0
  %4657 = vmatprep.subr.mxu0 0.0
  %4658 = vmatpush1.msra.mxu0 0.0
  %4659 = vmatprep.subr.mxu0 0.0
  %4660 = vmatpush1.msra.mxu0 0.0
  %4661 = vmatprep.subr.mxu0 0.0
  %4662 = vmatpush1.msra.mxu0 0.0
  %4663 = vmatprep.subr.mxu0 0.0
  %4664 = vmatpush1.msra.mxu0 0.0
  %4665 = vmatprep.subr.mxu0 0.0
  %4666 = vmatpush1.msra.mxu0 %v4623
  %4667 = vmatprep.subr.mxu0 0.0
  %4668 = vmatpush2.msra.mxu0 0.0
  %4669 = vmatprep.subr.mxu0 0.0
  %4670 = vmatpush2.msra.mxu0 0.0
  %4671 = vmatprep.subr.mxu0 0.0
  %4672 = vmatpush2.msra.mxu0 0.0
  %4673 = vmatprep.subr.mxu0 0.0
  %4674 = vmatpush2.msra.mxu0 0.0
  %4675 = vmatprep.subr.mxu0 0.0
  %4676 = vmatpush2.msra.mxu0 0.0
  %4677 = vmatprep.subr.mxu0 0.0
  %4678 = vmatpush2.msra.mxu0 0.0
  %4679 = vmatprep.subr.mxu0 0.0
  %4680 = vmatpush2.msra.mxu0 0.0
  %4681 = vmatprep.subr.mxu0 0.0
  %4682 = vmatpush2.msra.mxu0 0.0
  %4683 = vmatprep.subr.mxu0 0.0
  %4684 = vmatpush2.msra.mxu0 0.0
  %4685 = vmatprep.subr.mxu0 0.0
  %4686 = vmatpush2.msra.mxu0 0.0
  %4687 = vmatprep.subr.mxu0 0.0
  %4688 = vmatpush2.msra.mxu0 0.0
  %4689 = vmatprep.subr.mxu0 0.0
  %4690 = vmatpush2.msra.mxu0 0.0
  %4691 = vmatprep.subr.mxu0 0.0
  %4692 = vmatpush2.msra.mxu0 0.0
  %4693 = vmatprep.subr.mxu0 0.0
  %4694 = vmatpush2.msra.mxu0 0.0
  %4695 = vmatprep.subr.mxu0 0.0
  %4696 = vmatpush2.msra.mxu0 0.0
  %4697 = vmatprep.subr.mxu0 0.0
  %4698 = vmatpush2.msra.mxu0 0.0
  %4699 = vmatprep.mubr.f32.mxu0 0.0
  %4700 = vmatmul.mubr.f32.gmra.mxu0 %v4633
  %v4701 = vpop.f32.mrf.mxu0
  %v4702 = vadd.f32 %v4629, %v4701
  %v4703 = vpop.f32.mrf.mxu0
  %4704 = vdwg.mxu0
  %v4705 = vxor.u32 %v4702, 2147483648
  %v4706 = vmul.f32 %v4705, 1.442695
  %v4707 = vpow.pop %v4706
  %v4708 = vadd.f32 %v4707, 1.0
  %v4709 = vrcp.pop %v4708
  %v4710 = vmul.f32 1.0, %v4709
  %vm4711 = vcmask 1024
  %4712 = vst.msk [vmem:[%s13] sm:$0x3] %vm4711, %v4710
  // Predicated region
  $region54: #{tpu_custom_call.1} parent=0 // pred_check
    _
  $region55: #{tpu_custom_call.1} parent=0 // pred_check_branch
    %4714 = sbr.rel (0) target = $region57
  $region56: #{tpu_custom_call.1} parent=0 // pred_region
    _
  $region57: #{tpu_custom_call.1} parent=0 // pred_fallthru
    _
  // Predicated region
  $region58: #{tpu_custom_call.1} parent=0 // pred_check
    _
  $region59: #{tpu_custom_call.1} parent=0 // pred_check_branch
    %4716 = sbr.rel (0) target = $region61
  $region60: #{tpu_custom_call.1} parent=0 // pred_region
    _
  $region61: #{tpu_custom_call.1} parent=0 // pred_fallthru
    _

</llo_original>
